<compile_context>
chip_gen: v6e
topology: v6e:2x2x1
jax: 0.10.0
libtpu: 0.0.40
codegen_flags: <defaults>
</compile_context>

<pallas_src>
import functools

import jax
import jax.numpy as jnp
from jax import lax
from jax.experimental import pallas as pl
from jax.experimental.pallas import tpu as pltpu


def _rqvae_kernel(n_enc, n_dec, n_layers, commitment_weight, *refs):
    # refs layout: x, [enc w0,b0,w1,b1,...], cb, cb2, [dec w0,b0,...], loss, ids
    idx = 0
    x_ref = refs[idx]; idx += 1
    enc_refs = refs[idx: idx + 2 * n_enc]; idx += 2 * n_enc
    cb_ref = refs[idx]; cb2_ref = refs[idx + 1]; idx += 2
    dec_refs = refs[idx: idx + 2 * n_dec]; idx += 2 * n_dec
    loss_ref = refs[idx]; ids_ref = refs[idx + 1]

    x = x_ref[...]                                   # (TB, D_in) f32
    TB = x.shape[0]
    K = cb_ref.shape[1]

    def mlp(h, wb_refs):
        # bf16 operands on the MXU, f32 accumulation; bias add + SiLU stay f32.
        n = len(wb_refs) // 2
        for i in range(n):
            w_ref, b_ref = wb_refs[2 * i], wb_refs[2 * i + 1]
            h = jnp.dot(h.astype(w_ref.dtype), w_ref[...],
                        preferred_element_type=jnp.float32) + b_ref[...]
            if i != n - 1:
                h = jax.nn.silu(h)                   # logistic -> EUP
        return h

    # ---------------- encoder MLP ----------------
    z = mlp(x, enc_refs)                             # (TB, E) f32

    # ---------------- residual quantization ----------------
    res = z
    emb_sum = jnp.zeros_like(z)
    rq_acc = jnp.zeros((TB, 1), jnp.float32)
    col_iota = lax.broadcasted_iota(jnp.int32, (TB, K), 1)
    ids_layers = []

    for l in range(n_layers):                        # small static count -> unrolled
        cb = cb_ref[l]                               # (K, E) f32
        # ||res||^2 is a per-row constant: dropped from the argmin distance.
        # bf16 operands on the MXU (f32 accumulate) -- the distance term scales
        # with K and is the dominant RQ matmul for realistic codebooks.
        sim = lax.dot_general(res.astype(jnp.bfloat16), cb.astype(jnp.bfloat16),
                              dimension_numbers=(((1,), (1,)), ((), ())),
                              preferred_element_type=jnp.float32)      # (TB, K)
        dist = cb2_ref[l] - 2.0 * sim                # (TB, K); cb2_ref[l] is (1, K)
        mind = jnp.min(dist, axis=-1, keepdims=True)
        # argmin with first-index tie-break, built from min-reductions only
        ids = jnp.min(jnp.where(dist <= mind, col_iota, K),
                      axis=-1, keepdims=True)        # (TB, 1) int32
        onehot = (ids == col_iota).astype(jnp.float32)
        # Exact row selection in f32 (tiny K*E here).  For large codebooks, split
        # cb into bf16 hi/lo halves and do two bf16 matmuls instead.
        emb = jnp.dot(onehot, cb, preferred_element_type=jnp.float32)

        rq_acc = rq_acc + jnp.sum((res - emb) ** 2, axis=-1, keepdims=True)
        ids_layers.append(ids)
        emb_sum = emb_sum + emb
        res = res - emb

    ids_ref[...] = jnp.concatenate(ids_layers, axis=1)   # one lane-wide store

    # ---------------- decoder MLP (on sum of quantized embeddings) ----------------
    x_hat = mlp(emb_sum, dec_refs)                   # (TB, D_in)

    # ---------------- per-sample loss (mean taken outside the kernel) ----------------
    recon = jnp.sum((x_hat - x) ** 2, axis=-1, keepdims=True)          # (TB, 1)
    loss_ref[...] = recon + (1.0 + commitment_weight) * rq_acc


def _num_tensorcores():
    """2 TensorCores per chip on v7x, 1 on v5e/v6e (and anything unknown)."""
    try:
        kind = jax.devices()[0].device_kind.lower()
    except Exception:
        return 1
    return 2 if ("v7" in kind or "7x" in kind) else 1


def _pick_grid(B, n_cores, max_tile=2048):
    """Grid steps = one per TensorCore; grow the step count (multiples of n_cores)
    only if the per-step tile would exceed max_tile rows or break the 8-row
    alignment.  Falls back to a single full-batch step (block == full dim is
    always legal)."""
    nt = n_cores
    while nt <= B:
        tb = B // nt
        if B % nt == 0 and tb % 8 == 0 and tb <= max_tile:
            return nt, tb
        nt += n_cores
    return 1, B


def rqvae_forward(x, params, *, n_layers, commitment_weight, batch_tile=None):
    """Runs the whole RqVae.forward inside one batch-tiled Pallas kernel.

    Returns (loss_scalar, sem_ids[B, n_layers])."""
    B, D_in = x.shape
    n_cores = _num_tensorcores()
    if batch_tile is not None:
        TB = batch_tile
        assert B % TB == 0, f"batch {B} must be divisible by tile {TB}"
        nt = B // TB
    else:
        nt, TB = _pick_grid(B, n_cores)

    # Weights stored/streamed as bf16 (MXU-native, half the DMA bytes); biases,
    # codebook and all elementwise math stay f32.  NOTE: activations are also cast
    # to bf16 at each dot (the f32 reference keeps them f32).
    enc_w = [w.astype(jnp.bfloat16) for w in params["enc_w"]]
    dec_w = [w.astype(jnp.bfloat16) for w in params["dec_w"]]
    enc_b, dec_b = params["enc_b"], params["dec_b"]
    cb = params["codebooks"].astype(jnp.float32)             # (L, K, E)
    cb2 = jnp.sum(cb * cb, axis=-1)[:, None, :]               # (L, 1, K)

    enc_flat = [t for wb in zip(enc_w, enc_b) for t in wb]
    dec_flat = [t for wb in zip(dec_w, dec_b) for t in wb]
    inputs = [x] + enc_flat + [cb, cb2] + dec_flat

    # Advisory cost estimate so XLA schedules around the custom call sensibly.
    enc_dims = [params["enc_w"][0].shape[0]] + [w.shape[1] for w in params["enc_w"]]
    dec_dims = [params["dec_w"][0].shape[0]] + [w.shape[1] for w in params["dec_w"]]
    L, K, E = cb.shape
    macs = sum(a * b for a, b in zip(enc_dims[:-1], enc_dims[1:]))
    macs += sum(a * b for a, b in zip(dec_dims[:-1], dec_dims[1:]))
    macs += n_layers * 2 * K * E
    flops = int(2 * B * macs)
    transcendentals = int(B * (sum(enc_dims[1:-1]) + sum(dec_dims[1:-1])))
    bytes_accessed = int(x.size * 4
                         + sum(w.size for w in enc_w + dec_w) * 2
                         + sum(b.size for b in enc_b + dec_b) * 4
                         + cb.size * 4 + cb2.size * 4
                         + B * 4 + B * n_layers * 4)

    kernel = functools.partial(_rqvae_kernel, len(enc_w), len(dec_w),
                               n_layers, commitment_weight)

    def build(single_buffer):
        def resident(shape):                                  # same block every step
            nd = len(shape)
            imap = lambda i, nd=nd: (0,) * nd
            if single_buffer:
                # Constant index map -> never re-fetched; single buffer halves its
                # VMEM footprint (headroom on v7x's 64 MiB).
                return pl.BlockSpec(shape, imap, pipeline_mode=pl.Buffered(1))
            return pl.BlockSpec(shape, imap)

        in_specs = ([pl.BlockSpec((TB, D_in), lambda i: (i, 0))]
                    + [resident(a.shape) for a in inputs[1:]])

        return pl.pallas_call(
            kernel,
            out_shape=(jax.ShapeDtypeStruct((B, 1), jnp.float32),
                       jax.ShapeDtypeStruct((B, n_layers), jnp.int32)),
            grid=(nt,),
            in_specs=in_specs,
            out_specs=(pl.BlockSpec((TB, 1), lambda i: (i, 0)),
                       pl.BlockSpec((TB, n_layers), lambda i: (i, 0))),
            compiler_params=pltpu.CompilerParams(
                dimension_semantics=("parallel",),        # megacore-shardable on v7x
                vmem_limit_bytes=32 * 1024 * 1024),
            cost_estimate=pl.CostEstimate(flops=flops,
                                          transcendentals=transcendentals,
                                          bytes_accessed=bytes_accessed),
        )

    try:
        per_sample, ids = build(single_buffer=True)(*inputs)
    except Exception:
        # pipeline_mode=pl.Buffered(1) not supported / rejected: use default buffering.
        per_sample, ids = build(single_buffer=False)(*inputs)

    return jnp.mean(per_sample), ids


# ---------------- deterministic parameter construction ----------------
def make_params(key, input_dim, hidden_dims, embed_dim, codebook_size, n_layers):
    enc_dims = [input_dim] + list(hidden_dims) + [embed_dim]
    dec_dims = [embed_dim] + list(hidden_dims) + [input_dim]

    def linear_stack(key, dims):
        ws, bs = [], []
        for din, dout in zip(dims[:-1], dims[1:]):
            key, kw, kb = jax.random.split(key, 3)
            scale = 1.0 / jnp.sqrt(jnp.float32(din))
            ws.append(jax.random.uniform(kw, (din, dout), jnp.float32, -scale, scale))
            bs.append(jax.random.uniform(kb, (1, dout), jnp.float32, -scale, scale))
        return key, ws, bs

    key, enc_w, enc_b = linear_stack(key, enc_dims)
    key, dec_w, dec_b = linear_stack(key, dec_dims)
    key, kc = jax.random.split(key)
    codebooks = jax.random.normal(kc, (n_layers, codebook_size, embed_dim), jnp.float32)
    return {"enc_w": enc_w, "enc_b": enc_b,
            "dec_w": dec_w, "dec_b": dec_b,
            "codebooks": codebooks}


# ---------------- pure-JAX reference (same semantics, f32 math) ----------------
def reference_forward(x, params, *, n_layers, commitment_weight):
    def mlp(h, ws, bs):
        for i, (w, b) in enumerate(zip(ws, bs)):
            h = h @ w + b
            if i != len(ws) - 1:
                h = jax.nn.silu(h)
        return h

    z = mlp(x, params["enc_w"], params["enc_b"])
    res = z
    emb_sum = jnp.zeros_like(z)
    rq = jnp.zeros((x.shape[0],), jnp.float32)
    ids_all = []
    for l in range(n_layers):
        cb = params["codebooks"][l]
        dist = (jnp.sum(res * res, -1, keepdims=True)
                - 2.0 * res @ cb.T
                + jnp.sum(cb * cb, -1)[None, :])
        ids = jnp.argmin(dist, axis=-1)
        emb = cb[ids]
        rq = rq + jnp.sum((res - emb) ** 2, axis=-1)
        ids_all.append(ids)
        emb_sum = emb_sum + emb
        res = res - emb
    x_hat = mlp(emb_sum, params["dec_w"], params["dec_b"])
    recon = jnp.sum((x_hat - x) ** 2, axis=-1)
    loss = jnp.mean(recon + (1.0 + commitment_weight) * rq)
    return loss, jnp.stack(ids_all, axis=-1).astype(jnp.int32)


if __name__ == "__main__":
    B = 64
    input_dim = 64
    hidden_dims = [48, 32]
    embed_dim = 32
    codebook_size = 64
    n_layers = 3
    commitment_weight = 0.25

    key = jax.random.PRNGKey(0)
    key, kx, kp = jax.random.split(key, 3)
    x = jax.random.normal(kx, (B, input_dim), jnp.float32)
    params = make_params(kp, input_dim, hidden_dims, embed_dim,
                         codebook_size, n_layers)

    # Grid/tile is auto-selected: 1 full-batch step on v5e/v6e, 2 parallel halves on v7x.
    loss, sem_ids = rqvae_forward(x, params, n_layers=n_layers,
                                  commitment_weight=commitment_weight)
    jax.block_until_ready((loss, sem_ids))

    # Reference evaluates the same bf16-stored weights (cast back to f32); the
    # remaining kernel-vs-reference deltas are the bf16 rounding of activations at
    # the MXU and the bf16 distance matmul in the RQ loop (may flip ids at near-ties).
    params_ref = dict(params)
    params_ref["enc_w"] = [w.astype(jnp.bfloat16).astype(jnp.float32)
                           for w in params["enc_w"]]
    params_ref["dec_w"] = [w.astype(jnp.bfloat16).astype(jnp.float32)
                           for w in params["dec_w"]]
    ref_loss, ref_ids = reference_forward(x, params_ref, n_layers=n_layers,
                                          commitment_weight=commitment_weight)
    ref_loss = float(jax.block_until_ready(ref_loss))

    assert abs(float(loss) - ref_loss) <= 2e-2 * max(1.0, abs(ref_loss)), \
        f"loss mismatch: kernel={float(loss)} ref={ref_loss}"
    ids_match = float(jnp.mean((sem_ids == ref_ids).astype(jnp.float32)))
    assert ids_match >= 0.9, f"sem_ids agreement too low: {ids_match}"

    print("KERNEL_OK")
</pallas_src>

<mosaic_0001>
module attributes {stable_mosaic.version = 11 : i64} {
  func.func @_rqvae_kernel(%arg0: i32, %arg1: memref<64x64xf32, #tpu.memory_space<vmem>>, %arg2: memref<64x48xbf16, #tpu.memory_space<vmem>>, %arg3: memref<1x48xf32, #tpu.memory_space<vmem>>, %arg4: memref<48x32xbf16, #tpu.memory_space<vmem>>, %arg5: memref<1x32xf32, #tpu.memory_space<vmem>>, %arg6: memref<32x32xbf16, #tpu.memory_space<vmem>>, %arg7: memref<1x32xf32, #tpu.memory_space<vmem>>, %arg8: memref<3x64x32xf32, #tpu.memory_space<vmem>>, %arg9: memref<3x1x64xf32, #tpu.memory_space<vmem>>, %arg10: memref<32x48xbf16, #tpu.memory_space<vmem>>, %arg11: memref<1x48xf32, #tpu.memory_space<vmem>>, %arg12: memref<48x32xbf16, #tpu.memory_space<vmem>>, %arg13: memref<1x32xf32, #tpu.memory_space<vmem>>, %arg14: memref<32x64xbf16, #tpu.memory_space<vmem>>, %arg15: memref<1x64xf32, #tpu.memory_space<vmem>>, %arg16: memref<64x1xf32, #tpu.memory_space<vmem>>, %arg17: memref<64x3xi32, #tpu.memory_space<vmem>>) attributes {dimension_semantics = [#tpu.dimension_semantics<parallel>], iteration_bounds = array<i64: 1>, scalar_prefetch = 0 : i64, scratch_operands = 0 : i64, tpu.core_type = #tpu.core_type<tc>, window_params = [{transform_indices = @transform_0, window_bounds = array<i64: 64, 64>}, {pipeline_mode = #tpu.pipeline_mode<synchronous>, transform_indices = @transform_1, window_bounds = array<i64: 64, 48>}, {pipeline_mode = #tpu.pipeline_mode<synchronous>, transform_indices = @transform_2, window_bounds = array<i64: 1, 48>}, {pipeline_mode = #tpu.pipeline_mode<synchronous>, transform_indices = @transform_3, window_bounds = array<i64: 48, 32>}, {pipeline_mode = #tpu.pipeline_mode<synchronous>, transform_indices = @transform_4, window_bounds = array<i64: 1, 32>}, {pipeline_mode = #tpu.pipeline_mode<synchronous>, transform_indices = @transform_5, window_bounds = array<i64: 32, 32>}, {pipeline_mode = #tpu.pipeline_mode<synchronous>, transform_indices = @transform_6, window_bounds = array<i64: 1, 32>}, {pipeline_mode = #tpu.pipeline_mode<synchronous>, transform_indices = @transform_7, window_bounds = array<i64: 3, 64, 32>}, {pipeline_mode = #tpu.pipeline_mode<synchronous>, transform_indices = @transform_8, window_bounds = array<i64: 3, 1, 64>}, {pipeline_mode = #tpu.pipeline_mode<synchronous>, transform_indices = @transform_9, window_bounds = array<i64: 32, 48>}, {pipeline_mode = #tpu.pipeline_mode<synchronous>, transform_indices = @transform_10, window_bounds = array<i64: 1, 48>}, {pipeline_mode = #tpu.pipeline_mode<synchronous>, transform_indices = @transform_11, window_bounds = array<i64: 48, 32>}, {pipeline_mode = #tpu.pipeline_mode<synchronous>, transform_indices = @transform_12, window_bounds = array<i64: 1, 32>}, {pipeline_mode = #tpu.pipeline_mode<synchronous>, transform_indices = @transform_13, window_bounds = array<i64: 32, 64>}, {pipeline_mode = #tpu.pipeline_mode<synchronous>, transform_indices = @transform_14, window_bounds = array<i64: 1, 64>}, {transform_indices = @transform_15, window_bounds = array<i64: 64, 1>}, {transform_indices = @transform_16, window_bounds = array<i64: 64, 3>}]} {
    %c0 = arith.constant 0 : index
    %c0_0 = arith.constant 0 : index
    %0 = vector.load %arg1[%c0, %c0_0] : memref<64x64xf32, #tpu.memory_space<vmem>>, vector<64x64xf32>
    %1 = arith.truncf %0 : vector<64x64xf32> to vector<64x64xbf16>
    %c0_1 = arith.constant 0 : index
    %c0_2 = arith.constant 0 : index
    %2 = vector.load %arg2[%c0_1, %c0_2] : memref<64x48xbf16, #tpu.memory_space<vmem>>, vector<64x48xbf16>
    %cst = arith.constant dense<0.000000e+00> : vector<64x48xf32>
    %3 = tpu.matmul %1, %2, %cst {dimension_numbers = #tpu.dot_dimension_numbers<[1], [0], [0], [1], [0, 0, 1, 1], [], []>} : vector<64x64xbf16>, vector<64x48xbf16>, vector<64x48xf32> -> vector<64x48xf32>
    %c0_3 = arith.constant 0 : index
    %c0_4 = arith.constant 0 : index
    %4 = vector.load %arg3[%c0_3, %c0_4] : memref<1x48xf32, #tpu.memory_space<vmem>>, vector<1x48xf32>
    %5 = vector.broadcast %4 : vector<1x48xf32> to vector<64x48xf32>
    %6 = arith.addf %3, %5 : vector<64x48xf32>
    %7 = arith.negf %6 : vector<64x48xf32>
    %8 = math.exp %7 : vector<64x48xf32>
    %cst_5 = arith.constant 1.000000e+00 : f32
    %9 = vector.broadcast %cst_5 : f32 to vector<64x48xf32>
    %10 = arith.addf %9, %8 : vector<64x48xf32>
    %11 = arith.divf %9, %10 : vector<64x48xf32>
    %12 = arith.mulf %6, %11 : vector<64x48xf32>
    %13 = arith.truncf %12 : vector<64x48xf32> to vector<64x48xbf16>
    %c0_6 = arith.constant 0 : index
    %c0_7 = arith.constant 0 : index
    %14 = vector.load %arg4[%c0_6, %c0_7] : memref<48x32xbf16, #tpu.memory_space<vmem>>, vector<48x32xbf16>
    %cst_8 = arith.constant dense<0.000000e+00> : vector<64x32xf32>
    %15 = tpu.matmul %13, %14, %cst_8 {dimension_numbers = #tpu.dot_dimension_numbers<[1], [0], [0], [1], [0, 0, 1, 1], [], []>} : vector<64x48xbf16>, vector<48x32xbf16>, vector<64x32xf32> -> vector<64x32xf32>
    %c0_9 = arith.constant 0 : index
    %c0_10 = arith.constant 0 : index
    %16 = vector.load %arg5[%c0_9, %c0_10] : memref<1x32xf32, #tpu.memory_space<vmem>>, vector<1x32xf32>
    %17 = vector.broadcast %16 : vector<1x32xf32> to vector<64x32xf32>
    %18 = arith.addf %15, %17 : vector<64x32xf32>
    %19 = arith.negf %18 : vector<64x32xf32>
    %20 = math.exp %19 : vector<64x32xf32>
    %cst_11 = arith.constant 1.000000e+00 : f32
    %21 = vector.broadcast %cst_11 : f32 to vector<64x32xf32>
    %22 = arith.addf %21, %20 : vector<64x32xf32>
    %23 = arith.divf %21, %22 : vector<64x32xf32>
    %24 = arith.mulf %18, %23 : vector<64x32xf32>
    %25 = arith.truncf %24 : vector<64x32xf32> to vector<64x32xbf16>
    %c0_12 = arith.constant 0 : index
    %c0_13 = arith.constant 0 : index
    %26 = vector.load %arg6[%c0_12, %c0_13] : memref<32x32xbf16, #tpu.memory_space<vmem>>, vector<32x32xbf16>
    %cst_14 = arith.constant dense<0.000000e+00> : vector<64x32xf32>
    %27 = tpu.matmul %25, %26, %cst_14 {dimension_numbers = #tpu.dot_dimension_numbers<[1], [0], [0], [1], [0, 0, 1, 1], [], []>} : vector<64x32xbf16>, vector<32x32xbf16>, vector<64x32xf32> -> vector<64x32xf32>
    %c0_15 = arith.constant 0 : index
    %c0_16 = arith.constant 0 : index
    %28 = vector.load %arg7[%c0_15, %c0_16] : memref<1x32xf32, #tpu.memory_space<vmem>>, vector<1x32xf32>
    %29 = vector.broadcast %28 : vector<1x32xf32> to vector<64x32xf32>
    %30 = arith.addf %27, %29 : vector<64x32xf32>
    %cst_17 = arith.constant 0.000000e+00 : f32
    %31 = vector.broadcast %cst_17 : f32 to vector<64x32xf32>
    %cst_18 = arith.constant 0.000000e+00 : f32
    %32 = vector.broadcast %cst_18 : f32 to vector<64x1xf32>
    %33 = tpu.iota {dimensions = array<i32: 1>} : vector<64x64xi32>
    %c0_19 = arith.constant 0 : index
    %c0_20 = arith.constant 0 : index
    %c0_21 = arith.constant 0 : index
    %34 = vector.load %arg8[%c0_19, %c0_20, %c0_21] : memref<3x64x32xf32, #tpu.memory_space<vmem>>, vector<1x64x32xf32>
    %35 = vector.shape_cast %34 : vector<1x64x32xf32> to vector<64x32xf32>
    %36 = arith.truncf %30 : vector<64x32xf32> to vector<64x32xbf16>
    %37 = arith.truncf %35 : vector<64x32xf32> to vector<64x32xbf16>
    %cst_22 = arith.constant dense<0.000000e+00> : vector<64x64xf32>
    %38 = tpu.matmul %36, %37, %cst_22 {dimension_numbers = #tpu.dot_dimension_numbers<[1], [1], [0], [0], [0, 0, 1, 0], [], []>} : vector<64x32xbf16>, vector<64x32xbf16>, vector<64x64xf32> -> vector<64x64xf32>
    %c0_23 = arith.constant 0 : index
    %c0_24 = arith.constant 0 : index
    %c0_25 = arith.constant 0 : index
    %39 = vector.load %arg9[%c0_23, %c0_24, %c0_25] : memref<3x1x64xf32, #tpu.memory_space<vmem>>, vector<1x1x64xf32>
    %40 = vector.shape_cast %39 : vector<1x1x64xf32> to vector<1x64xf32>
    %cst_26 = arith.constant 2.000000e+00 : f32
    %41 = vector.broadcast %cst_26 : f32 to vector<64x64xf32>
    %42 = arith.mulf %41, %38 : vector<64x64xf32>
    %43 = vector.broadcast %40 : vector<1x64xf32> to vector<64x64xf32>
    %44 = arith.subf %43, %42 : vector<64x64xf32>
    %cst_27 = arith.constant dense<0x7F800000> : vector<64xf32>
    %45 = vector.multi_reduction <minimumf>, %44, %cst_27 [1] : vector<64x64xf32> to vector<64xf32>
    %46 = vector.shape_cast %45 : vector<64xf32> to vector<64x1xf32>
    %47 = vector.broadcast %46 : vector<64x1xf32> to vector<64x64xf32>
    %48 = arith.cmpf ole, %44, %47 : vector<64x64xf32>
    %c64_i32 = arith.constant 64 : i32
    %49 = vector.broadcast %c64_i32 : i32 to vector<64x64xi32>
    %50 = arith.select %48, %33, %49 : vector<64x64xi1>, vector<64x64xi32>
    %cst_28 = arith.constant dense<2147483647> : vector<64xi32>
    %51 = vector.multi_reduction <minsi>, %50, %cst_28 [1] : vector<64x64xi32> to vector<64xi32>
    %52 = vector.shape_cast %51 : vector<64xi32> to vector<64x1xi32>
    %53 = vector.broadcast %52 : vector<64x1xi32> to vector<64x64xi32>
    %54 = arith.cmpi eq, %53, %33 : vector<64x64xi32>
    %55 = arith.extui %54 : vector<64x64xi1> to vector<64x64xi32>
    %56 = arith.sitofp %55 : vector<64x64xi32> to vector<64x64xf32>
    %cst_29 = arith.constant dense<0.000000e+00> : vector<64x32xf32>
    %57 = tpu.matmul %56, %35, %cst_29 {dimension_numbers = #tpu.dot_dimension_numbers<[1], [0], [0], [1], [0, 0, 1, 1], [], []>} : vector<64x64xf32>, vector<64x32xf32>, vector<64x32xf32> -> vector<64x32xf32>
    %58 = arith.subf %30, %57 : vector<64x32xf32>
    %59 = arith.mulf %58, %58 : vector<64x32xf32>
    %cst_30 = arith.constant dense<0.000000e+00> : vector<64xf32>
    %60 = vector.multi_reduction <add>, %59, %cst_30 [1] : vector<64x32xf32> to vector<64xf32>
    %61 = vector.shape_cast %60 : vector<64xf32> to vector<64x1xf32>
    %62 = arith.addf %32, %61 : vector<64x1xf32>
    %63 = arith.addf %31, %57 : vector<64x32xf32>
    %64 = arith.subf %30, %57 : vector<64x32xf32>
    %c1 = arith.constant 1 : index
    %c0_31 = arith.constant 0 : index
    %c0_32 = arith.constant 0 : index
    %65 = vector.load %arg8[%c1, %c0_31, %c0_32] : memref<3x64x32xf32, #tpu.memory_space<vmem>>, vector<1x64x32xf32>
    %66 = vector.shape_cast %65 : vector<1x64x32xf32> to vector<64x32xf32>
    %67 = arith.truncf %64 : vector<64x32xf32> to vector<64x32xbf16>
    %68 = arith.truncf %66 : vector<64x32xf32> to vector<64x32xbf16>
    %cst_33 = arith.constant dense<0.000000e+00> : vector<64x64xf32>
    %69 = tpu.matmul %67, %68, %cst_33 {dimension_numbers = #tpu.dot_dimension_numbers<[1], [1], [0], [0], [0, 0, 1, 0], [], []>} : vector<64x32xbf16>, vector<64x32xbf16>, vector<64x64xf32> -> vector<64x64xf32>
    %c1_34 = arith.constant 1 : index
    %c0_35 = arith.constant 0 : index
    %c0_36 = arith.constant 0 : index
    %70 = vector.load %arg9[%c1_34, %c0_35, %c0_36] : memref<3x1x64xf32, #tpu.memory_space<vmem>>, vector<1x1x64xf32>
    %71 = vector.shape_cast %70 : vector<1x1x64xf32> to vector<1x64xf32>
    %cst_37 = arith.constant 2.000000e+00 : f32
    %72 = vector.broadcast %cst_37 : f32 to vector<64x64xf32>
    %73 = arith.mulf %72, %69 : vector<64x64xf32>
    %74 = vector.broadcast %71 : vector<1x64xf32> to vector<64x64xf32>
    %75 = arith.subf %74, %73 : vector<64x64xf32>
    %cst_38 = arith.constant dense<0x7F800000> : vector<64xf32>
    %76 = vector.multi_reduction <minimumf>, %75, %cst_38 [1] : vector<64x64xf32> to vector<64xf32>
    %77 = vector.shape_cast %76 : vector<64xf32> to vector<64x1xf32>
    %78 = vector.broadcast %77 : vector<64x1xf32> to vector<64x64xf32>
    %79 = arith.cmpf ole, %75, %78 : vector<64x64xf32>
    %c64_i32_39 = arith.constant 64 : i32
    %80 = vector.broadcast %c64_i32_39 : i32 to vector<64x64xi32>
    %81 = arith.select %79, %33, %80 : vector<64x64xi1>, vector<64x64xi32>
    %cst_40 = arith.constant dense<2147483647> : vector<64xi32>
    %82 = vector.multi_reduction <minsi>, %81, %cst_40 [1] : vector<64x64xi32> to vector<64xi32>
    %83 = vector.shape_cast %82 : vector<64xi32> to vector<64x1xi32>
    %84 = vector.broadcast %83 : vector<64x1xi32> to vector<64x64xi32>
    %85 = arith.cmpi eq, %84, %33 : vector<64x64xi32>
    %86 = arith.extui %85 : vector<64x64xi1> to vector<64x64xi32>
    %87 = arith.sitofp %86 : vector<64x64xi32> to vector<64x64xf32>
    %cst_41 = arith.constant dense<0.000000e+00> : vector<64x32xf32>
    %88 = tpu.matmul %87, %66, %cst_41 {dimension_numbers = #tpu.dot_dimension_numbers<[1], [0], [0], [1], [0, 0, 1, 1], [], []>} : vector<64x64xf32>, vector<64x32xf32>, vector<64x32xf32> -> vector<64x32xf32>
    %89 = arith.subf %64, %88 : vector<64x32xf32>
    %90 = arith.mulf %89, %89 : vector<64x32xf32>
    %cst_42 = arith.constant dense<0.000000e+00> : vector<64xf32>
    %91 = vector.multi_reduction <add>, %90, %cst_42 [1] : vector<64x32xf32> to vector<64xf32>
    %92 = vector.shape_cast %91 : vector<64xf32> to vector<64x1xf32>
    %93 = arith.addf %62, %92 : vector<64x1xf32>
    %94 = arith.addf %63, %88 : vector<64x32xf32>
    %95 = arith.subf %64, %88 : vector<64x32xf32>
    %c2 = arith.constant 2 : index
    %c0_43 = arith.constant 0 : index
    %c0_44 = arith.constant 0 : index
    %96 = vector.load %arg8[%c2, %c0_43, %c0_44] : memref<3x64x32xf32, #tpu.memory_space<vmem>>, vector<1x64x32xf32>
    %97 = vector.shape_cast %96 : vector<1x64x32xf32> to vector<64x32xf32>
    %98 = arith.truncf %95 : vector<64x32xf32> to vector<64x32xbf16>
    %99 = arith.truncf %97 : vector<64x32xf32> to vector<64x32xbf16>
    %cst_45 = arith.constant dense<0.000000e+00> : vector<64x64xf32>
    %100 = tpu.matmul %98, %99, %cst_45 {dimension_numbers = #tpu.dot_dimension_numbers<[1], [1], [0], [0], [0, 0, 1, 0], [], []>} : vector<64x32xbf16>, vector<64x32xbf16>, vector<64x64xf32> -> vector<64x64xf32>
    %c2_46 = arith.constant 2 : index
    %c0_47 = arith.constant 0 : index
    %c0_48 = arith.constant 0 : index
    %101 = vector.load %arg9[%c2_46, %c0_47, %c0_48] : memref<3x1x64xf32, #tpu.memory_space<vmem>>, vector<1x1x64xf32>
    %102 = vector.shape_cast %101 : vector<1x1x64xf32> to vector<1x64xf32>
    %cst_49 = arith.constant 2.000000e+00 : f32
    %103 = vector.broadcast %cst_49 : f32 to vector<64x64xf32>
    %104 = arith.mulf %103, %100 : vector<64x64xf32>
    %105 = vector.broadcast %102 : vector<1x64xf32> to vector<64x64xf32>
    %106 = arith.subf %105, %104 : vector<64x64xf32>
    %cst_50 = arith.constant dense<0x7F800000> : vector<64xf32>
    %107 = vector.multi_reduction <minimumf>, %106, %cst_50 [1] : vector<64x64xf32> to vector<64xf32>
    %108 = vector.shape_cast %107 : vector<64xf32> to vector<64x1xf32>
    %109 = vector.broadcast %108 : vector<64x1xf32> to vector<64x64xf32>
    %110 = arith.cmpf ole, %106, %109 : vector<64x64xf32>
    %c64_i32_51 = arith.constant 64 : i32
    %111 = vector.broadcast %c64_i32_51 : i32 to vector<64x64xi32>
    %112 = arith.select %110, %33, %111 : vector<64x64xi1>, vector<64x64xi32>
    %cst_52 = arith.constant dense<2147483647> : vector<64xi32>
    %113 = vector.multi_reduction <minsi>, %112, %cst_52 [1] : vector<64x64xi32> to vector<64xi32>
    %114 = vector.shape_cast %113 : vector<64xi32> to vector<64x1xi32>
    %115 = vector.broadcast %114 : vector<64x1xi32> to vector<64x64xi32>
    %116 = arith.cmpi eq, %115, %33 : vector<64x64xi32>
    %117 = arith.extui %116 : vector<64x64xi1> to vector<64x64xi32>
    %118 = arith.sitofp %117 : vector<64x64xi32> to vector<64x64xf32>
    %cst_53 = arith.constant dense<0.000000e+00> : vector<64x32xf32>
    %119 = tpu.matmul %118, %97, %cst_53 {dimension_numbers = #tpu.dot_dimension_numbers<[1], [0], [0], [1], [0, 0, 1, 1], [], []>} : vector<64x64xf32>, vector<64x32xf32>, vector<64x32xf32> -> vector<64x32xf32>
    %120 = arith.subf %95, %119 : vector<64x32xf32>
    %121 = arith.mulf %120, %120 : vector<64x32xf32>
    %cst_54 = arith.constant dense<0.000000e+00> : vector<64xf32>
    %122 = vector.multi_reduction <add>, %121, %cst_54 [1] : vector<64x32xf32> to vector<64xf32>
    %123 = vector.shape_cast %122 : vector<64xf32> to vector<64x1xf32>
    %124 = arith.addf %93, %123 : vector<64x1xf32>
    %125 = arith.addf %94, %119 : vector<64x32xf32>
    %126 = tpu.concatenate %52, %83, %114 in 1 : vector<64x1xi32>, vector<64x1xi32>, vector<64x1xi32> -> vector<64x3xi32>
    %c0_55 = arith.constant 0 : index
    %c0_56 = arith.constant 0 : index
    %127 = vector.load %arg17[%c0_55, %c0_56] : memref<64x3xi32, #tpu.memory_space<vmem>>, vector<64x3xi32>
    tpu.vector_store %arg17[%c0_55, %c0_56], %126 {strides = array<i32>} : memref<64x3xi32, #tpu.memory_space<vmem>>, vector<64x3xi32>,
    %128 = arith.truncf %125 : vector<64x32xf32> to vector<64x32xbf16>
    %c0_57 = arith.constant 0 : index
    %c0_58 = arith.constant 0 : index
    %129 = vector.load %arg10[%c0_57, %c0_58] : memref<32x48xbf16, #tpu.memory_space<vmem>>, vector<32x48xbf16>
    %cst_59 = arith.constant dense<0.000000e+00> : vector<64x48xf32>
    %130 = tpu.matmul %128, %129, %cst_59 {dimension_numbers = #tpu.dot_dimension_numbers<[1], [0], [0], [1], [0, 0, 1, 1], [], []>} : vector<64x32xbf16>, vector<32x48xbf16>, vector<64x48xf32> -> vector<64x48xf32>
    %c0_60 = arith.constant 0 : index
    %c0_61 = arith.constant 0 : index
    %131 = vector.load %arg11[%c0_60, %c0_61] : memref<1x48xf32, #tpu.memory_space<vmem>>, vector<1x48xf32>
    %132 = vector.broadcast %131 : vector<1x48xf32> to vector<64x48xf32>
    %133 = arith.addf %130, %132 : vector<64x48xf32>
    %134 = arith.negf %133 : vector<64x48xf32>
    %135 = math.exp %134 : vector<64x48xf32>
    %cst_62 = arith.constant 1.000000e+00 : f32
    %136 = vector.broadcast %cst_62 : f32 to vector<64x48xf32>
    %137 = arith.addf %136, %135 : vector<64x48xf32>
    %138 = arith.divf %136, %137 : vector<64x48xf32>
    %139 = arith.mulf %133, %138 : vector<64x48xf32>
    %140 = arith.truncf %139 : vector<64x48xf32> to vector<64x48xbf16>
    %c0_63 = arith.constant 0 : index
    %c0_64 = arith.constant 0 : index
    %141 = vector.load %arg12[%c0_63, %c0_64] : memref<48x32xbf16, #tpu.memory_space<vmem>>, vector<48x32xbf16>
    %cst_65 = arith.constant dense<0.000000e+00> : vector<64x32xf32>
    %142 = tpu.matmul %140, %141, %cst_65 {dimension_numbers = #tpu.dot_dimension_numbers<[1], [0], [0], [1], [0, 0, 1, 1], [], []>} : vector<64x48xbf16>, vector<48x32xbf16>, vector<64x32xf32> -> vector<64x32xf32>
    %c0_66 = arith.constant 0 : index
    %c0_67 = arith.constant 0 : index
    %143 = vector.load %arg13[%c0_66, %c0_67] : memref<1x32xf32, #tpu.memory_space<vmem>>, vector<1x32xf32>
    %144 = vector.broadcast %143 : vector<1x32xf32> to vector<64x32xf32>
    %145 = arith.addf %142, %144 : vector<64x32xf32>
    %146 = arith.negf %145 : vector<64x32xf32>
    %147 = math.exp %146 : vector<64x32xf32>
    %cst_68 = arith.constant 1.000000e+00 : f32
    %148 = vector.broadcast %cst_68 : f32 to vector<64x32xf32>
    %149 = arith.addf %148, %147 : vector<64x32xf32>
    %150 = arith.divf %148, %149 : vector<64x32xf32>
    %151 = arith.mulf %145, %150 : vector<64x32xf32>
    %152 = arith.truncf %151 : vector<64x32xf32> to vector<64x32xbf16>
    %c0_69 = arith.constant 0 : index
    %c0_70 = arith.constant 0 : index
    %153 = vector.load %arg14[%c0_69, %c0_70] : memref<32x64xbf16, #tpu.memory_space<vmem>>, vector<32x64xbf16>
    %cst_71 = arith.constant dense<0.000000e+00> : vector<64x64xf32>
    %154 = tpu.matmul %152, %153, %cst_71 {dimension_numbers = #tpu.dot_dimension_numbers<[1], [0], [0], [1], [0, 0, 1, 1], [], []>} : vector<64x32xbf16>, vector<32x64xbf16>, vector<64x64xf32> -> vector<64x64xf32>
    %c0_72 = arith.constant 0 : index
    %c0_73 = arith.constant 0 : index
    %155 = vector.load %arg15[%c0_72, %c0_73] : memref<1x64xf32, #tpu.memory_space<vmem>>, vector<1x64xf32>
    %156 = vector.broadcast %155 : vector<1x64xf32> to vector<64x64xf32>
    %157 = arith.addf %154, %156 : vector<64x64xf32>
    %158 = arith.subf %157, %0 : vector<64x64xf32>
    %159 = arith.mulf %158, %158 : vector<64x64xf32>
    %cst_74 = arith.constant dense<0.000000e+00> : vector<64xf32>
    %160 = vector.multi_reduction <add>, %159, %cst_74 [1] : vector<64x64xf32> to vector<64xf32>
    %161 = vector.shape_cast %160 : vector<64xf32> to vector<64x1xf32>
    %cst_75 = arith.constant 1.250000e+00 : f32
    %162 = vector.broadcast %cst_75 : f32 to vector<64x1xf32>
    %163 = arith.mulf %162, %124 : vector<64x1xf32>
    %164 = arith.addf %161, %163 : vector<64x1xf32>
    %c0_76 = arith.constant 0 : index
    %c0_77 = arith.constant 0 : index
    %165 = vector.load %arg16[%c0_76, %c0_77] : memref<64x1xf32, #tpu.memory_space<vmem>>, vector<64x1xf32>
    tpu.vector_store %arg16[%c0_76, %c0_77], %164 {strides = array<i32>} : memref<64x1xf32, #tpu.memory_space<vmem>>, vector<64x1xf32>,
    return
  }
  func.func @transform_0(%arg0: i32) -> (i32, i32) {
    %c0_i32 = arith.constant 0 : i32
    %c0_i32_0 = arith.constant 0 : i32
    return %arg0, %c0_i32 : i32, i32
  }
  func.func @transform_1(%arg0: i32) -> (i32, i32) {
    %c0_i32 = arith.constant 0 : i32
    %c0_i32_0 = arith.constant 0 : i32
    %c0_i32_1 = arith.constant 0 : i32
    return %c0_i32, %c0_i32_0 : i32, i32
  }
  func.func @transform_2(%arg0: i32) -> (i32, i32) {
    %c0_i32 = arith.constant 0 : i32
    %c0_i32_0 = arith.constant 0 : i32
    %c0_i32_1 = arith.constant 0 : i32
    return %c0_i32, %c0_i32_0 : i32, i32
  }
  func.func @transform_3(%arg0: i32) -> (i32, i32) {
    %c0_i32 = arith.constant 0 : i32
    %c0_i32_0 = arith.constant 0 : i32
    %c0_i32_1 = arith.constant 0 : i32
    return %c0_i32, %c0_i32_0 : i32, i32
  }
  func.func @transform_4(%arg0: i32) -> (i32, i32) {
    %c0_i32 = arith.constant 0 : i32
    %c0_i32_0 = arith.constant 0 : i32
    %c0_i32_1 = arith.constant 0 : i32
    return %c0_i32, %c0_i32_0 : i32, i32
  }
  func.func @transform_5(%arg0: i32) -> (i32, i32) {
    %c0_i32 = arith.constant 0 : i32
    %c0_i32_0 = arith.constant 0 : i32
    %c0_i32_1 = arith.constant 0 : i32
    return %c0_i32, %c0_i32_0 : i32, i32
  }
  func.func @transform_6(%arg0: i32) -> (i32, i32) {
    %c0_i32 = arith.constant 0 : i32
    %c0_i32_0 = arith.constant 0 : i32
    %c0_i32_1 = arith.constant 0 : i32
    return %c0_i32, %c0_i32_0 : i32, i32
  }
  func.func @transform_7(%arg0: i32) -> (i32, i32, i32) {
    %c0_i32 = arith.constant 0 : i32
    %c0_i32_0 = arith.constant 0 : i32
    %c0_i32_1 = arith.constant 0 : i32
    %c0_i32_2 = arith.constant 0 : i32
    return %c0_i32, %c0_i32_0, %c0_i32_1 : i32, i32, i32
  }
  func.func @transform_8(%arg0: i32) -> (i32, i32, i32) {
    %c0_i32 = arith.constant 0 : i32
    %c0_i32_0 = arith.constant 0 : i32
    %c0_i32_1 = arith.constant 0 : i32
    %c0_i32_2 = arith.constant 0 : i32
    return %c0_i32, %c0_i32_0, %c0_i32_1 : i32, i32, i32
  }
  func.func @transform_9(%arg0: i32) -> (i32, i32) {
    %c0_i32 = arith.constant 0 : i32
    %c0_i32_0 = arith.constant 0 : i32
    %c0_i32_1 = arith.constant 0 : i32
    return %c0_i32, %c0_i32_0 : i32, i32
  }
  func.func @transform_10(%arg0: i32) -> (i32, i32) {
    %c0_i32 = arith.constant 0 : i32
    %c0_i32_0 = arith.constant 0 : i32
    %c0_i32_1 = arith.constant 0 : i32
    return %c0_i32, %c0_i32_0 : i32, i32
  }
  func.func @transform_11(%arg0: i32) -> (i32, i32) {
    %c0_i32 = arith.constant 0 : i32
    %c0_i32_0 = arith.constant 0 : i32
    %c0_i32_1 = arith.constant 0 : i32
    return %c0_i32, %c0_i32_0 : i32, i32
  }
  func.func @transform_12(%arg0: i32) -> (i32, i32) {
    %c0_i32 = arith.constant 0 : i32
    %c0_i32_0 = arith.constant 0 : i32
    %c0_i32_1 = arith.constant 0 : i32
    return %c0_i32, %c0_i32_0 : i32, i32
  }
  func.func @transform_13(%arg0: i32) -> (i32, i32) {
    %c0_i32 = arith.constant 0 : i32
    %c0_i32_0 = arith.constant 0 : i32
    %c0_i32_1 = arith.constant 0 : i32
    return %c0_i32, %c0_i32_0 : i32, i32
  }
  func.func @transform_14(%arg0: i32) -> (i32, i32) {
    %c0_i32 = arith.constant 0 : i32
    %c0_i32_0 = arith.constant 0 : i32
    %c0_i32_1 = arith.constant 0 : i32
    return %c0_i32, %c0_i32_0 : i32, i32
  }
  func.func @transform_15(%arg0: i32) -> (i32, i32) {
    %c0_i32 = arith.constant 0 : i32
    %c0_i32_0 = arith.constant 0 : i32
    return %arg0, %c0_i32 : i32, i32
  }
  func.func @transform_16(%arg0: i32) -> (i32, i32) {
    %c0_i32 = arith.constant 0 : i32
    %c0_i32_0 = arith.constant 0 : i32
    return %arg0, %c0_i32 : i32, i32
  }
}

module attributes {stable_mosaic.version = 11 : i64} {
  func.func @_rqvae_kernel(%arg0: i32, %arg1: memref<64x64xf32, #tpu.memory_space<vmem>>, %arg2: memref<64x48xbf16, #tpu.memory_space<vmem>>, %arg3: memref<1x48xf32, #tpu.memory_space<vmem>>, %arg4: memref<48x32xbf16, #tpu.memory_space<vmem>>, %arg5: memref<1x32xf32, #tpu.memory_space<vmem>>, %arg6: memref<32x32xbf16, #tpu.memory_space<vmem>>, %arg7: memref<1x32xf32, #tpu.memory_space<vmem>>, %arg8: memref<3x64x32xf32, #tpu.memory_space<vmem>>, %arg9: memref<3x1x64xf32, #tpu.memory_space<vmem>>, %arg10: memref<32x48xbf16, #tpu.memory_space<vmem>>, %arg11: memref<1x48xf32, #tpu.memory_space<vmem>>, %arg12: memref<48x32xbf16, #tpu.memory_space<vmem>>, %arg13: memref<1x32xf32, #tpu.memory_space<vmem>>, %arg14: memref<32x64xbf16, #tpu.memory_space<vmem>>, %arg15: memref<1x64xf32, #tpu.memory_space<vmem>>, %arg16: memref<64x1xf32, #tpu.memory_space<vmem>>, %arg17: memref<64x3xi32, #tpu.memory_space<vmem>>) attributes {dimension_semantics = [#tpu.dimension_semantics<parallel>], iteration_bounds = array<i64: 1>, scalar_prefetch = 0 : i64, scratch_operands = 0 : i64, tpu.core_type = #tpu.core_type<tc>, window_params = [{transform_indices = @transform_0, window_bounds = array<i64: 64, 64>}, {pipeline_mode = #tpu.pipeline_mode<synchronous>, transform_indices = @transform_1, window_bounds = array<i64: 64, 48>}, {pipeline_mode = #tpu.pipeline_mode<synchronous>, transform_indices = @transform_2, window_bounds = array<i64: 1, 48>}, {pipeline_mode = #tpu.pipeline_mode<synchronous>, transform_indices = @transform_3, window_bounds = array<i64: 48, 32>}, {pipeline_mode = #tpu.pipeline_mode<synchronous>, transform_indices = @transform_4, window_bounds = array<i64: 1, 32>}, {pipeline_mode = #tpu.pipeline_mode<synchronous>, transform_indices = @transform_5, window_bounds = array<i64: 32, 32>}, {pipeline_mode = #tpu.pipeline_mode<synchronous>, transform_indices = @transform_6, window_bounds = array<i64: 1, 32>}, {pipeline_mode = #tpu.pipeline_mode<synchronous>, transform_indices = @transform_7, window_bounds = array<i64: 3, 64, 32>}, {pipeline_mode = #tpu.pipeline_mode<synchronous>, transform_indices = @transform_8, window_bounds = array<i64: 3, 1, 64>}, {pipeline_mode = #tpu.pipeline_mode<synchronous>, transform_indices = @transform_9, window_bounds = array<i64: 32, 48>}, {pipeline_mode = #tpu.pipeline_mode<synchronous>, transform_indices = @transform_10, window_bounds = array<i64: 1, 48>}, {pipeline_mode = #tpu.pipeline_mode<synchronous>, transform_indices = @transform_11, window_bounds = array<i64: 48, 32>}, {pipeline_mode = #tpu.pipeline_mode<synchronous>, transform_indices = @transform_12, window_bounds = array<i64: 1, 32>}, {pipeline_mode = #tpu.pipeline_mode<synchronous>, transform_indices = @transform_13, window_bounds = array<i64: 32, 64>}, {pipeline_mode = #tpu.pipeline_mode<synchronous>, transform_indices = @transform_14, window_bounds = array<i64: 1, 64>}, {transform_indices = @transform_15, window_bounds = array<i64: 64, 1>}, {transform_indices = @transform_16, window_bounds = array<i64: 64, 3>}]} {
    %c0 = arith.constant 0 : index
    %c0_0 = arith.constant 0 : index
    %0 = vector.load %arg1[%c0, %c0_0] : memref<64x64xf32, #tpu.memory_space<vmem>>, vector<64x64xf32>
    %1 = arith.truncf %0 : vector<64x64xf32> to vector<64x64xbf16>
    %c0_1 = arith.constant 0 : index
    %c0_2 = arith.constant 0 : index
    %2 = vector.load %arg2[%c0_1, %c0_2] : memref<64x48xbf16, #tpu.memory_space<vmem>>, vector<64x48xbf16>
    %cst = arith.constant dense<0.000000e+00> : vector<64x48xf32>
    %3 = tpu.matmul %1, %2, %cst {dimension_numbers = #tpu.dot_dimension_numbers<[1], [0], [0], [1], [0, 0, 1, 1], [], []>} : vector<64x64xbf16>, vector<64x48xbf16>, vector<64x48xf32> -> vector<64x48xf32>
    %c0_3 = arith.constant 0 : index
    %c0_4 = arith.constant 0 : index
    %4 = vector.load %arg3[%c0_3, %c0_4] : memref<1x48xf32, #tpu.memory_space<vmem>>, vector<1x48xf32>
    %5 = vector.broadcast %4 : vector<1x48xf32> to vector<64x48xf32>
    %6 = arith.addf %3, %5 : vector<64x48xf32>
    %7 = arith.negf %6 : vector<64x48xf32>
    %8 = math.exp %7 : vector<64x48xf32>
    %cst_5 = arith.constant 1.000000e+00 : f32
    %9 = vector.broadcast %cst_5 : f32 to vector<64x48xf32>
    %10 = arith.addf %9, %8 : vector<64x48xf32>
    %11 = arith.divf %9, %10 : vector<64x48xf32>
    %12 = arith.mulf %6, %11 : vector<64x48xf32>
    %13 = arith.truncf %12 : vector<64x48xf32> to vector<64x48xbf16>
    %c0_6 = arith.constant 0 : index
    %c0_7 = arith.constant 0 : index
    %14 = vector.load %arg4[%c0_6, %c0_7] : memref<48x32xbf16, #tpu.memory_space<vmem>>, vector<48x32xbf16>
    %cst_8 = arith.constant dense<0.000000e+00> : vector<64x32xf32>
    %15 = tpu.matmul %13, %14, %cst_8 {dimension_numbers = #tpu.dot_dimension_numbers<[1], [0], [0], [1], [0, 0, 1, 1], [], []>} : vector<64x48xbf16>, vector<48x32xbf16>, vector<64x32xf32> -> vector<64x32xf32>
    %c0_9 = arith.constant 0 : index
    %c0_10 = arith.constant 0 : index
    %16 = vector.load %arg5[%c0_9, %c0_10] : memref<1x32xf32, #tpu.memory_space<vmem>>, vector<1x32xf32>
    %17 = vector.broadcast %16 : vector<1x32xf32> to vector<64x32xf32>
    %18 = arith.addf %15, %17 : vector<64x32xf32>
    %19 = arith.negf %18 : vector<64x32xf32>
    %20 = math.exp %19 : vector<64x32xf32>
    %cst_11 = arith.constant 1.000000e+00 : f32
    %21 = vector.broadcast %cst_11 : f32 to vector<64x32xf32>
    %22 = arith.addf %21, %20 : vector<64x32xf32>
    %23 = arith.divf %21, %22 : vector<64x32xf32>
    %24 = arith.mulf %18, %23 : vector<64x32xf32>
    %25 = arith.truncf %24 : vector<64x32xf32> to vector<64x32xbf16>
    %c0_12 = arith.constant 0 : index
    %c0_13 = arith.constant 0 : index
    %26 = vector.load %arg6[%c0_12, %c0_13] : memref<32x32xbf16, #tpu.memory_space<vmem>>, vector<32x32xbf16>
    %cst_14 = arith.constant dense<0.000000e+00> : vector<64x32xf32>
    %27 = tpu.matmul %25, %26, %cst_14 {dimension_numbers = #tpu.dot_dimension_numbers<[1], [0], [0], [1], [0, 0, 1, 1], [], []>} : vector<64x32xbf16>, vector<32x32xbf16>, vector<64x32xf32> -> vector<64x32xf32>
    %c0_15 = arith.constant 0 : index
    %c0_16 = arith.constant 0 : index
    %28 = vector.load %arg7[%c0_15, %c0_16] : memref<1x32xf32, #tpu.memory_space<vmem>>, vector<1x32xf32>
    %29 = vector.broadcast %28 : vector<1x32xf32> to vector<64x32xf32>
    %30 = arith.addf %27, %29 : vector<64x32xf32>
    %cst_17 = arith.constant 0.000000e+00 : f32
    %31 = vector.broadcast %cst_17 : f32 to vector<64x32xf32>
    %cst_18 = arith.constant 0.000000e+00 : f32
    %32 = vector.broadcast %cst_18 : f32 to vector<64x1xf32>
    %33 = tpu.iota {dimensions = array<i32: 1>} : vector<64x64xi32>
    %c0_19 = arith.constant 0 : index
    %c0_20 = arith.constant 0 : index
    %c0_21 = arith.constant 0 : index
    %34 = vector.load %arg8[%c0_19, %c0_20, %c0_21] : memref<3x64x32xf32, #tpu.memory_space<vmem>>, vector<1x64x32xf32>
    %35 = vector.shape_cast %34 : vector<1x64x32xf32> to vector<64x32xf32>
    %36 = arith.truncf %30 : vector<64x32xf32> to vector<64x32xbf16>
    %37 = arith.truncf %35 : vector<64x32xf32> to vector<64x32xbf16>
    %cst_22 = arith.constant dense<0.000000e+00> : vector<64x64xf32>
    %38 = tpu.matmul %36, %37, %cst_22 {dimension_numbers = #tpu.dot_dimension_numbers<[1], [1], [0], [0], [0, 0, 1, 0], [], []>} : vector<64x32xbf16>, vector<64x32xbf16>, vector<64x64xf32> -> vector<64x64xf32>
    %c0_23 = arith.constant 0 : index
    %c0_24 = arith.constant 0 : index
    %c0_25 = arith.constant 0 : index
    %39 = vector.load %arg9[%c0_23, %c0_24, %c0_25] : memref<3x1x64xf32, #tpu.memory_space<vmem>>, vector<1x1x64xf32>
    %40 = vector.shape_cast %39 : vector<1x1x64xf32> to vector<1x64xf32>
    %cst_26 = arith.constant 2.000000e+00 : f32
    %41 = vector.broadcast %cst_26 : f32 to vector<64x64xf32>
    %42 = arith.mulf %41, %38 : vector<64x64xf32>
    %43 = vector.broadcast %40 : vector<1x64xf32> to vector<64x64xf32>
    %44 = arith.subf %43, %42 : vector<64x64xf32>
    %cst_27 = arith.constant dense<0x7F800000> : vector<64xf32>
    %45 = vector.multi_reduction <minimumf>, %44, %cst_27 [1] : vector<64x64xf32> to vector<64xf32>
    %46 = vector.shape_cast %45 : vector<64xf32> to vector<64x1xf32>
    %47 = vector.broadcast %46 : vector<64x1xf32> to vector<64x64xf32>
    %48 = arith.cmpf ole, %44, %47 : vector<64x64xf32>
    %c64_i32 = arith.constant 64 : i32
    %49 = vector.broadcast %c64_i32 : i32 to vector<64x64xi32>
    %50 = arith.select %48, %33, %49 : vector<64x64xi1>, vector<64x64xi32>
    %cst_28 = arith.constant dense<2147483647> : vector<64xi32>
    %51 = vector.multi_reduction <minsi>, %50, %cst_28 [1] : vector<64x64xi32> to vector<64xi32>
    %52 = vector.shape_cast %51 : vector<64xi32> to vector<64x1xi32>
    %53 = vector.broadcast %52 : vector<64x1xi32> to vector<64x64xi32>
    %54 = arith.cmpi eq, %53, %33 : vector<64x64xi32>
    %55 = arith.extui %54 : vector<64x64xi1> to vector<64x64xi32>
    %56 = arith.sitofp %55 : vector<64x64xi32> to vector<64x64xf32>
    %cst_29 = arith.constant dense<0.000000e+00> : vector<64x32xf32>
    %57 = tpu.matmul %56, %35, %cst_29 {dimension_numbers = #tpu.dot_dimension_numbers<[1], [0], [0], [1], [0, 0, 1, 1], [], []>} : vector<64x64xf32>, vector<64x32xf32>, vector<64x32xf32> -> vector<64x32xf32>
    %58 = arith.subf %30, %57 : vector<64x32xf32>
    %59 = arith.mulf %58, %58 : vector<64x32xf32>
    %cst_30 = arith.constant dense<0.000000e+00> : vector<64xf32>
    %60 = vector.multi_reduction <add>, %59, %cst_30 [1] : vector<64x32xf32> to vector<64xf32>
    %61 = vector.shape_cast %60 : vector<64xf32> to vector<64x1xf32>
    %62 = arith.addf %32, %61 : vector<64x1xf32>
    %63 = arith.addf %31, %57 : vector<64x32xf32>
    %64 = arith.subf %30, %57 : vector<64x32xf32>
    %c1 = arith.constant 1 : index
    %c0_31 = arith.constant 0 : index
    %c0_32 = arith.constant 0 : index
    %65 = vector.load %arg8[%c1, %c0_31, %c0_32] : memref<3x64x32xf32, #tpu.memory_space<vmem>>, vector<1x64x32xf32>
    %66 = vector.shape_cast %65 : vector<1x64x32xf32> to vector<64x32xf32>
    %67 = arith.truncf %64 : vector<64x32xf32> to vector<64x32xbf16>
    %68 = arith.truncf %66 : vector<64x32xf32> to vector<64x32xbf16>
    %cst_33 = arith.constant dense<0.000000e+00> : vector<64x64xf32>
    %69 = tpu.matmul %67, %68, %cst_33 {dimension_numbers = #tpu.dot_dimension_numbers<[1], [1], [0], [0], [0, 0, 1, 0], [], []>} : vector<64x32xbf16>, vector<64x32xbf16>, vector<64x64xf32> -> vector<64x64xf32>
    %c1_34 = arith.constant 1 : index
    %c0_35 = arith.constant 0 : index
    %c0_36 = arith.constant 0 : index
    %70 = vector.load %arg9[%c1_34, %c0_35, %c0_36] : memref<3x1x64xf32, #tpu.memory_space<vmem>>, vector<1x1x64xf32>
    %71 = vector.shape_cast %70 : vector<1x1x64xf32> to vector<1x64xf32>
    %cst_37 = arith.constant 2.000000e+00 : f32
    %72 = vector.broadcast %cst_37 : f32 to vector<64x64xf32>
    %73 = arith.mulf %72, %69 : vector<64x64xf32>
    %74 = vector.broadcast %71 : vector<1x64xf32> to vector<64x64xf32>
    %75 = arith.subf %74, %73 : vector<64x64xf32>
    %cst_38 = arith.constant dense<0x7F800000> : vector<64xf32>
    %76 = vector.multi_reduction <minimumf>, %75, %cst_38 [1] : vector<64x64xf32> to vector<64xf32>
    %77 = vector.shape_cast %76 : vector<64xf32> to vector<64x1xf32>
    %78 = vector.broadcast %77 : vector<64x1xf32> to vector<64x64xf32>
    %79 = arith.cmpf ole, %75, %78 : vector<64x64xf32>
    %c64_i32_39 = arith.constant 64 : i32
    %80 = vector.broadcast %c64_i32_39 : i32 to vector<64x64xi32>
    %81 = arith.select %79, %33, %80 : vector<64x64xi1>, vector<64x64xi32>
    %cst_40 = arith.constant dense<2147483647> : vector<64xi32>
    %82 = vector.multi_reduction <minsi>, %81, %cst_40 [1] : vector<64x64xi32> to vector<64xi32>
    %83 = vector.shape_cast %82 : vector<64xi32> to vector<64x1xi32>
    %84 = vector.broadcast %83 : vector<64x1xi32> to vector<64x64xi32>
    %85 = arith.cmpi eq, %84, %33 : vector<64x64xi32>
    %86 = arith.extui %85 : vector<64x64xi1> to vector<64x64xi32>
    %87 = arith.sitofp %86 : vector<64x64xi32> to vector<64x64xf32>
    %cst_41 = arith.constant dense<0.000000e+00> : vector<64x32xf32>
    %88 = tpu.matmul %87, %66, %cst_41 {dimension_numbers = #tpu.dot_dimension_numbers<[1], [0], [0], [1], [0, 0, 1, 1], [], []>} : vector<64x64xf32>, vector<64x32xf32>, vector<64x32xf32> -> vector<64x32xf32>
    %89 = arith.subf %64, %88 : vector<64x32xf32>
    %90 = arith.mulf %89, %89 : vector<64x32xf32>
    %cst_42 = arith.constant dense<0.000000e+00> : vector<64xf32>
    %91 = vector.multi_reduction <add>, %90, %cst_42 [1] : vector<64x32xf32> to vector<64xf32>
    %92 = vector.shape_cast %91 : vector<64xf32> to vector<64x1xf32>
    %93 = arith.addf %62, %92 : vector<64x1xf32>
    %94 = arith.addf %63, %88 : vector<64x32xf32>
    %95 = arith.subf %64, %88 : vector<64x32xf32>
    %c2 = arith.constant 2 : index
    %c0_43 = arith.constant 0 : index
    %c0_44 = arith.constant 0 : index
    %96 = vector.load %arg8[%c2, %c0_43, %c0_44] : memref<3x64x32xf32, #tpu.memory_space<vmem>>, vector<1x64x32xf32>
    %97 = vector.shape_cast %96 : vector<1x64x32xf32> to vector<64x32xf32>
    %98 = arith.truncf %95 : vector<64x32xf32> to vector<64x32xbf16>
    %99 = arith.truncf %97 : vector<64x32xf32> to vector<64x32xbf16>
    %cst_45 = arith.constant dense<0.000000e+00> : vector<64x64xf32>
    %100 = tpu.matmul %98, %99, %cst_45 {dimension_numbers = #tpu.dot_dimension_numbers<[1], [1], [0], [0], [0, 0, 1, 0], [], []>} : vector<64x32xbf16>, vector<64x32xbf16>, vector<64x64xf32> -> vector<64x64xf32>
    %c2_46 = arith.constant 2 : index
    %c0_47 = arith.constant 0 : index
    %c0_48 = arith.constant 0 : index
    %101 = vector.load %arg9[%c2_46, %c0_47, %c0_48] : memref<3x1x64xf32, #tpu.memory_space<vmem>>, vector<1x1x64xf32>
    %102 = vector.shape_cast %101 : vector<1x1x64xf32> to vector<1x64xf32>
    %cst_49 = arith.constant 2.000000e+00 : f32
    %103 = vector.broadcast %cst_49 : f32 to vector<64x64xf32>
    %104 = arith.mulf %103, %100 : vector<64x64xf32>
    %105 = vector.broadcast %102 : vector<1x64xf32> to vector<64x64xf32>
    %106 = arith.subf %105, %104 : vector<64x64xf32>
    %cst_50 = arith.constant dense<0x7F800000> : vector<64xf32>
    %107 = vector.multi_reduction <minimumf>, %106, %cst_50 [1] : vector<64x64xf32> to vector<64xf32>
    %108 = vector.shape_cast %107 : vector<64xf32> to vector<64x1xf32>
    %109 = vector.broadcast %108 : vector<64x1xf32> to vector<64x64xf32>
    %110 = arith.cmpf ole, %106, %109 : vector<64x64xf32>
    %c64_i32_51 = arith.constant 64 : i32
    %111 = vector.broadcast %c64_i32_51 : i32 to vector<64x64xi32>
    %112 = arith.select %110, %33, %111 : vector<64x64xi1>, vector<64x64xi32>
    %cst_52 = arith.constant dense<2147483647> : vector<64xi32>
    %113 = vector.multi_reduction <minsi>, %112, %cst_52 [1] : vector<64x64xi32> to vector<64xi32>
    %114 = vector.shape_cast %113 : vector<64xi32> to vector<64x1xi32>
    %115 = vector.broadcast %114 : vector<64x1xi32> to vector<64x64xi32>
    %116 = arith.cmpi eq, %115, %33 : vector<64x64xi32>
    %117 = arith.extui %116 : vector<64x64xi1> to vector<64x64xi32>
    %118 = arith.sitofp %117 : vector<64x64xi32> to vector<64x64xf32>
    %cst_53 = arith.constant dense<0.000000e+00> : vector<64x32xf32>
    %119 = tpu.matmul %118, %97, %cst_53 {dimension_numbers = #tpu.dot_dimension_numbers<[1], [0], [0], [1], [0, 0, 1, 1], [], []>} : vector<64x64xf32>, vector<64x32xf32>, vector<64x32xf32> -> vector<64x32xf32>
    %120 = arith.subf %95, %119 : vector<64x32xf32>
    %121 = arith.mulf %120, %120 : vector<64x32xf32>
    %cst_54 = arith.constant dense<0.000000e+00> : vector<64xf32>
    %122 = vector.multi_reduction <add>, %121, %cst_54 [1] : vector<64x32xf32> to vector<64xf32>
    %123 = vector.shape_cast %122 : vector<64xf32> to vector<64x1xf32>
    %124 = arith.addf %93, %123 : vector<64x1xf32>
    %125 = arith.addf %94, %119 : vector<64x32xf32>
    %126 = tpu.concatenate %52, %83, %114 in 1 : vector<64x1xi32>, vector<64x1xi32>, vector<64x1xi32> -> vector<64x3xi32>
    %c0_55 = arith.constant 0 : index
    %c0_56 = arith.constant 0 : index
    %127 = vector.load %arg17[%c0_55, %c0_56] : memref<64x3xi32, #tpu.memory_space<vmem>>, vector<64x3xi32>
    tpu.vector_store %arg17[%c0_55, %c0_56], %126 {strides = array<i32>} : memref<64x3xi32, #tpu.memory_space<vmem>>, vector<64x3xi32>,
    %128 = arith.truncf %125 : vector<64x32xf32> to vector<64x32xbf16>
    %c0_57 = arith.constant 0 : index
    %c0_58 = arith.constant 0 : index
    %129 = vector.load %arg10[%c0_57, %c0_58] : memref<32x48xbf16, #tpu.memory_space<vmem>>, vector<32x48xbf16>
    %cst_59 = arith.constant dense<0.000000e+00> : vector<64x48xf32>
    %130 = tpu.matmul %128, %129, %cst_59 {dimension_numbers = #tpu.dot_dimension_numbers<[1], [0], [0], [1], [0, 0, 1, 1], [], []>} : vector<64x32xbf16>, vector<32x48xbf16>, vector<64x48xf32> -> vector<64x48xf32>
    %c0_60 = arith.constant 0 : index
    %c0_61 = arith.constant 0 : index
    %131 = vector.load %arg11[%c0_60, %c0_61] : memref<1x48xf32, #tpu.memory_space<vmem>>, vector<1x48xf32>
    %132 = vector.broadcast %131 : vector<1x48xf32> to vector<64x48xf32>
    %133 = arith.addf %130, %132 : vector<64x48xf32>
    %134 = arith.negf %133 : vector<64x48xf32>
    %135 = math.exp %134 : vector<64x48xf32>
    %cst_62 = arith.constant 1.000000e+00 : f32
    %136 = vector.broadcast %cst_62 : f32 to vector<64x48xf32>
    %137 = arith.addf %136, %135 : vector<64x48xf32>
    %138 = arith.divf %136, %137 : vector<64x48xf32>
    %139 = arith.mulf %133, %138 : vector<64x48xf32>
    %140 = arith.truncf %139 : vector<64x48xf32> to vector<64x48xbf16>
    %c0_63 = arith.constant 0 : index
    %c0_64 = arith.constant 0 : index
    %141 = vector.load %arg12[%c0_63, %c0_64] : memref<48x32xbf16, #tpu.memory_space<vmem>>, vector<48x32xbf16>
    %cst_65 = arith.constant dense<0.000000e+00> : vector<64x32xf32>
    %142 = tpu.matmul %140, %141, %cst_65 {dimension_numbers = #tpu.dot_dimension_numbers<[1], [0], [0], [1], [0, 0, 1, 1], [], []>} : vector<64x48xbf16>, vector<48x32xbf16>, vector<64x32xf32> -> vector<64x32xf32>
    %c0_66 = arith.constant 0 : index
    %c0_67 = arith.constant 0 : index
    %143 = vector.load %arg13[%c0_66, %c0_67] : memref<1x32xf32, #tpu.memory_space<vmem>>, vector<1x32xf32>
    %144 = vector.broadcast %143 : vector<1x32xf32> to vector<64x32xf32>
    %145 = arith.addf %142, %144 : vector<64x32xf32>
    %146 = arith.negf %145 : vector<64x32xf32>
    %147 = math.exp %146 : vector<64x32xf32>
    %cst_68 = arith.constant 1.000000e+00 : f32
    %148 = vector.broadcast %cst_68 : f32 to vector<64x32xf32>
    %149 = arith.addf %148, %147 : vector<64x32xf32>
    %150 = arith.divf %148, %149 : vector<64x32xf32>
    %151 = arith.mulf %145, %150 : vector<64x32xf32>
    %152 = arith.truncf %151 : vector<64x32xf32> to vector<64x32xbf16>
    %c0_69 = arith.constant 0 : index
    %c0_70 = arith.constant 0 : index
    %153 = vector.load %arg14[%c0_69, %c0_70] : memref<32x64xbf16, #tpu.memory_space<vmem>>, vector<32x64xbf16>
    %cst_71 = arith.constant dense<0.000000e+00> : vector<64x64xf32>
    %154 = tpu.matmul %152, %153, %cst_71 {dimension_numbers = #tpu.dot_dimension_numbers<[1], [0], [0], [1], [0, 0, 1, 1], [], []>} : vector<64x32xbf16>, vector<32x64xbf16>, vector<64x64xf32> -> vector<64x64xf32>
    %c0_72 = arith.constant 0 : index
    %c0_73 = arith.constant 0 : index
    %155 = vector.load %arg15[%c0_72, %c0_73] : memref<1x64xf32, #tpu.memory_space<vmem>>, vector<1x64xf32>
    %156 = vector.broadcast %155 : vector<1x64xf32> to vector<64x64xf32>
    %157 = arith.addf %154, %156 : vector<64x64xf32>
    %158 = arith.subf %157, %0 : vector<64x64xf32>
    %159 = arith.mulf %158, %158 : vector<64x64xf32>
    %cst_74 = arith.constant dense<0.000000e+00> : vector<64xf32>
    %160 = vector.multi_reduction <add>, %159, %cst_74 [1] : vector<64x64xf32> to vector<64xf32>
    %161 = vector.shape_cast %160 : vector<64xf32> to vector<64x1xf32>
    %cst_75 = arith.constant 1.250000e+00 : f32
    %162 = vector.broadcast %cst_75 : f32 to vector<64x1xf32>
    %163 = arith.mulf %162, %124 : vector<64x1xf32>
    %164 = arith.addf %161, %163 : vector<64x1xf32>
    %c0_76 = arith.constant 0 : index
    %c0_77 = arith.constant 0 : index
    %165 = vector.load %arg16[%c0_76, %c0_77] : memref<64x1xf32, #tpu.memory_space<vmem>>, vector<64x1xf32>
    tpu.vector_store %arg16[%c0_76, %c0_77], %164 {strides = array<i32>} : memref<64x1xf32, #tpu.memory_space<vmem>>, vector<64x1xf32>,
    return
  }
  func.func @transform_0(%arg0: i32) -> (i32, i32) {
    %c0_i32 = arith.constant 0 : i32
    %c0_i32_0 = arith.constant 0 : i32
    return %arg0, %c0_i32 : i32, i32
  }
  func.func @transform_1(%arg0: i32) -> (i32, i32) {
    %c0_i32 = arith.constant 0 : i32
    %c0_i32_0 = arith.constant 0 : i32
    %c0_i32_1 = arith.constant 0 : i32
    return %c0_i32, %c0_i32_0 : i32, i32
  }
  func.func @transform_2(%arg0: i32) -> (i32, i32) {
    %c0_i32 = arith.constant 0 : i32
    %c0_i32_0 = arith.constant 0 : i32
    %c0_i32_1 = arith.constant 0 : i32
    return %c0_i32, %c0_i32_0 : i32, i32
  }
  func.func @transform_3(%arg0: i32) -> (i32, i32) {
    %c0_i32 = arith.constant 0 : i32
    %c0_i32_0 = arith.constant 0 : i32
    %c0_i32_1 = arith.constant 0 : i32
    return %c0_i32, %c0_i32_0 : i32, i32
  }
  func.func @transform_4(%arg0: i32) -> (i32, i32) {
    %c0_i32 = arith.constant 0 : i32
    %c0_i32_0 = arith.constant 0 : i32
    %c0_i32_1 = arith.constant 0 : i32
    return %c0_i32, %c0_i32_0 : i32, i32
  }
  func.func @transform_5(%arg0: i32) -> (i32, i32) {
    %c0_i32 = arith.constant 0 : i32
    %c0_i32_0 = arith.constant 0 : i32
    %c0_i32_1 = arith.constant 0 : i32
    return %c0_i32, %c0_i32_0 : i32, i32
  }
  func.func @transform_6(%arg0: i32) -> (i32, i32) {
    %c0_i32 = arith.constant 0 : i32
    %c0_i32_0 = arith.constant 0 : i32
    %c0_i32_1 = arith.constant 0 : i32
    return %c0_i32, %c0_i32_0 : i32, i32
  }
  func.func @transform_7(%arg0: i32) -> (i32, i32, i32) {
    %c0_i32 = arith.constant 0 : i32
    %c0_i32_0 = arith.constant 0 : i32
    %c0_i32_1 = arith.constant 0 : i32
    %c0_i32_2 = arith.constant 0 : i32
    return %c0_i32, %c0_i32_0, %c0_i32_1 : i32, i32, i32
  }
  func.func @transform_8(%arg0: i32) -> (i32, i32, i32) {
    %c0_i32 = arith.constant 0 : i32
    %c0_i32_0 = arith.constant 0 : i32
    %c0_i32_1 = arith.constant 0 : i32
    %c0_i32_2 = arith.constant 0 : i32
    return %c0_i32, %c0_i32_0, %c0_i32_1 : i32, i32, i32
  }
  func.func @transform_9(%arg0: i32) -> (i32, i32) {
    %c0_i32 = arith.constant 0 : i32
    %c0_i32_0 = arith.constant 0 : i32
    %c0_i32_1 = arith.constant 0 : i32
    return %c0_i32, %c0_i32_0 : i32, i32
  }
  func.func @transform_10(%arg0: i32) -> (i32, i32) {
    %c0_i32 = arith.constant 0 : i32
    %c0_i32_0 = arith.constant 0 : i32
    %c0_i32_1 = arith.constant 0 : i32
    return %c0_i32, %c0_i32_0 : i32, i32
  }
  func.func @transform_11(%arg0: i32) -> (i32, i32) {
    %c0_i32 = arith.constant 0 : i32
    %c0_i32_0 = arith.constant 0 : i32
    %c0_i32_1 = arith.constant 0 : i32
    return %c0_i32, %c0_i32_0 : i32, i32
  }
  func.func @transform_12(%arg0: i32) -> (i32, i32) {
    %c0_i32 = arith.constant 0 : i32
    %c0_i32_0 = arith.constant 0 : i32
    %c0_i32_1 = arith.constant 0 : i32
    return %c0_i32, %c0_i32_0 : i32, i32
  }
  func.func @transform_13(%arg0: i32) -> (i32, i32) {
    %c0_i32 = arith.constant 0 : i32
    %c0_i32_0 = arith.constant 0 : i32
    %c0_i32_1 = arith.constant 0 : i32
    return %c0_i32, %c0_i32_0 : i32, i32
  }
  func.func @transform_14(%arg0: i32) -> (i32, i32) {
    %c0_i32 = arith.constant 0 : i32
    %c0_i32_0 = arith.constant 0 : i32
    %c0_i32_1 = arith.constant 0 : i32
    return %c0_i32, %c0_i32_0 : i32, i32
  }
  func.func @transform_15(%arg0: i32) -> (i32, i32) {
    %c0_i32 = arith.constant 0 : i32
    %c0_i32_0 = arith.constant 0 : i32
    return %arg0, %c0_i32 : i32, i32
  }
  func.func @transform_16(%arg0: i32) -> (i32, i32) {
    %c0_i32 = arith.constant 0 : i32
    %c0_i32_0 = arith.constant 0 : i32
    return %arg0, %c0_i32 : i32, i32
  }
}

</mosaic_0001>

<llo_original>
// kernel: tpu_custom_call.1
$region0: #{tpu_custom_call.1}
  #allocation0 [shape = 'u32[]', space=smem, size = 0x4, offset = 0x4, fixed_abs, tag = 'smem constant byte address 0x4 - core index']
  #allocation1 [shape = 'u32[144,128]{1,0:T(1,128)}', space=vmem, size = 0x12000, scoped, tag = 'internal scratch']
  %s0 = inlined_call_operand.vmem [shape: f32[64,64], index: 0, kind: input, shape index: {}]
  %s1 = inlined_call_operand.vmem [shape: bf16[64,48], index: 1, kind: input, shape index: {}]
  %s2 = inlined_call_operand.vmem [shape: f32[1,48], index: 2, kind: input, shape index: {}]
  %s3 = inlined_call_operand.vmem [shape: bf16[48,32], index: 3, kind: input, shape index: {}]
  %s4 = inlined_call_operand.vmem [shape: f32[1,32], index: 4, kind: input, shape index: {}]
  %s5 = inlined_call_operand.vmem [shape: bf16[32,32], index: 5, kind: input, shape index: {}]
  %s6 = inlined_call_operand.vmem [shape: f32[1,32], index: 6, kind: input, shape index: {}]
  %s7 = inlined_call_operand.vmem [shape: f32[3,64,32], index: 7, kind: input, shape index: {}]
  %s8 = inlined_call_operand.vmem [shape: f32[3,1,64], index: 8, kind: input, shape index: {}]
  %s9 = inlined_call_operand.vmem [shape: bf16[32,48], index: 9, kind: input, shape index: {}]
  %s10 = inlined_call_operand.vmem [shape: f32[1,48], index: 10, kind: input, shape index: {}]
  %s11 = inlined_call_operand.vmem [shape: bf16[48,32], index: 11, kind: input, shape index: {}]
  %s12 = inlined_call_operand.vmem [shape: f32[1,32], index: 12, kind: input, shape index: {}]
  %s13 = inlined_call_operand.vmem [shape: bf16[32,64], index: 13, kind: input, shape index: {}]
  %s14 = inlined_call_operand.vmem [shape: f32[1,64], index: 14, kind: input, shape index: {}]
  %s15 = inlined_call_operand.vmem [shape: f32[64,1], index: 15, kind: output, shape index: {0}]
  %s16 = inlined_call_operand.vmem [shape: s32[64,3], index: 16, kind: output, shape index: {1}]
  %17 = xla_tuple %s15, %s16
  %s18 = sld [smem:[#allocation0]]
  $region78: #{tpu_custom_call.1} parent=0
    _
  %s20 = ssub.s32 1, %s18
  %s21 = scalar_select 0, %s20, %s18
  // Predicated region
  $region2: #{tpu_custom_call.1} parent=0 // pred_check
    _
  $region3: #{tpu_custom_call.1} parent=0 // pred_check_branch
    %23 = sbr.rel (0) target = $region5
  $region4: #{tpu_custom_call.1} parent=0 // pred_region
    _
  $region5: #{tpu_custom_call.1} parent=0 // pred_fallthru
    _
  // Predicated region
  $region6: #{tpu_custom_call.1} parent=0 // pred_check
    _
  $region7: #{tpu_custom_call.1} parent=0 // pred_check_branch
    %25 = sbr.rel (0) target = $region9
  $region8: #{tpu_custom_call.1} parent=0 // pred_region
    _
  $region9: #{tpu_custom_call.1} parent=0 // pred_fallthru
    _
  // Predicated region
  $region10: #{tpu_custom_call.1} parent=0 // pred_check
    _
  $region11: #{tpu_custom_call.1} parent=0 // pred_check_branch
    %27 = sbr.rel (0) target = $region13
  $region12: #{tpu_custom_call.1} parent=0 // pred_region
    _
  $region13: #{tpu_custom_call.1} parent=0 // pred_fallthru
    _
  // Predicated region
  $region14: #{tpu_custom_call.1} parent=0 // pred_check
    _
  $region15: #{tpu_custom_call.1} parent=0 // pred_check_branch
    %29 = sbr.rel (0) target = $region17
  $region16: #{tpu_custom_call.1} parent=0 // pred_region
    _
  $region17: #{tpu_custom_call.1} parent=0 // pred_fallthru
    _
  // Predicated region
  $region18: #{tpu_custom_call.1} parent=0 // pred_check
    _
  $region19: #{tpu_custom_call.1} parent=0 // pred_check_branch
    %31 = sbr.rel (0) target = $region21
  $region20: #{tpu_custom_call.1} parent=0 // pred_region
    _
  $region21: #{tpu_custom_call.1} parent=0 // pred_fallthru
    _
  // Predicated region
  $region22: #{tpu_custom_call.1} parent=0 // pred_check
    _
  $region23: #{tpu_custom_call.1} parent=0 // pred_check_branch
    %33 = sbr.rel (0) target = $region25
  $region24: #{tpu_custom_call.1} parent=0 // pred_region
    _
  $region25: #{tpu_custom_call.1} parent=0 // pred_fallthru
    _
  // Predicated region
  $region26: #{tpu_custom_call.1} parent=0 // pred_check
    _
  $region27: #{tpu_custom_call.1} parent=0 // pred_check_branch
    %35 = sbr.rel (0) target = $region29
  $region28: #{tpu_custom_call.1} parent=0 // pred_region
    _
  $region29: #{tpu_custom_call.1} parent=0 // pred_fallthru
    _
  // Predicated region
  $region30: #{tpu_custom_call.1} parent=0 // pred_check
    _
  $region31: #{tpu_custom_call.1} parent=0 // pred_check_branch
    %37 = sbr.rel (0) target = $region33
  $region32: #{tpu_custom_call.1} parent=0 // pred_region
    _
  $region33: #{tpu_custom_call.1} parent=0 // pred_fallthru
    _
  // Predicated region
  $region34: #{tpu_custom_call.1} parent=0 // pred_check
    _
  $region35: #{tpu_custom_call.1} parent=0 // pred_check_branch
    %39 = sbr.rel (0) target = $region37
  $region36: #{tpu_custom_call.1} parent=0 // pred_region
    _
  $region37: #{tpu_custom_call.1} parent=0 // pred_fallthru
    _
  // Predicated region
  $region38: #{tpu_custom_call.1} parent=0 // pred_check
    _
  $region39: #{tpu_custom_call.1} parent=0 // pred_check_branch
    %41 = sbr.rel (0) target = $region41
  $region40: #{tpu_custom_call.1} parent=0 // pred_region
    _
  $region41: #{tpu_custom_call.1} parent=0 // pred_fallthru
    _
  // Predicated region
  $region42: #{tpu_custom_call.1} parent=0 // pred_check
    _
  $region43: #{tpu_custom_call.1} parent=0 // pred_check_branch
    %43 = sbr.rel (0) target = $region45
  $region44: #{tpu_custom_call.1} parent=0 // pred_region
    _
  $region45: #{tpu_custom_call.1} parent=0 // pred_fallthru
    _
  // Predicated region
  $region46: #{tpu_custom_call.1} parent=0 // pred_check
    _
  $region47: #{tpu_custom_call.1} parent=0 // pred_check_branch
    %45 = sbr.rel (0) target = $region49
  $region48: #{tpu_custom_call.1} parent=0 // pred_region
    _
  $region49: #{tpu_custom_call.1} parent=0 // pred_fallthru
    _
  // Predicated region
  $region50: #{tpu_custom_call.1} parent=0 // pred_check
    _
  $region51: #{tpu_custom_call.1} parent=0 // pred_check_branch
    %47 = sbr.rel (0) target = $region53
  $region52: #{tpu_custom_call.1} parent=0 // pred_region
    _
  $region53: #{tpu_custom_call.1} parent=0 // pred_fallthru
    _
  // Predicated region
  $region54: #{tpu_custom_call.1} parent=0 // pred_check
    _
  $region55: #{tpu_custom_call.1} parent=0 // pred_check_branch
    %49 = sbr.rel (0) target = $region57
  $region56: #{tpu_custom_call.1} parent=0 // pred_region
    _
  $region57: #{tpu_custom_call.1} parent=0 // pred_fallthru
    _
  // Predicated region
  $region58: #{tpu_custom_call.1} parent=0 // pred_check
    _
  $region59: #{tpu_custom_call.1} parent=0 // pred_check_branch
    %51 = sbr.rel (0) target = $region61
  $region60: #{tpu_custom_call.1} parent=0 // pred_region
    _
  $region61: #{tpu_custom_call.1} parent=0 // pred_fallthru
    _
  %v53 = vld [vmem:[%s0] sm:$0xff]
  %v54 = vld [vmem:[%s0 + $0x8] sm:$0xff]
  %v55 = vld [vmem:[%s0 + $0x10] sm:$0xff]
  %v56 = vld [vmem:[%s0 + $0x18] sm:$0xff]
  %v57 = vld [vmem:[%s0 + $0x20] sm:$0xff]
  %v58 = vld [vmem:[%s0 + $0x28] sm:$0xff]
  %v59 = vld [vmem:[%s0 + $0x30] sm:$0xff]
  %v60 = vld [vmem:[%s0 + $0x38] sm:$0xff]
  %v61 = vpack.c.bf16 %v54, %v53
  %v62 = vpack.c.bf16 %v56, %v55
  %v63 = vpack.c.bf16 %v58, %v57
  %v64 = vpack.c.bf16 %v60, %v59
  %v65 = vld [vmem:[%s1] sm:$0xf]
  %v66 = vld [vmem:[%s1 + $0x4] sm:$0xf]
  %v67 = vld [vmem:[%s1 + $0x8] sm:$0xf]
  %v68 = vld [vmem:[%s1 + $0xc] sm:$0xf]
  %v69 = vld [vmem:[%s1 + $0x10] sm:$0xf]
  %v70 = vld [vmem:[%s1 + $0x14] sm:$0xf]
  %v71 = vld [vmem:[%s1 + $0x18] sm:$0xf]
  %v72 = vld [vmem:[%s1 + $0x1c] sm:$0xf]
  %v73 = vld [vmem:[%s2] sm:$0x1]
  %v75 = vlaneseq
  %v76 = vshrl.u32 %v75, 7
  %v77 = vsub.s32 0, %v76
  %v78 = vrot.slane %v73, %v77
  %v88 = vunpack.c.l.b16 %v65
  %v89 = vunpack.c.l.b16 %v66
  %v90 = vunpack.c.l.b16 %v67
  %v91 = vunpack.c.l.b16 %v68
  %v92 = vunpack.c.l.b16 %v69
  %v93 = vunpack.c.l.b16 %v70
  %v94 = vunpack.c.l.b16 %v71
  %v95 = vunpack.c.l.b16 %v72
  %v96 = vpack.c.b16 %v89, %v88
  %v97 = vpack.c.b16 %v91, %v90
  %v98 = vpack.c.b16 %v93, %v92
  %v99 = vpack.c.b16 %v95, %v94
  %vm104 = vcmask 523264
  %v106 = vsel %vm104, %v61, 0
  %v109 = vsel %vm104, %v62, 0
  %v112 = vsel %vm104, %v63, 0
  %v115 = vsel %vm104, %v64, 0
  %117 = vmatprep.subr.bf16.mxu0 0
  %118 = vmatpush1.bf16.msra.mxu0 0
  %119 = vmatprep.subr.bf16.mxu0 0
  %120 = vmatpush1.bf16.msra.mxu0 0
  %121 = vmatprep.subr.bf16.mxu0 0
  %122 = vmatpush1.bf16.msra.mxu0 0
  %123 = vmatprep.subr.bf16.mxu0 0
  %124 = vmatpush1.bf16.msra.mxu0 0
  %125 = vmatprep.subr.bf16.mxu0 0
  %126 = vmatpush1.bf16.msra.mxu0 %v99
  %127 = vmatprep.subr.bf16.mxu0 0
  %128 = vmatpush1.bf16.msra.mxu0 %v98
  %129 = vmatprep.subr.bf16.mxu0 0
  %130 = vmatpush1.bf16.msra.mxu0 %v97
  %131 = vmatprep.subr.bf16.mxu0 0
  %132 = vmatpush1.bf16.msra.mxu0 %v96
  %133 = vmatprep.subr.bf16.mxu0 0
  %134 = vmatpush2.bf16.msra.mxu0 0
  %135 = vmatprep.subr.bf16.mxu0 0
  %136 = vmatpush2.bf16.msra.mxu0 0
  %137 = vmatprep.subr.bf16.mxu0 0
  %138 = vmatpush2.bf16.msra.mxu0 0
  %139 = vmatprep.subr.bf16.mxu0 0
  %140 = vmatpush2.bf16.msra.mxu0 0
  %141 = vmatprep.subr.bf16.mxu0 0
  %142 = vmatpush2.bf16.msra.mxu0 0
  %143 = vmatprep.subr.bf16.mxu0 0
  %144 = vmatpush2.bf16.msra.mxu0 0
  %145 = vmatprep.subr.bf16.mxu0 0
  %146 = vmatpush2.bf16.msra.mxu0 0
  %147 = vmatprep.subr.bf16.mxu0 0
  %148 = vmatpush2.bf16.msra.mxu0 0
  %149 = vmatprep.mubr.bf16.mxu0 0
  %150 = vmatmul.mubr.bf16.gmra.mxu0 %v106
  %v151 = vpop.f32.mrf.mxu0
  %v152 = vadd.f32 %v78, %v151
  %v153 = vpop.f32.mrf.mxu0
  %v154 = vpop.f32.mrf.mxu0
  %v155 = vadd.f32 %v78, %v154
  %v156 = vpop.f32.mrf.mxu0
  %157 = vmatprep.mubr.bf16.mxu0 0
  %158 = vmatmul.mubr.bf16.gmra.mxu0 %v109
  %v159 = vpop.f32.mrf.mxu0
  %v160 = vadd.f32 %v78, %v159
  %v161 = vpop.f32.mrf.mxu0
  %v162 = vpop.f32.mrf.mxu0
  %v163 = vadd.f32 %v78, %v162
  %v164 = vpop.f32.mrf.mxu0
  %165 = vmatprep.mubr.bf16.mxu0 0
  %166 = vmatmul.mubr.bf16.gmra.mxu0 %v112
  %v167 = vpop.f32.mrf.mxu0
  %v168 = vadd.f32 %v78, %v167
  %v169 = vpop.f32.mrf.mxu0
  %v170 = vpop.f32.mrf.mxu0
  %v171 = vadd.f32 %v78, %v170
  %v172 = vpop.f32.mrf.mxu0
  %173 = vmatprep.mubr.bf16.mxu0 0
  %174 = vmatmul.mubr.bf16.gmra.mxu0 %v115
  %v175 = vpop.f32.mrf.mxu0
  %v176 = vadd.f32 %v78, %v175
  %v177 = vpop.f32.mrf.mxu0
  %v178 = vpop.f32.mrf.mxu0
  %v179 = vadd.f32 %v78, %v178
  %v180 = vpop.f32.mrf.mxu0
  %181 = vdwg.mxu0
  %v182 = vxor.u32 %v152, 2147483648
  %v183 = vxor.u32 %v155, 2147483648
  %v184 = vxor.u32 %v160, 2147483648
  %v185 = vxor.u32 %v163, 2147483648
  %v186 = vxor.u32 %v168, 2147483648
  %v187 = vxor.u32 %v171, 2147483648
  %v188 = vxor.u32 %v176, 2147483648
  %v189 = vxor.u32 %v179, 2147483648
  %v190 = vmul.f32 %v182, 1.442695
  %v191 = vpow.pop %v190
  %v192 = vmul.f32 %v183, 1.442695
  %v193 = vpow.pop %v192
  %v194 = vmul.f32 %v184, 1.442695
  %v195 = vpow.pop %v194
  %v196 = vmul.f32 %v185, 1.442695
  %v197 = vpow.pop %v196
  %v198 = vmul.f32 %v186, 1.442695
  %v199 = vpow.pop %v198
  %v200 = vmul.f32 %v187, 1.442695
  %v201 = vpow.pop %v200
  %v202 = vmul.f32 %v188, 1.442695
  %v203 = vpow.pop %v202
  %v204 = vmul.f32 %v189, 1.442695
  %v205 = vpow.pop %v204
  %v206 = vadd.f32 %v191, 1.0
  %v207 = vadd.f32 %v193, 1.0
  %v208 = vadd.f32 %v195, 1.0
  %v209 = vadd.f32 %v197, 1.0
  %v210 = vadd.f32 %v199, 1.0
  %v211 = vadd.f32 %v201, 1.0
  %v212 = vadd.f32 %v203, 1.0
  %v213 = vadd.f32 %v205, 1.0
  %v214 = vrcp.pop %v206
  %v215 = vmul.f32 1.0, %v214
  %v216 = vrcp.pop %v207
  %v217 = vmul.f32 1.0, %v216
  %v218 = vrcp.pop %v208
  %v219 = vmul.f32 1.0, %v218
  %v220 = vrcp.pop %v209
  %v221 = vmul.f32 1.0, %v220
  %v222 = vrcp.pop %v210
  %v223 = vmul.f32 1.0, %v222
  %v224 = vrcp.pop %v211
  %v225 = vmul.f32 1.0, %v224
  %v226 = vrcp.pop %v212
  %v227 = vmul.f32 1.0, %v226
  %v228 = vrcp.pop %v213
  %v229 = vmul.f32 1.0, %v228
  %v230 = vmul.f32 %v152, %v215
  %v231 = vmul.f32 %v155, %v217
  %v232 = vmul.f32 %v160, %v219
  %v233 = vmul.f32 %v163, %v221
  %v234 = vmul.f32 %v168, %v223
  %v235 = vmul.f32 %v171, %v225
  %v236 = vmul.f32 %v176, %v227
  %v237 = vmul.f32 %v179, %v229
  %v238 = vpack.c.bf16 %v231, %v230
  %v239 = vpack.c.bf16 %v233, %v232
  %v240 = vpack.c.bf16 %v235, %v234
  %v241 = vpack.c.bf16 %v237, %v236
  %v242 = vld [vmem:[%s3] sm:$0xf]
  %v243 = vld [vmem:[%s3 + $0x4] sm:$0xf]
  %v244 = vld [vmem:[%s3 + $0x8] sm:$0xf]
  %v245 = vld [vmem:[%s3 + $0xc] sm:$0xf]
  %v246 = vld [vmem:[%s3 + $0x10] sm:$0xf]
  %v247 = vld [vmem:[%s3 + $0x14] sm:$0xf]
  %v248 = vld [vmem:[%s4] sm:$0x1]
  %v250 = vlaneseq
  %v251 = vshrl.u32 %v250, 7
  %v252 = vsub.s32 0, %v251
  %v253 = vrot.slane %v248, %v252
  %v261 = vunpack.c.l.b16 %v242
  %v262 = vunpack.c.l.b16 %v243
  %v263 = vunpack.c.l.b16 %v244
  %v264 = vunpack.c.l.b16 %v245
  %v265 = vunpack.c.l.b16 %v246
  %v266 = vunpack.c.l.b16 %v247
  %v267 = vpack.c.b16 %v262, %v261
  %v268 = vpack.c.b16 %v264, %v263
  %v269 = vpack.c.b16 %v266, %v265
  %vm273 = vcmask 392192
  %v275 = vsel %vm273, %v238, 0
  %v278 = vsel %vm273, %v239, 0
  %v281 = vsel %vm273, %v240, 0
  %v284 = vsel %vm273, %v241, 0
  %286 = vmatprep.subr.bf16.mxu0 0
  %287 = vmatpush1.bf16.msra.mxu0 0
  %288 = vmatprep.subr.bf16.mxu0 0
  %289 = vmatpush1.bf16.msra.mxu0 0
  %290 = vmatprep.subr.bf16.mxu0 0
  %291 = vmatpush1.bf16.msra.mxu0 0
  %292 = vmatprep.subr.bf16.mxu0 0
  %293 = vmatpush1.bf16.msra.mxu0 0
  %294 = vmatprep.subr.bf16.mxu0 0
  %295 = vmatpush1.bf16.msra.mxu0 0
  %296 = vmatprep.subr.bf16.mxu0 0
  %297 = vmatpush1.bf16.msra.mxu0 %v269
  %298 = vmatprep.subr.bf16.mxu0 0
  %299 = vmatpush1.bf16.msra.mxu0 %v268
  %300 = vmatprep.subr.bf16.mxu0 0
  %301 = vmatpush1.bf16.msra.mxu0 %v267
  %302 = vmatprep.subr.bf16.mxu0 0
  %303 = vmatpush2.bf16.msra.mxu0 0
  %304 = vmatprep.subr.bf16.mxu0 0
  %305 = vmatpush2.bf16.msra.mxu0 0
  %306 = vmatprep.subr.bf16.mxu0 0
  %307 = vmatpush2.bf16.msra.mxu0 0
  %308 = vmatprep.subr.bf16.mxu0 0
  %309 = vmatpush2.bf16.msra.mxu0 0
  %310 = vmatprep.subr.bf16.mxu0 0
  %311 = vmatpush2.bf16.msra.mxu0 0
  %312 = vmatprep.subr.bf16.mxu0 0
  %313 = vmatpush2.bf16.msra.mxu0 0
  %314 = vmatprep.subr.bf16.mxu0 0
  %315 = vmatpush2.bf16.msra.mxu0 0
  %316 = vmatprep.subr.bf16.mxu0 0
  %317 = vmatpush2.bf16.msra.mxu0 0
  %318 = vmatprep.mubr.bf16.mxu0 0
  %319 = vmatmul.mubr.bf16.gmra.mxu0 %v275
  %v320 = vpop.f32.mrf.mxu0
  %v321 = vadd.f32 %v253, %v320
  %v322 = vpop.f32.mrf.mxu0
  %v323 = vpop.f32.mrf.mxu0
  %v324 = vadd.f32 %v253, %v323
  %v325 = vpop.f32.mrf.mxu0
  %326 = vmatprep.mubr.bf16.mxu0 0
  %327 = vmatmul.mubr.bf16.gmra.mxu0 %v278
  %v328 = vpop.f32.mrf.mxu0
  %v329 = vadd.f32 %v253, %v328
  %v330 = vpop.f32.mrf.mxu0
  %v331 = vpop.f32.mrf.mxu0
  %v332 = vadd.f32 %v253, %v331
  %v333 = vpop.f32.mrf.mxu0
  %334 = vmatprep.mubr.bf16.mxu0 0
  %335 = vmatmul.mubr.bf16.gmra.mxu0 %v281
  %v336 = vpop.f32.mrf.mxu0
  %v337 = vadd.f32 %v253, %v336
  %v338 = vpop.f32.mrf.mxu0
  %v339 = vpop.f32.mrf.mxu0
  %v340 = vadd.f32 %v253, %v339
  %v341 = vpop.f32.mrf.mxu0
  %342 = vmatprep.mubr.bf16.mxu0 0
  %343 = vmatmul.mubr.bf16.gmra.mxu0 %v284
  %v344 = vpop.f32.mrf.mxu0
  %v345 = vadd.f32 %v253, %v344
  %v346 = vpop.f32.mrf.mxu0
  %v347 = vpop.f32.mrf.mxu0
  %v348 = vadd.f32 %v253, %v347
  %v349 = vpop.f32.mrf.mxu0
  %350 = vdwg.mxu0
  %v351 = vxor.u32 %v321, 2147483648
  %v352 = vxor.u32 %v324, 2147483648
  %v353 = vxor.u32 %v329, 2147483648
  %v354 = vxor.u32 %v332, 2147483648
  %v355 = vxor.u32 %v337, 2147483648
  %v356 = vxor.u32 %v340, 2147483648
  %v357 = vxor.u32 %v345, 2147483648
  %v358 = vxor.u32 %v348, 2147483648
  %v359 = vmul.f32 %v351, 1.442695
  %v360 = vpow.pop %v359
  %v361 = vmul.f32 %v352, 1.442695
  %v362 = vpow.pop %v361
  %v363 = vmul.f32 %v353, 1.442695
  %v364 = vpow.pop %v363
  %v365 = vmul.f32 %v354, 1.442695
  %v366 = vpow.pop %v365
  %v367 = vmul.f32 %v355, 1.442695
  %v368 = vpow.pop %v367
  %v369 = vmul.f32 %v356, 1.442695
  %v370 = vpow.pop %v369
  %v371 = vmul.f32 %v357, 1.442695
  %v372 = vpow.pop %v371
  %v373 = vmul.f32 %v358, 1.442695
  %v374 = vpow.pop %v373
  %v375 = vadd.f32 %v360, 1.0
  %v376 = vadd.f32 %v362, 1.0
  %v377 = vadd.f32 %v364, 1.0
  %v378 = vadd.f32 %v366, 1.0
  %v379 = vadd.f32 %v368, 1.0
  %v380 = vadd.f32 %v370, 1.0
  %v381 = vadd.f32 %v372, 1.0
  %v382 = vadd.f32 %v374, 1.0
  %v383 = vrcp.pop %v375
  %v384 = vmul.f32 1.0, %v383
  %v385 = vrcp.pop %v376
  %v386 = vmul.f32 1.0, %v385
  %v387 = vrcp.pop %v377
  %v388 = vmul.f32 1.0, %v387
  %v389 = vrcp.pop %v378
  %v390 = vmul.f32 1.0, %v389
  %v391 = vrcp.pop %v379
  %v392 = vmul.f32 1.0, %v391
  %v393 = vrcp.pop %v380
  %v394 = vmul.f32 1.0, %v393
  %v395 = vrcp.pop %v381
  %v396 = vmul.f32 1.0, %v395
  %v397 = vrcp.pop %v382
  %v398 = vmul.f32 1.0, %v397
  %v399 = vmul.f32 %v321, %v384
  %v400 = vmul.f32 %v324, %v386
  %v401 = vmul.f32 %v329, %v388
  %v402 = vmul.f32 %v332, %v390
  %v403 = vmul.f32 %v337, %v392
  %v404 = vmul.f32 %v340, %v394
  %v405 = vmul.f32 %v345, %v396
  %v406 = vmul.f32 %v348, %v398
  %v407 = vpack.c.bf16 %v400, %v399
  %v408 = vpack.c.bf16 %v402, %v401
  %v409 = vpack.c.bf16 %v404, %v403
  %v410 = vpack.c.bf16 %v406, %v405
  %v411 = vld [vmem:[%s5] sm:$0xf]
  %v412 = vld [vmem:[%s5 + $0x4] sm:$0xf]
  %v413 = vld [vmem:[%s5 + $0x8] sm:$0xf]
  %v414 = vld [vmem:[%s5 + $0xc] sm:$0xf]
  %v415 = vld [vmem:[%s6] sm:$0x1]
  %v417 = vlaneseq
  %v418 = vshrl.u32 %v417, 7
  %v419 = vsub.s32 0, %v418
  %v420 = vrot.slane %v415, %v419
  %v426 = vunpack.c.l.b16 %v411
  %v427 = vunpack.c.l.b16 %v412
  %v428 = vunpack.c.l.b16 %v413
  %v429 = vunpack.c.l.b16 %v414
  %v430 = vpack.c.b16 %v427, %v426
  %v431 = vpack.c.b16 %v429, %v428
  %vm434 = vcmask 261120
  %v436 = vsel %vm434, %v407, 0
  %v439 = vsel %vm434, %v408, 0
  %v442 = vsel %vm434, %v409, 0
  %v445 = vsel %vm434, %v410, 0
  %447 = vmatprep.subr.bf16.mxu0 0
  %448 = vmatpush1.bf16.msra.mxu0 0
  %449 = vmatprep.subr.bf16.mxu0 0
  %450 = vmatpush1.bf16.msra.mxu0 0
  %451 = vmatprep.subr.bf16.mxu0 0
  %452 = vmatpush1.bf16.msra.mxu0 0
  %453 = vmatprep.subr.bf16.mxu0 0
  %454 = vmatpush1.bf16.msra.mxu0 0
  %455 = vmatprep.subr.bf16.mxu0 0
  %456 = vmatpush1.bf16.msra.mxu0 0
  %457 = vmatprep.subr.bf16.mxu0 0
  %458 = vmatpush1.bf16.msra.mxu0 0
  %459 = vmatprep.subr.bf16.mxu0 0
  %460 = vmatpush1.bf16.msra.mxu0 %v431
  %461 = vmatprep.subr.bf16.mxu0 0
  %462 = vmatpush1.bf16.msra.mxu0 %v430
  %463 = vmatprep.subr.bf16.mxu0 0
  %464 = vmatpush2.bf16.msra.mxu0 0
  %465 = vmatprep.subr.bf16.mxu0 0
  %466 = vmatpush2.bf16.msra.mxu0 0
  %467 = vmatprep.subr.bf16.mxu0 0
  %468 = vmatpush2.bf16.msra.mxu0 0
  %469 = vmatprep.subr.bf16.mxu0 0
  %470 = vmatpush2.bf16.msra.mxu0 0
  %471 = vmatprep.subr.bf16.mxu0 0
  %472 = vmatpush2.bf16.msra.mxu0 0
  %473 = vmatprep.subr.bf16.mxu0 0
  %474 = vmatpush2.bf16.msra.mxu0 0
  %475 = vmatprep.subr.bf16.mxu0 0
  %476 = vmatpush2.bf16.msra.mxu0 0
  %477 = vmatprep.subr.bf16.mxu0 0
  %478 = vmatpush2.bf16.msra.mxu0 0
  %479 = vmatprep.mubr.bf16.mxu0 0
  %480 = vmatmul.mubr.bf16.gmra.mxu0 %v436
  %v481 = vpop.f32.mrf.mxu0
  %v482 = vadd.f32 %v420, %v481
  %v483 = vpop.f32.mrf.mxu0
  %v484 = vpop.f32.mrf.mxu0
  %v485 = vadd.f32 %v420, %v484
  %v486 = vpop.f32.mrf.mxu0
  %487 = vmatprep.mubr.bf16.mxu0 0
  %488 = vmatmul.mubr.bf16.gmra.mxu0 %v439
  %v489 = vpop.f32.mrf.mxu0
  %v490 = vadd.f32 %v420, %v489
  %v491 = vpop.f32.mrf.mxu0
  %v492 = vpop.f32.mrf.mxu0
  %v493 = vadd.f32 %v420, %v492
  %v494 = vpop.f32.mrf.mxu0
  %495 = vmatprep.mubr.bf16.mxu0 0
  %496 = vmatmul.mubr.bf16.gmra.mxu0 %v442
  %v497 = vpop.f32.mrf.mxu0
  %v498 = vadd.f32 %v420, %v497
  %v499 = vpop.f32.mrf.mxu0
  %v500 = vpop.f32.mrf.mxu0
  %v501 = vadd.f32 %v420, %v500
  %v502 = vpop.f32.mrf.mxu0
  %503 = vmatprep.mubr.bf16.mxu0 0
  %504 = vmatmul.mubr.bf16.gmra.mxu0 %v445
  %v505 = vpop.f32.mrf.mxu0
  %v506 = vadd.f32 %v420, %v505
  %v507 = vpop.f32.mrf.mxu0
  %v508 = vpop.f32.mrf.mxu0
  %v509 = vadd.f32 %v420, %v508
  %v510 = vpop.f32.mrf.mxu0
  %511 = vdwg.mxu0
  %v512 = vlaneseq
  %v513 = vand.u32 %v512, 127
  %v514 = vld [vmem:[%s7] sm:$0xff]
  %v515 = vld [vmem:[%s7 + $0x8] sm:$0xff]
  %v516 = vld [vmem:[%s7 + $0x10] sm:$0xff]
  %v517 = vld [vmem:[%s7 + $0x18] sm:$0xff]
  %v518 = vld [vmem:[%s7 + $0x20] sm:$0xff]
  %v519 = vld [vmem:[%s7 + $0x28] sm:$0xff]
  %v520 = vld [vmem:[%s7 + $0x30] sm:$0xff]
  %v521 = vld [vmem:[%s7 + $0x38] sm:$0xff]
  %v522 = vpack.c.bf16 %v485, %v482
  %v523 = vpack.c.bf16 %v493, %v490
  %v524 = vpack.c.bf16 %v501, %v498
  %v525 = vpack.c.bf16 %v509, %v506
  %v526 = vpack.c.bf16 %v515, %v514
  %v527 = vpack.c.bf16 %v517, %v516
  %v528 = vpack.c.bf16 %v519, %v518
  %v529 = vpack.c.bf16 %v521, %v520
  %v531 = vsel %vm434, %v522, 0
  %v534 = vsel %vm434, %v523, 0
  %v537 = vsel %vm434, %v524, 0
  %v540 = vsel %vm434, %v525, 0
  %v543 = vsel %vm434, %v526, 0
  %v546 = vsel %vm434, %v527, 0
  %v549 = vsel %vm434, %v528, 0
  %v552 = vsel %vm434, %v529, 0
  %554 = vmatprep.subr.bf16.mxu0 0
  %555 = vmatpush1.bf16.xpose.msra.mxu0 0
  %556 = vmatprep.subr.bf16.mxu0 0
  %557 = vmatpush1.bf16.xpose.msra.mxu0 0
  %558 = vmatprep.subr.bf16.mxu0 0
  %559 = vmatpush1.bf16.xpose.msra.mxu0 0
  %560 = vmatprep.subr.bf16.mxu0 0
  %561 = vmatpush1.bf16.xpose.msra.mxu0 0
  %562 = vmatprep.subr.bf16.mxu0 0
  %563 = vmatpush1.bf16.xpose.msra.mxu0 %v552
  %564 = vmatprep.subr.bf16.mxu0 0
  %565 = vmatpush1.bf16.xpose.msra.mxu0 %v549
  %566 = vmatprep.subr.bf16.mxu0 0
  %567 = vmatpush1.bf16.xpose.msra.mxu0 %v546
  %568 = vmatprep.subr.bf16.mxu0 0
  %569 = vmatpush1.bf16.xpose.msra.mxu0 %v543
  %570 = vmatprep.subr.bf16.mxu0 0
  %571 = vmatpush2.bf16.xpose.msra.mxu0 0
  %572 = vmatprep.subr.bf16.mxu0 0
  %573 = vmatpush2.bf16.xpose.msra.mxu0 0
  %574 = vmatprep.subr.bf16.mxu0 0
  %575 = vmatpush2.bf16.xpose.msra.mxu0 0
  %576 = vmatprep.subr.bf16.mxu0 0
  %577 = vmatpush2.bf16.xpose.msra.mxu0 0
  %578 = vmatprep.subr.bf16.mxu0 0
  %579 = vmatpush2.bf16.xpose.msra.mxu0 0
  %580 = vmatprep.subr.bf16.mxu0 0
  %581 = vmatpush2.bf16.xpose.msra.mxu0 0
  %582 = vmatprep.subr.bf16.mxu0 0
  %583 = vmatpush2.bf16.xpose.msra.mxu0 0
  %584 = vmatprep.subr.bf16.mxu0 0
  %585 = vmatpush2.bf16.xpose.msra.mxu0 0
  %586 = vmatprep.mubr.bf16.mxu0 0
  %587 = vmatmul.mubr.bf16.gmra.mxu0 %v531
  %v588 = vpop.f32.mrf.mxu0
  %v589 = vadd.f32 0.0, %v588
  %v590 = vpop.f32.mrf.mxu0
  %v591 = vpop.f32.mrf.mxu0
  %v592 = vadd.f32 0.0, %v591
  %v593 = vpop.f32.mrf.mxu0
  %594 = vmatprep.mubr.bf16.mxu0 0
  %595 = vmatmul.mubr.bf16.gmra.mxu0 %v534
  %v596 = vpop.f32.mrf.mxu0
  %v597 = vadd.f32 0.0, %v596
  %v598 = vpop.f32.mrf.mxu0
  %v599 = vpop.f32.mrf.mxu0
  %v600 = vadd.f32 0.0, %v599
  %v601 = vpop.f32.mrf.mxu0
  %602 = vmatprep.mubr.bf16.mxu0 0
  %603 = vmatmul.mubr.bf16.gmra.mxu0 %v537
  %v604 = vpop.f32.mrf.mxu0
  %v605 = vadd.f32 0.0, %v604
  %v606 = vpop.f32.mrf.mxu0
  %v607 = vpop.f32.mrf.mxu0
  %v608 = vadd.f32 0.0, %v607
  %v609 = vpop.f32.mrf.mxu0
  %610 = vmatprep.mubr.bf16.mxu0 0
  %611 = vmatmul.mubr.bf16.gmra.mxu0 %v540
  %v612 = vpop.f32.mrf.mxu0
  %v613 = vadd.f32 0.0, %v612
  %v614 = vpop.f32.mrf.mxu0
  %v615 = vpop.f32.mrf.mxu0
  %v616 = vadd.f32 0.0, %v615
  %v617 = vpop.f32.mrf.mxu0
  %618 = vdwg.mxu0
  %v619 = vld [vmem:[%s8] sm:$0x1]
  %v620 = vmul.f32 %v589, 2.0
  %v621 = vmul.f32 %v592, 2.0
  %v622 = vmul.f32 %v597, 2.0
  %v623 = vmul.f32 %v600, 2.0
  %v624 = vmul.f32 %v605, 2.0
  %v625 = vmul.f32 %v608, 2.0
  %v626 = vmul.f32 %v613, 2.0
  %v627 = vmul.f32 %v616, 2.0
  %v629 = vlaneseq
  %v630 = vshrl.u32 %v629, 7
  %v631 = vsub.s32 0, %v630
  %v632 = vrot.slane %v619, %v631
  %v634 = vsub.f32 %v632, %v620
  %v635 = vsub.f32 %v632, %v621
  %v636 = vsub.f32 %v632, %v622
  %v637 = vsub.f32 %v632, %v623
  %v638 = vsub.f32 %v632, %v624
  %v639 = vsub.f32 %v632, %v625
  %v640 = vsub.f32 %v632, %v626
  %v641 = vsub.f32 %v632, %v627
  %v642 = vsel %vm104, %v634, inf
  %643 = vmin.xlane.f32.xlu0 %v642
  %v644 = vpop.xlane.xlu0 %643
  %v645 = vsel %vm104, %v635, inf
  %646 = vmin.xlane.f32.xlu0 %v645
  %v647 = vpop.xlane.xlu0 %646
  %v648 = vsel %vm104, %v636, inf
  %649 = vmin.xlane.f32.xlu0 %v648
  %v650 = vpop.xlane.xlu0 %649
  %v651 = vsel %vm104, %v637, inf
  %652 = vmin.xlane.f32.xlu0 %v651
  %v653 = vpop.xlane.xlu0 %652
  %v654 = vsel %vm104, %v638, inf
  %655 = vmin.xlane.f32.xlu0 %v654
  %v656 = vpop.xlane.xlu0 %655
  %v657 = vsel %vm104, %v639, inf
  %658 = vmin.xlane.f32.xlu0 %v657
  %v659 = vpop.xlane.xlu0 %658
  %v660 = vsel %vm104, %v640, inf
  %661 = vmin.xlane.f32.xlu0 %v660
  %v662 = vpop.xlane.xlu0 %661
  %v663 = vsel %vm104, %v641, inf
  %664 = vmin.xlane.f32.xlu0 %v663
  %v665 = vpop.xlane.xlu0 %664
  %vm666 = vcmp.le.f32.partialorder %v634, %v644
  %vm667 = vcmp.le.f32.partialorder %v635, %v647
  %vm668 = vcmp.le.f32.partialorder %v636, %v650
  %vm669 = vcmp.le.f32.partialorder %v637, %v653
  %vm670 = vcmp.le.f32.partialorder %v638, %v656
  %vm671 = vcmp.le.f32.partialorder %v639, %v659
  %vm672 = vcmp.le.f32.partialorder %v640, %v662
  %vm673 = vcmp.le.f32.partialorder %v641, %v665
  %v674 = vsel %vm666, %v513, 64
  %v675 = vsel %vm667, %v513, 64
  %v676 = vsel %vm668, %v513, 64
  %v677 = vsel %vm669, %v513, 64
  %v678 = vsel %vm670, %v513, 64
  %v679 = vsel %vm671, %v513, 64
  %v680 = vsel %vm672, %v513, 64
  %v681 = vsel %vm673, %v513, 64
  %v682 = vsel %vm104, %v674, 2147483647
  %v683 = vand.u32 %v682, 65535
  %v684 = vshra.s32 %v682, 16
  %v685 = vcvt.s32.f32 %v683
  %v686 = vcvt.s32.f32 %v684
  %687 = vmin.xlane.f32.xlu0 %v686
  %v688 = vpop.xlane.xlu0 %687
  %vm689 = vcmp.eq.f32.partialorder %v686, %v688
  %v690 = vsel %vm689, %v685, inf
  %691 = vmin.xlane.f32.xlu0 %v690
  %v692 = vpop.xlane.xlu0 %691
  %v693 = vcvt.f32.s32 %v692
  %v694 = vcvt.f32.s32 %v688
  %v695 = vshll.u32 %v694, 16
  %v696 = vadd.s32 %v695, %v693
  %v697 = vsel %vm104, %v675, 2147483647
  %v698 = vand.u32 %v697, 65535
  %v699 = vshra.s32 %v697, 16
  %v700 = vcvt.s32.f32 %v698
  %v701 = vcvt.s32.f32 %v699
  %702 = vmin.xlane.f32.xlu0 %v701
  %v703 = vpop.xlane.xlu0 %702
  %vm704 = vcmp.eq.f32.partialorder %v701, %v703
  %v705 = vsel %vm704, %v700, inf
  %706 = vmin.xlane.f32.xlu0 %v705
  %v707 = vpop.xlane.xlu0 %706
  %v708 = vcvt.f32.s32 %v707
  %v709 = vcvt.f32.s32 %v703
  %v710 = vshll.u32 %v709, 16
  %v711 = vadd.s32 %v710, %v708
  %v712 = vsel %vm104, %v676, 2147483647
  %v713 = vand.u32 %v712, 65535
  %v714 = vshra.s32 %v712, 16
  %v715 = vcvt.s32.f32 %v713
  %v716 = vcvt.s32.f32 %v714
  %717 = vmin.xlane.f32.xlu0 %v716
  %v718 = vpop.xlane.xlu0 %717
  %vm719 = vcmp.eq.f32.partialorder %v716, %v718
  %v720 = vsel %vm719, %v715, inf
  %721 = vmin.xlane.f32.xlu0 %v720
  %v722 = vpop.xlane.xlu0 %721
  %v723 = vcvt.f32.s32 %v722
  %v724 = vcvt.f32.s32 %v718
  %v725 = vshll.u32 %v724, 16
  %v726 = vadd.s32 %v725, %v723
  %v727 = vsel %vm104, %v677, 2147483647
  %v728 = vand.u32 %v727, 65535
  %v729 = vshra.s32 %v727, 16
  %v730 = vcvt.s32.f32 %v728
  %v731 = vcvt.s32.f32 %v729
  %732 = vmin.xlane.f32.xlu0 %v731
  %v733 = vpop.xlane.xlu0 %732
  %vm734 = vcmp.eq.f32.partialorder %v731, %v733
  %v735 = vsel %vm734, %v730, inf
  %736 = vmin.xlane.f32.xlu0 %v735
  %v737 = vpop.xlane.xlu0 %736
  %v738 = vcvt.f32.s32 %v737
  %v739 = vcvt.f32.s32 %v733
  %v740 = vshll.u32 %v739, 16
  %v741 = vadd.s32 %v740, %v738
  %v742 = vsel %vm104, %v678, 2147483647
  %v743 = vand.u32 %v742, 65535
  %v744 = vshra.s32 %v742, 16
  %v745 = vcvt.s32.f32 %v743
  %v746 = vcvt.s32.f32 %v744
  %747 = vmin.xlane.f32.xlu0 %v746
  %v748 = vpop.xlane.xlu0 %747
  %vm749 = vcmp.eq.f32.partialorder %v746, %v748
  %v750 = vsel %vm749, %v745, inf
  %751 = vmin.xlane.f32.xlu0 %v750
  %v752 = vpop.xlane.xlu0 %751
  %v753 = vcvt.f32.s32 %v752
  %v754 = vcvt.f32.s32 %v748
  %v755 = vshll.u32 %v754, 16
  %v756 = vadd.s32 %v755, %v753
  %v757 = vsel %vm104, %v679, 2147483647
  %v758 = vand.u32 %v757, 65535
  %v759 = vshra.s32 %v757, 16
  %v760 = vcvt.s32.f32 %v758
  %v761 = vcvt.s32.f32 %v759
  %762 = vmin.xlane.f32.xlu0 %v761
  %v763 = vpop.xlane.xlu0 %762
  %vm764 = vcmp.eq.f32.partialorder %v761, %v763
  %v765 = vsel %vm764, %v760, inf
  %766 = vmin.xlane.f32.xlu0 %v765
  %v767 = vpop.xlane.xlu0 %766
  %v768 = vcvt.f32.s32 %v767
  %v769 = vcvt.f32.s32 %v763
  %v770 = vshll.u32 %v769, 16
  %v771 = vadd.s32 %v770, %v768
  %v772 = vsel %vm104, %v680, 2147483647
  %v773 = vand.u32 %v772, 65535
  %v774 = vshra.s32 %v772, 16
  %v775 = vcvt.s32.f32 %v773
  %v776 = vcvt.s32.f32 %v774
  %777 = vmin.xlane.f32.xlu0 %v776
  %v778 = vpop.xlane.xlu0 %777
  %vm779 = vcmp.eq.f32.partialorder %v776, %v778
  %v780 = vsel %vm779, %v775, inf
  %781 = vmin.xlane.f32.xlu0 %v780
  %v782 = vpop.xlane.xlu0 %781
  %v783 = vcvt.f32.s32 %v782
  %v784 = vcvt.f32.s32 %v778
  %v785 = vshll.u32 %v784, 16
  %v786 = vadd.s32 %v785, %v783
  %v787 = vsel %vm104, %v681, 2147483647
  %v788 = vand.u32 %v787, 65535
  %v789 = vshra.s32 %v787, 16
  %v790 = vcvt.s32.f32 %v788
  %v791 = vcvt.s32.f32 %v789
  %792 = vmin.xlane.f32.xlu0 %v791
  %v793 = vpop.xlane.xlu0 %792
  %vm794 = vcmp.eq.f32.partialorder %v791, %v793
  %v795 = vsel %vm794, %v790, inf
  %796 = vmin.xlane.f32.xlu0 %v795
  %v797 = vpop.xlane.xlu0 %796
  %v798 = vcvt.f32.s32 %v797
  %v799 = vcvt.f32.s32 %v793
  %v800 = vshll.u32 %v799, 16
  %v801 = vadd.s32 %v800, %v798
  %vm802 = vcmp.eq.s32.totalorder %v696, %v513
  %vm803 = vcmp.eq.s32.totalorder %v711, %v513
  %vm804 = vcmp.eq.s32.totalorder %v726, %v513
  %vm805 = vcmp.eq.s32.totalorder %v741, %v513
  %vm806 = vcmp.eq.s32.totalorder %v756, %v513
  %vm807 = vcmp.eq.s32.totalorder %v771, %v513
  %vm808 = vcmp.eq.s32.totalorder %v786, %v513
  %vm809 = vcmp.eq.s32.totalorder %v801, %v513
  %v810 = vsel %vm802, 1, 0
  %v811 = vsel %vm803, 1, 0
  %v812 = vsel %vm804, 1, 0
  %v813 = vsel %vm805, 1, 0
  %v814 = vsel %vm806, 1, 0
  %v815 = vsel %vm807, 1, 0
  %v816 = vsel %vm808, 1, 0
  %v817 = vsel %vm809, 1, 0
  %v818 = vcvt.s32.f32 %v810
  %v819 = vcvt.s32.f32 %v811
  %v820 = vcvt.s32.f32 %v812
  %v821 = vcvt.s32.f32 %v813
  %v822 = vcvt.s32.f32 %v814
  %v823 = vcvt.s32.f32 %v815
  %v824 = vcvt.s32.f32 %v816
  %v825 = vcvt.s32.f32 %v817
  %v827 = vsel %vm104, %v818, 0
  %v830 = vsel %vm104, %v819, 0
  %v833 = vsel %vm104, %v820, 0
  %v836 = vsel %vm104, %v821, 0
  %v839 = vsel %vm104, %v822, 0
  %v842 = vsel %vm104, %v823, 0
  %v845 = vsel %vm104, %v824, 0
  %v848 = vsel %vm104, %v825, 0
  %850 = vmatprep.subr.mxu0 0.0
  %851 = vmatpush1.msra.mxu0 0.0
  %852 = vmatprep.subr.mxu0 0.0
  %853 = vmatpush1.msra.mxu0 0.0
  %854 = vmatprep.subr.mxu0 0.0
  %855 = vmatpush1.msra.mxu0 0.0
  %856 = vmatprep.subr.mxu0 0.0
  %857 = vmatpush1.msra.mxu0 0.0
  %858 = vmatprep.subr.mxu0 0.0
  %859 = vmatpush1.msra.mxu0 0.0
  %860 = vmatprep.subr.mxu0 0.0
  %861 = vmatpush1.msra.mxu0 0.0
  %862 = vmatprep.subr.mxu0 0.0
  %863 = vmatpush1.msra.mxu0 0.0
  %864 = vmatprep.subr.mxu0 0.0
  %865 = vmatpush1.msra.mxu0 0.0
  %866 = vmatprep.subr.mxu0 0.0
  %867 = vmatpush1.msra.mxu0 %v521
  %868 = vmatprep.subr.mxu0 0.0
  %869 = vmatpush1.msra.mxu0 %v520
  %870 = vmatprep.subr.mxu0 0.0
  %871 = vmatpush1.msra.mxu0 %v519
  %872 = vmatprep.subr.mxu0 0.0
  %873 = vmatpush1.msra.mxu0 %v518
  %874 = vmatprep.subr.mxu0 0.0
  %875 = vmatpush1.msra.mxu0 %v517
  %876 = vmatprep.subr.mxu0 0.0
  %877 = vmatpush1.msra.mxu0 %v516
  %878 = vmatprep.subr.mxu0 0.0
  %879 = vmatpush1.msra.mxu0 %v515
  %880 = vmatprep.subr.mxu0 0.0
  %881 = vmatpush1.msra.mxu0 %v514
  %882 = vmatprep.subr.mxu0 0.0
  %883 = vmatpush2.msra.mxu0 0.0
  %884 = vmatprep.subr.mxu0 0.0
  %885 = vmatpush2.msra.mxu0 0.0
  %886 = vmatprep.subr.mxu0 0.0
  %887 = vmatpush2.msra.mxu0 0.0
  %888 = vmatprep.subr.mxu0 0.0
  %889 = vmatpush2.msra.mxu0 0.0
  %890 = vmatprep.subr.mxu0 0.0
  %891 = vmatpush2.msra.mxu0 0.0
  %892 = vmatprep.subr.mxu0 0.0
  %893 = vmatpush2.msra.mxu0 0.0
  %894 = vmatprep.subr.mxu0 0.0
  %895 = vmatpush2.msra.mxu0 0.0
  %896 = vmatprep.subr.mxu0 0.0
  %897 = vmatpush2.msra.mxu0 0.0
  %898 = vmatprep.subr.mxu0 0.0
  %899 = vmatpush2.msra.mxu0 0.0
  %900 = vmatprep.subr.mxu0 0.0
  %901 = vmatpush2.msra.mxu0 0.0
  %902 = vmatprep.subr.mxu0 0.0
  %903 = vmatpush2.msra.mxu0 0.0
  %904 = vmatprep.subr.mxu0 0.0
  %905 = vmatpush2.msra.mxu0 0.0
  %906 = vmatprep.subr.mxu0 0.0
  %907 = vmatpush2.msra.mxu0 0.0
  %908 = vmatprep.subr.mxu0 0.0
  %909 = vmatpush2.msra.mxu0 0.0
  %910 = vmatprep.subr.mxu0 0.0
  %911 = vmatpush2.msra.mxu0 0.0
  %912 = vmatprep.subr.mxu0 0.0
  %913 = vmatpush2.msra.mxu0 0.0
  %914 = vmatprep.mubr.f32.mxu0 0.0
  %915 = vmatmul.mubr.f32.gmra.mxu0 %v827
  %v916 = vpop.f32.mrf.mxu0
  %v917 = vadd.f32 0.0, %v916
  %v918 = vpop.f32.mrf.mxu0
  %919 = vmatprep.mubr.f32.mxu0 0.0
  %920 = vmatmul.mubr.f32.gmra.mxu0 %v830
  %v921 = vpop.f32.mrf.mxu0
  %v922 = vadd.f32 0.0, %v921
  %v923 = vpop.f32.mrf.mxu0
  %924 = vmatprep.mubr.f32.mxu0 0.0
  %925 = vmatmul.mubr.f32.gmra.mxu0 %v833
  %v926 = vpop.f32.mrf.mxu0
  %v927 = vadd.f32 0.0, %v926
  %v928 = vpop.f32.mrf.mxu0
  %929 = vmatprep.mubr.f32.mxu0 0.0
  %930 = vmatmul.mubr.f32.gmra.mxu0 %v836
  %v931 = vpop.f32.mrf.mxu0
  %v932 = vadd.f32 0.0, %v931
  %v933 = vpop.f32.mrf.mxu0
  %934 = vmatprep.mubr.f32.mxu0 0.0
  %935 = vmatmul.mubr.f32.gmra.mxu0 %v839
  %v936 = vpop.f32.mrf.mxu0
  %v937 = vadd.f32 0.0, %v936
  %v938 = vpop.f32.mrf.mxu0
  %939 = vmatprep.mubr.f32.mxu0 0.0
  %940 = vmatmul.mubr.f32.gmra.mxu0 %v842
  %v941 = vpop.f32.mrf.mxu0
  %v942 = vadd.f32 0.0, %v941
  %v943 = vpop.f32.mrf.mxu0
  %944 = vmatprep.mubr.f32.mxu0 0.0
  %945 = vmatmul.mubr.f32.gmra.mxu0 %v845
  %v946 = vpop.f32.mrf.mxu0
  %v947 = vadd.f32 0.0, %v946
  %v948 = vpop.f32.mrf.mxu0
  %949 = vmatprep.mubr.f32.mxu0 0.0
  %950 = vmatmul.mubr.f32.gmra.mxu0 %v848
  %v951 = vpop.f32.mrf.mxu0
  %v952 = vadd.f32 0.0, %v951
  %v953 = vpop.f32.mrf.mxu0
  %954 = vdwg.mxu0
  %v955 = vsub.f32 %v482, %v917
  %v956 = vsub.f32 %v485, %v922
  %v957 = vsub.f32 %v490, %v927
  %v958 = vsub.f32 %v493, %v932
  %v959 = vsub.f32 %v498, %v937
  %v960 = vsub.f32 %v501, %v942
  %v961 = vsub.f32 %v506, %v947
  %v962 = vsub.f32 %v509, %v952
  %v963 = vmul.f32 %v955, %v955
  %v964 = vmul.f32 %v956, %v956
  %v965 = vmul.f32 %v957, %v957
  %v966 = vmul.f32 %v958, %v958
  %v967 = vmul.f32 %v959, %v959
  %v968 = vmul.f32 %v960, %v960
  %v969 = vmul.f32 %v961, %v961
  %v970 = vmul.f32 %v962, %v962
  %v971 = vsel %vm434, %v963, 0.0
  %972 = vadd.xlane.f32.xlu0 %v971
  %v973 = vpop.xlane.xlu0 %972
  %v974 = vsel %vm434, %v964, 0.0
  %975 = vadd.xlane.f32.xlu0 %v974
  %v976 = vpop.xlane.xlu0 %975
  %v977 = vsel %vm434, %v965, 0.0
  %978 = vadd.xlane.f32.xlu0 %v977
  %v979 = vpop.xlane.xlu0 %978
  %v980 = vsel %vm434, %v966, 0.0
  %981 = vadd.xlane.f32.xlu0 %v980
  %v982 = vpop.xlane.xlu0 %981
  %v983 = vsel %vm434, %v967, 0.0
  %984 = vadd.xlane.f32.xlu0 %v983
  %v985 = vpop.xlane.xlu0 %984
  %v986 = vsel %vm434, %v968, 0.0
  %987 = vadd.xlane.f32.xlu0 %v986
  %v988 = vpop.xlane.xlu0 %987
  %v989 = vsel %vm434, %v969, 0.0
  %990 = vadd.xlane.f32.xlu0 %v989
  %v991 = vpop.xlane.xlu0 %990
  %v992 = vsel %vm434, %v970, 0.0
  %993 = vadd.xlane.f32.xlu0 %v992
  %v994 = vpop.xlane.xlu0 %993
  %v995 = vadd.f32 %v973, 0.0
  %v996 = vadd.f32 %v976, 0.0
  %v997 = vadd.f32 %v979, 0.0
  %v998 = vadd.f32 %v982, 0.0
  %v999 = vadd.f32 %v985, 0.0
  %v1000 = vadd.f32 %v988, 0.0
  %v1001 = vadd.f32 %v991, 0.0
  %v1002 = vadd.f32 %v994, 0.0
  %v1003 = vadd.f32 %v917, 0.0
  %v1004 = vadd.f32 %v922, 0.0
  %v1005 = vadd.f32 %v927, 0.0
  %v1006 = vadd.f32 %v932, 0.0
  %v1007 = vadd.f32 %v937, 0.0
  %v1008 = vadd.f32 %v942, 0.0
  %v1009 = vadd.f32 %v947, 0.0
  %v1010 = vadd.f32 %v952, 0.0
  %s1011 = scalar_lea.vmem %s7, 64
  %v1012 = vld [vmem:[%s1011] sm:$0xff]
  %v1013 = vld [vmem:[%s1011 + $0x8] sm:$0xff]
  %v1014 = vld [vmem:[%s1011 + $0x10] sm:$0xff]
  %v1015 = vld [vmem:[%s1011 + $0x18] sm:$0xff]
  %v1016 = vld [vmem:[%s1011 + $0x20] sm:$0xff]
  %v1017 = vld [vmem:[%s1011 + $0x28] sm:$0xff]
  %v1018 = vld [vmem:[%s1011 + $0x30] sm:$0xff]
  %v1019 = vld [vmem:[%s1011 + $0x38] sm:$0xff]
  %v1020 = vpack.c.bf16 %v956, %v955
  %v1021 = vpack.c.bf16 %v958, %v957
  %v1022 = vpack.c.bf16 %v960, %v959
  %v1023 = vpack.c.bf16 %v962, %v961
  %v1024 = vpack.c.bf16 %v1013, %v1012
  %v1025 = vpack.c.bf16 %v1015, %v1014
  %v1026 = vpack.c.bf16 %v1017, %v1016
  %v1027 = vpack.c.bf16 %v1019, %v1018
  %v1029 = vsel %vm434, %v1020, 0
  %v1032 = vsel %vm434, %v1021, 0
  %v1035 = vsel %vm434, %v1022, 0
  %v1038 = vsel %vm434, %v1023, 0
  %v1041 = vsel %vm434, %v1024, 0
  %v1044 = vsel %vm434, %v1025, 0
  %v1047 = vsel %vm434, %v1026, 0
  %v1050 = vsel %vm434, %v1027, 0
  %1052 = vmatprep.subr.bf16.mxu0 0
  %1053 = vmatpush1.bf16.xpose.msra.mxu0 0
  %1054 = vmatprep.subr.bf16.mxu0 0
  %1055 = vmatpush1.bf16.xpose.msra.mxu0 0
  %1056 = vmatprep.subr.bf16.mxu0 0
  %1057 = vmatpush1.bf16.xpose.msra.mxu0 0
  %1058 = vmatprep.subr.bf16.mxu0 0
  %1059 = vmatpush1.bf16.xpose.msra.mxu0 0
  %1060 = vmatprep.subr.bf16.mxu0 0
  %1061 = vmatpush1.bf16.xpose.msra.mxu0 %v1050
  %1062 = vmatprep.subr.bf16.mxu0 0
  %1063 = vmatpush1.bf16.xpose.msra.mxu0 %v1047
  %1064 = vmatprep.subr.bf16.mxu0 0
  %1065 = vmatpush1.bf16.xpose.msra.mxu0 %v1044
  %1066 = vmatprep.subr.bf16.mxu0 0
  %1067 = vmatpush1.bf16.xpose.msra.mxu0 %v1041
  %1068 = vmatprep.subr.bf16.mxu0 0
  %1069 = vmatpush2.bf16.xpose.msra.mxu0 0
  %1070 = vmatprep.subr.bf16.mxu0 0
  %1071 = vmatpush2.bf16.xpose.msra.mxu0 0
  %1072 = vmatprep.subr.bf16.mxu0 0
  %1073 = vmatpush2.bf16.xpose.msra.mxu0 0
  %1074 = vmatprep.subr.bf16.mxu0 0
  %1075 = vmatpush2.bf16.xpose.msra.mxu0 0
  %1076 = vmatprep.subr.bf16.mxu0 0
  %1077 = vmatpush2.bf16.xpose.msra.mxu0 0
  %1078 = vmatprep.subr.bf16.mxu0 0
  %1079 = vmatpush2.bf16.xpose.msra.mxu0 0
  %1080 = vmatprep.subr.bf16.mxu0 0
  %1081 = vmatpush2.bf16.xpose.msra.mxu0 0
  %1082 = vmatprep.subr.bf16.mxu0 0
  %1083 = vmatpush2.bf16.xpose.msra.mxu0 0
  %1084 = vmatprep.mubr.bf16.mxu0 0
  %1085 = vmatmul.mubr.bf16.gmra.mxu0 %v1029
  %v1086 = vpop.f32.mrf.mxu0
  %v1087 = vadd.f32 0.0, %v1086
  %v1088 = vpop.f32.mrf.mxu0
  %v1089 = vpop.f32.mrf.mxu0
  %v1090 = vadd.f32 0.0, %v1089
  %v1091 = vpop.f32.mrf.mxu0
  %1092 = vmatprep.mubr.bf16.mxu0 0
  %1093 = vmatmul.mubr.bf16.gmra.mxu0 %v1032
  %v1094 = vpop.f32.mrf.mxu0
  %v1095 = vadd.f32 0.0, %v1094
  %v1096 = vpop.f32.mrf.mxu0
  %v1097 = vpop.f32.mrf.mxu0
  %v1098 = vadd.f32 0.0, %v1097
  %v1099 = vpop.f32.mrf.mxu0
  %1100 = vmatprep.mubr.bf16.mxu0 0
  %1101 = vmatmul.mubr.bf16.gmra.mxu0 %v1035
  %v1102 = vpop.f32.mrf.mxu0
  %v1103 = vadd.f32 0.0, %v1102
  %v1104 = vpop.f32.mrf.mxu0
  %v1105 = vpop.f32.mrf.mxu0
  %v1106 = vadd.f32 0.0, %v1105
  %v1107 = vpop.f32.mrf.mxu0
  %1108 = vmatprep.mubr.bf16.mxu0 0
  %1109 = vmatmul.mubr.bf16.gmra.mxu0 %v1038
  %v1110 = vpop.f32.mrf.mxu0
  %v1111 = vadd.f32 0.0, %v1110
  %v1112 = vpop.f32.mrf.mxu0
  %v1113 = vpop.f32.mrf.mxu0
  %v1114 = vadd.f32 0.0, %v1113
  %v1115 = vpop.f32.mrf.mxu0
  %1116 = vdwg.mxu0
  %s1117 = scalar_lea.vmem %s8, 1
  %v1118 = vld [vmem:[%s1117] sm:$0x1]
  %v1119 = vmul.f32 %v1087, 2.0
  %v1120 = vmul.f32 %v1090, 2.0
  %v1121 = vmul.f32 %v1095, 2.0
  %v1122 = vmul.f32 %v1098, 2.0
  %v1123 = vmul.f32 %v1103, 2.0
  %v1124 = vmul.f32 %v1106, 2.0
  %v1125 = vmul.f32 %v1111, 2.0
  %v1126 = vmul.f32 %v1114, 2.0
  %v1128 = vlaneseq
  %v1129 = vshrl.u32 %v1128, 7
  %v1130 = vsub.s32 0, %v1129
  %v1131 = vrot.slane %v1118, %v1130
  %v1133 = vsub.f32 %v1131, %v1119
  %v1134 = vsub.f32 %v1131, %v1120
  %v1135 = vsub.f32 %v1131, %v1121
  %v1136 = vsub.f32 %v1131, %v1122
  %v1137 = vsub.f32 %v1131, %v1123
  %v1138 = vsub.f32 %v1131, %v1124
  %v1139 = vsub.f32 %v1131, %v1125
  %v1140 = vsub.f32 %v1131, %v1126
  %v1141 = vsel %vm104, %v1133, inf
  %1142 = vmin.xlane.f32.xlu0 %v1141
  %v1143 = vpop.xlane.xlu0 %1142
  %v1144 = vsel %vm104, %v1134, inf
  %1145 = vmin.xlane.f32.xlu0 %v1144
  %v1146 = vpop.xlane.xlu0 %1145
  %v1147 = vsel %vm104, %v1135, inf
  %1148 = vmin.xlane.f32.xlu0 %v1147
  %v1149 = vpop.xlane.xlu0 %1148
  %v1150 = vsel %vm104, %v1136, inf
  %1151 = vmin.xlane.f32.xlu0 %v1150
  %v1152 = vpop.xlane.xlu0 %1151
  %v1153 = vsel %vm104, %v1137, inf
  %1154 = vmin.xlane.f32.xlu0 %v1153
  %v1155 = vpop.xlane.xlu0 %1154
  %v1156 = vsel %vm104, %v1138, inf
  %1157 = vmin.xlane.f32.xlu0 %v1156
  %v1158 = vpop.xlane.xlu0 %1157
  %v1159 = vsel %vm104, %v1139, inf
  %1160 = vmin.xlane.f32.xlu0 %v1159
  %v1161 = vpop.xlane.xlu0 %1160
  %v1162 = vsel %vm104, %v1140, inf
  %1163 = vmin.xlane.f32.xlu0 %v1162
  %v1164 = vpop.xlane.xlu0 %1163
  %vm1165 = vcmp.le.f32.partialorder %v1133, %v1143
  %vm1166 = vcmp.le.f32.partialorder %v1134, %v1146
  %vm1167 = vcmp.le.f32.partialorder %v1135, %v1149
  %vm1168 = vcmp.le.f32.partialorder %v1136, %v1152
  %vm1169 = vcmp.le.f32.partialorder %v1137, %v1155
  %vm1170 = vcmp.le.f32.partialorder %v1138, %v1158
  %vm1171 = vcmp.le.f32.partialorder %v1139, %v1161
  %vm1172 = vcmp.le.f32.partialorder %v1140, %v1164
  %v1173 = vsel %vm1165, %v513, 64
  %v1174 = vsel %vm1166, %v513, 64
  %v1175 = vsel %vm1167, %v513, 64
  %v1176 = vsel %vm1168, %v513, 64
  %v1177 = vsel %vm1169, %v513, 64
  %v1178 = vsel %vm1170, %v513, 64
  %v1179 = vsel %vm1171, %v513, 64
  %v1180 = vsel %vm1172, %v513, 64
  %v1181 = vsel %vm104, %v1173, 2147483647
  %v1182 = vand.u32 %v1181, 65535
  %v1183 = vshra.s32 %v1181, 16
  %v1184 = vcvt.s32.f32 %v1182
  %v1185 = vcvt.s32.f32 %v1183
  %1186 = vmin.xlane.f32.xlu0 %v1185
  %v1187 = vpop.xlane.xlu0 %1186
  %vm1188 = vcmp.eq.f32.partialorder %v1185, %v1187
  %v1189 = vsel %vm1188, %v1184, inf
  %1190 = vmin.xlane.f32.xlu0 %v1189
  %v1191 = vpop.xlane.xlu0 %1190
  %v1192 = vcvt.f32.s32 %v1191
  %v1193 = vcvt.f32.s32 %v1187
  %v1194 = vshll.u32 %v1193, 16
  %v1195 = vadd.s32 %v1194, %v1192
  %v1196 = vsel %vm104, %v1174, 2147483647
  %v1197 = vand.u32 %v1196, 65535
  %v1198 = vshra.s32 %v1196, 16
  %v1199 = vcvt.s32.f32 %v1197
  %v1200 = vcvt.s32.f32 %v1198
  %1201 = vmin.xlane.f32.xlu0 %v1200
  %v1202 = vpop.xlane.xlu0 %1201
  %vm1203 = vcmp.eq.f32.partialorder %v1200, %v1202
  %v1204 = vsel %vm1203, %v1199, inf
  %1205 = vmin.xlane.f32.xlu0 %v1204
  %v1206 = vpop.xlane.xlu0 %1205
  %v1207 = vcvt.f32.s32 %v1206
  %v1208 = vcvt.f32.s32 %v1202
  %v1209 = vshll.u32 %v1208, 16
  %v1210 = vadd.s32 %v1209, %v1207
  %v1211 = vsel %vm104, %v1175, 2147483647
  %v1212 = vand.u32 %v1211, 65535
  %v1213 = vshra.s32 %v1211, 16
  %v1214 = vcvt.s32.f32 %v1212
  %v1215 = vcvt.s32.f32 %v1213
  %1216 = vmin.xlane.f32.xlu0 %v1215
  %v1217 = vpop.xlane.xlu0 %1216
  %vm1218 = vcmp.eq.f32.partialorder %v1215, %v1217
  %v1219 = vsel %vm1218, %v1214, inf
  %1220 = vmin.xlane.f32.xlu0 %v1219
  %v1221 = vpop.xlane.xlu0 %1220
  %v1222 = vcvt.f32.s32 %v1221
  %v1223 = vcvt.f32.s32 %v1217
  %v1224 = vshll.u32 %v1223, 16
  %v1225 = vadd.s32 %v1224, %v1222
  %v1226 = vsel %vm104, %v1176, 2147483647
  %v1227 = vand.u32 %v1226, 65535
  %v1228 = vshra.s32 %v1226, 16
  %v1229 = vcvt.s32.f32 %v1227
  %v1230 = vcvt.s32.f32 %v1228
  %1231 = vmin.xlane.f32.xlu0 %v1230
  %v1232 = vpop.xlane.xlu0 %1231
  %vm1233 = vcmp.eq.f32.partialorder %v1230, %v1232
  %v1234 = vsel %vm1233, %v1229, inf
  %1235 = vmin.xlane.f32.xlu0 %v1234
  %v1236 = vpop.xlane.xlu0 %1235
  %v1237 = vcvt.f32.s32 %v1236
  %v1238 = vcvt.f32.s32 %v1232
  %v1239 = vshll.u32 %v1238, 16
  %v1240 = vadd.s32 %v1239, %v1237
  %v1241 = vsel %vm104, %v1177, 2147483647
  %v1242 = vand.u32 %v1241, 65535
  %v1243 = vshra.s32 %v1241, 16
  %v1244 = vcvt.s32.f32 %v1242
  %v1245 = vcvt.s32.f32 %v1243
  %1246 = vmin.xlane.f32.xlu0 %v1245
  %v1247 = vpop.xlane.xlu0 %1246
  %vm1248 = vcmp.eq.f32.partialorder %v1245, %v1247
  %v1249 = vsel %vm1248, %v1244, inf
  %1250 = vmin.xlane.f32.xlu0 %v1249
  %v1251 = vpop.xlane.xlu0 %1250
  %v1252 = vcvt.f32.s32 %v1251
  %v1253 = vcvt.f32.s32 %v1247
  %v1254 = vshll.u32 %v1253, 16
  %v1255 = vadd.s32 %v1254, %v1252
  %v1256 = vsel %vm104, %v1178, 2147483647
  %v1257 = vand.u32 %v1256, 65535
  %v1258 = vshra.s32 %v1256, 16
  %v1259 = vcvt.s32.f32 %v1257
  %v1260 = vcvt.s32.f32 %v1258
  %1261 = vmin.xlane.f32.xlu0 %v1260
  %v1262 = vpop.xlane.xlu0 %1261
  %vm1263 = vcmp.eq.f32.partialorder %v1260, %v1262
  %v1264 = vsel %vm1263, %v1259, inf
  %1265 = vmin.xlane.f32.xlu0 %v1264
  %v1266 = vpop.xlane.xlu0 %1265
  %v1267 = vcvt.f32.s32 %v1266
  %v1268 = vcvt.f32.s32 %v1262
  %v1269 = vshll.u32 %v1268, 16
  %v1270 = vadd.s32 %v1269, %v1267
  %v1271 = vsel %vm104, %v1179, 2147483647
  %v1272 = vand.u32 %v1271, 65535
  %v1273 = vshra.s32 %v1271, 16
  %v1274 = vcvt.s32.f32 %v1272
  %v1275 = vcvt.s32.f32 %v1273
  %1276 = vmin.xlane.f32.xlu0 %v1275
  %v1277 = vpop.xlane.xlu0 %1276
  %vm1278 = vcmp.eq.f32.partialorder %v1275, %v1277
  %v1279 = vsel %vm1278, %v1274, inf
  %1280 = vmin.xlane.f32.xlu0 %v1279
  %v1281 = vpop.xlane.xlu0 %1280
  %v1282 = vcvt.f32.s32 %v1281
  %v1283 = vcvt.f32.s32 %v1277
  %v1284 = vshll.u32 %v1283, 16
  %v1285 = vadd.s32 %v1284, %v1282
  %v1286 = vsel %vm104, %v1180, 2147483647
  %v1287 = vand.u32 %v1286, 65535
  %v1288 = vshra.s32 %v1286, 16
  %v1289 = vcvt.s32.f32 %v1287
  %v1290 = vcvt.s32.f32 %v1288
  %1291 = vmin.xlane.f32.xlu0 %v1290
  %v1292 = vpop.xlane.xlu0 %1291
  %vm1293 = vcmp.eq.f32.partialorder %v1290, %v1292
  %v1294 = vsel %vm1293, %v1289, inf
  %1295 = vmin.xlane.f32.xlu0 %v1294
  %v1296 = vpop.xlane.xlu0 %1295
  %v1297 = vcvt.f32.s32 %v1296
  %v1298 = vcvt.f32.s32 %v1292
  %v1299 = vshll.u32 %v1298, 16
  %v1300 = vadd.s32 %v1299, %v1297
  %vm1301 = vcmp.eq.s32.totalorder %v1195, %v513
  %vm1302 = vcmp.eq.s32.totalorder %v1210, %v513
  %vm1303 = vcmp.eq.s32.totalorder %v1225, %v513
  %vm1304 = vcmp.eq.s32.totalorder %v1240, %v513
  %vm1305 = vcmp.eq.s32.totalorder %v1255, %v513
  %vm1306 = vcmp.eq.s32.totalorder %v1270, %v513
  %vm1307 = vcmp.eq.s32.totalorder %v1285, %v513
  %vm1308 = vcmp.eq.s32.totalorder %v1300, %v513
  %v1309 = vsel %vm1301, 1, 0
  %v1310 = vsel %vm1302, 1, 0
  %v1311 = vsel %vm1303, 1, 0
  %v1312 = vsel %vm1304, 1, 0
  %v1313 = vsel %vm1305, 1, 0
  %v1314 = vsel %vm1306, 1, 0
  %v1315 = vsel %vm1307, 1, 0
  %v1316 = vsel %vm1308, 1, 0
  %v1317 = vcvt.s32.f32 %v1309
  %v1318 = vcvt.s32.f32 %v1310
  %v1319 = vcvt.s32.f32 %v1311
  %v1320 = vcvt.s32.f32 %v1312
  %v1321 = vcvt.s32.f32 %v1313
  %v1322 = vcvt.s32.f32 %v1314
  %v1323 = vcvt.s32.f32 %v1315
  %v1324 = vcvt.s32.f32 %v1316
  %v1326 = vsel %vm104, %v1317, 0
  %v1329 = vsel %vm104, %v1318, 0
  %v1332 = vsel %vm104, %v1319, 0
  %v1335 = vsel %vm104, %v1320, 0
  %v1338 = vsel %vm104, %v1321, 0
  %v1341 = vsel %vm104, %v1322, 0
  %v1344 = vsel %vm104, %v1323, 0
  %v1347 = vsel %vm104, %v1324, 0
  %1349 = vmatprep.subr.mxu0 0.0
  %1350 = vmatpush1.msra.mxu0 0.0
  %1351 = vmatprep.subr.mxu0 0.0
  %1352 = vmatpush1.msra.mxu0 0.0
  %1353 = vmatprep.subr.mxu0 0.0
  %1354 = vmatpush1.msra.mxu0 0.0
  %1355 = vmatprep.subr.mxu0 0.0
  %1356 = vmatpush1.msra.mxu0 0.0
  %1357 = vmatprep.subr.mxu0 0.0
  %1358 = vmatpush1.msra.mxu0 0.0
  %1359 = vmatprep.subr.mxu0 0.0
  %1360 = vmatpush1.msra.mxu0 0.0
  %1361 = vmatprep.subr.mxu0 0.0
  %1362 = vmatpush1.msra.mxu0 0.0
  %1363 = vmatprep.subr.mxu0 0.0
  %1364 = vmatpush1.msra.mxu0 0.0
  %1365 = vmatprep.subr.mxu0 0.0
  %1366 = vmatpush1.msra.mxu0 %v1019
  %1367 = vmatprep.subr.mxu0 0.0
  %1368 = vmatpush1.msra.mxu0 %v1018
  %1369 = vmatprep.subr.mxu0 0.0
  %1370 = vmatpush1.msra.mxu0 %v1017
  %1371 = vmatprep.subr.mxu0 0.0
  %1372 = vmatpush1.msra.mxu0 %v1016
  %1373 = vmatprep.subr.mxu0 0.0
  %1374 = vmatpush1.msra.mxu0 %v1015
  %1375 = vmatprep.subr.mxu0 0.0
  %1376 = vmatpush1.msra.mxu0 %v1014
  %1377 = vmatprep.subr.mxu0 0.0
  %1378 = vmatpush1.msra.mxu0 %v1013
  %1379 = vmatprep.subr.mxu0 0.0
  %1380 = vmatpush1.msra.mxu0 %v1012
  %1381 = vmatprep.subr.mxu0 0.0
  %1382 = vmatpush2.msra.mxu0 0.0
  %1383 = vmatprep.subr.mxu0 0.0
  %1384 = vmatpush2.msra.mxu0 0.0
  %1385 = vmatprep.subr.mxu0 0.0
  %1386 = vmatpush2.msra.mxu0 0.0
  %1387 = vmatprep.subr.mxu0 0.0
  %1388 = vmatpush2.msra.mxu0 0.0
  %1389 = vmatprep.subr.mxu0 0.0
  %1390 = vmatpush2.msra.mxu0 0.0
  %1391 = vmatprep.subr.mxu0 0.0
  %1392 = vmatpush2.msra.mxu0 0.0
  %1393 = vmatprep.subr.mxu0 0.0
  %1394 = vmatpush2.msra.mxu0 0.0
  %1395 = vmatprep.subr.mxu0 0.0
  %1396 = vmatpush2.msra.mxu0 0.0
  %1397 = vmatprep.subr.mxu0 0.0
  %1398 = vmatpush2.msra.mxu0 0.0
  %1399 = vmatprep.subr.mxu0 0.0
  %1400 = vmatpush2.msra.mxu0 0.0
  %1401 = vmatprep.subr.mxu0 0.0
  %1402 = vmatpush2.msra.mxu0 0.0
  %1403 = vmatprep.subr.mxu0 0.0
  %1404 = vmatpush2.msra.mxu0 0.0
  %1405 = vmatprep.subr.mxu0 0.0
  %1406 = vmatpush2.msra.mxu0 0.0
  %1407 = vmatprep.subr.mxu0 0.0
  %1408 = vmatpush2.msra.mxu0 0.0
  %1409 = vmatprep.subr.mxu0 0.0
  %1410 = vmatpush2.msra.mxu0 0.0
  %1411 = vmatprep.subr.mxu0 0.0
  %1412 = vmatpush2.msra.mxu0 0.0
  %1413 = vmatprep.mubr.f32.mxu0 0.0
  %1414 = vmatmul.mubr.f32.gmra.mxu0 %v1326
  %v1415 = vpop.f32.mrf.mxu0
  %v1416 = vadd.f32 0.0, %v1415
  %v1417 = vpop.f32.mrf.mxu0
  %1418 = vmatprep.mubr.f32.mxu0 0.0
  %1419 = vmatmul.mubr.f32.gmra.mxu0 %v1329
  %v1420 = vpop.f32.mrf.mxu0
  %v1421 = vadd.f32 0.0, %v1420
  %v1422 = vpop.f32.mrf.mxu0
  %1423 = vmatprep.mubr.f32.mxu0 0.0
  %1424 = vmatmul.mubr.f32.gmra.mxu0 %v1332
  %v1425 = vpop.f32.mrf.mxu0
  %v1426 = vadd.f32 0.0, %v1425
  %v1427 = vpop.f32.mrf.mxu0
  %1428 = vmatprep.mubr.f32.mxu0 0.0
  %1429 = vmatmul.mubr.f32.gmra.mxu0 %v1335
  %v1430 = vpop.f32.mrf.mxu0
  %v1431 = vadd.f32 0.0, %v1430
  %v1432 = vpop.f32.mrf.mxu0
  %1433 = vmatprep.mubr.f32.mxu0 0.0
  %1434 = vmatmul.mubr.f32.gmra.mxu0 %v1338
  %v1435 = vpop.f32.mrf.mxu0
  %v1436 = vadd.f32 0.0, %v1435
  %v1437 = vpop.f32.mrf.mxu0
  %1438 = vmatprep.mubr.f32.mxu0 0.0
  %1439 = vmatmul.mubr.f32.gmra.mxu0 %v1341
  %v1440 = vpop.f32.mrf.mxu0
  %v1441 = vadd.f32 0.0, %v1440
  %v1442 = vpop.f32.mrf.mxu0
  %1443 = vmatprep.mubr.f32.mxu0 0.0
  %1444 = vmatmul.mubr.f32.gmra.mxu0 %v1344
  %v1445 = vpop.f32.mrf.mxu0
  %v1446 = vadd.f32 0.0, %v1445
  %v1447 = vpop.f32.mrf.mxu0
  %1448 = vmatprep.mubr.f32.mxu0 0.0
  %1449 = vmatmul.mubr.f32.gmra.mxu0 %v1347
  %v1450 = vpop.f32.mrf.mxu0
  %v1451 = vadd.f32 0.0, %v1450
  %v1452 = vpop.f32.mrf.mxu0
  %1453 = vdwg.mxu0
  %v1454 = vsub.f32 %v955, %v1416
  %v1455 = vsub.f32 %v956, %v1421
  %v1456 = vsub.f32 %v957, %v1426
  %v1457 = vsub.f32 %v958, %v1431
  %v1458 = vsub.f32 %v959, %v1436
  %v1459 = vsub.f32 %v960, %v1441
  %v1460 = vsub.f32 %v961, %v1446
  %v1461 = vsub.f32 %v962, %v1451
  %v1462 = vmul.f32 %v1454, %v1454
  %v1463 = vmul.f32 %v1455, %v1455
  %v1464 = vmul.f32 %v1456, %v1456
  %v1465 = vmul.f32 %v1457, %v1457
  %v1466 = vmul.f32 %v1458, %v1458
  %v1467 = vmul.f32 %v1459, %v1459
  %v1468 = vmul.f32 %v1460, %v1460
  %v1469 = vmul.f32 %v1461, %v1461
  %v1470 = vsel %vm434, %v1462, 0.0
  %1471 = vadd.xlane.f32.xlu0 %v1470
  %v1472 = vpop.xlane.xlu0 %1471
  %v1473 = vsel %vm434, %v1463, 0.0
  %1474 = vadd.xlane.f32.xlu0 %v1473
  %v1475 = vpop.xlane.xlu0 %1474
  %v1476 = vsel %vm434, %v1464, 0.0
  %1477 = vadd.xlane.f32.xlu0 %v1476
  %v1478 = vpop.xlane.xlu0 %1477
  %v1479 = vsel %vm434, %v1465, 0.0
  %1480 = vadd.xlane.f32.xlu0 %v1479
  %v1481 = vpop.xlane.xlu0 %1480
  %v1482 = vsel %vm434, %v1466, 0.0
  %1483 = vadd.xlane.f32.xlu0 %v1482
  %v1484 = vpop.xlane.xlu0 %1483
  %v1485 = vsel %vm434, %v1467, 0.0
  %1486 = vadd.xlane.f32.xlu0 %v1485
  %v1487 = vpop.xlane.xlu0 %1486
  %v1488 = vsel %vm434, %v1468, 0.0
  %1489 = vadd.xlane.f32.xlu0 %v1488
  %v1490 = vpop.xlane.xlu0 %1489
  %v1491 = vsel %vm434, %v1469, 0.0
  %1492 = vadd.xlane.f32.xlu0 %v1491
  %v1493 = vpop.xlane.xlu0 %1492
  %v1494 = vadd.f32 %v995, %v1472
  %v1495 = vadd.f32 %v996, %v1475
  %v1496 = vadd.f32 %v997, %v1478
  %v1497 = vadd.f32 %v998, %v1481
  %v1498 = vadd.f32 %v999, %v1484
  %v1499 = vadd.f32 %v1000, %v1487
  %v1500 = vadd.f32 %v1001, %v1490
  %v1501 = vadd.f32 %v1002, %v1493
  %v1502 = vadd.f32 %v1003, %v1416
  %v1503 = vadd.f32 %v1004, %v1421
  %v1504 = vadd.f32 %v1005, %v1426
  %v1505 = vadd.f32 %v1006, %v1431
  %v1506 = vadd.f32 %v1007, %v1436
  %v1507 = vadd.f32 %v1008, %v1441
  %v1508 = vadd.f32 %v1009, %v1446
  %v1509 = vadd.f32 %v1010, %v1451
  %s1510 = scalar_lea.vmem %s7, 128
  %v1511 = vld [vmem:[%s1510] sm:$0xff]
  %v1512 = vld [vmem:[%s1510 + $0x8] sm:$0xff]
  %v1513 = vld [vmem:[%s1510 + $0x10] sm:$0xff]
  %v1514 = vld [vmem:[%s1510 + $0x18] sm:$0xff]
  %v1515 = vld [vmem:[%s1510 + $0x20] sm:$0xff]
  %v1516 = vld [vmem:[%s1510 + $0x28] sm:$0xff]
  %v1517 = vld [vmem:[%s1510 + $0x30] sm:$0xff]
  %v1518 = vld [vmem:[%s1510 + $0x38] sm:$0xff]
  %v1519 = vpack.c.bf16 %v1455, %v1454
  %v1520 = vpack.c.bf16 %v1457, %v1456
  %v1521 = vpack.c.bf16 %v1459, %v1458
  %v1522 = vpack.c.bf16 %v1461, %v1460
  %v1523 = vpack.c.bf16 %v1512, %v1511
  %v1524 = vpack.c.bf16 %v1514, %v1513
  %v1525 = vpack.c.bf16 %v1516, %v1515
  %v1526 = vpack.c.bf16 %v1518, %v1517
  %v1528 = vsel %vm434, %v1519, 0
  %v1531 = vsel %vm434, %v1520, 0
  %v1534 = vsel %vm434, %v1521, 0
  %v1537 = vsel %vm434, %v1522, 0
  %v1540 = vsel %vm434, %v1523, 0
  %v1543 = vsel %vm434, %v1524, 0
  %v1546 = vsel %vm434, %v1525, 0
  %v1549 = vsel %vm434, %v1526, 0
  %1551 = vmatprep.subr.bf16.mxu0 0
  %1552 = vmatpush1.bf16.xpose.msra.mxu0 0
  %1553 = vmatprep.subr.bf16.mxu0 0
  %1554 = vmatpush1.bf16.xpose.msra.mxu0 0
  %1555 = vmatprep.subr.bf16.mxu0 0
  %1556 = vmatpush1.bf16.xpose.msra.mxu0 0
  %1557 = vmatprep.subr.bf16.mxu0 0
  %1558 = vmatpush1.bf16.xpose.msra.mxu0 0
  %1559 = vmatprep.subr.bf16.mxu0 0
  %1560 = vmatpush1.bf16.xpose.msra.mxu0 %v1549
  %1561 = vmatprep.subr.bf16.mxu0 0
  %1562 = vmatpush1.bf16.xpose.msra.mxu0 %v1546
  %1563 = vmatprep.subr.bf16.mxu0 0
  %1564 = vmatpush1.bf16.xpose.msra.mxu0 %v1543
  %1565 = vmatprep.subr.bf16.mxu0 0
  %1566 = vmatpush1.bf16.xpose.msra.mxu0 %v1540
  %1567 = vmatprep.subr.bf16.mxu0 0
  %1568 = vmatpush2.bf16.xpose.msra.mxu0 0
  %1569 = vmatprep.subr.bf16.mxu0 0
  %1570 = vmatpush2.bf16.xpose.msra.mxu0 0
  %1571 = vmatprep.subr.bf16.mxu0 0
  %1572 = vmatpush2.bf16.xpose.msra.mxu0 0
  %1573 = vmatprep.subr.bf16.mxu0 0
  %1574 = vmatpush2.bf16.xpose.msra.mxu0 0
  %1575 = vmatprep.subr.bf16.mxu0 0
  %1576 = vmatpush2.bf16.xpose.msra.mxu0 0
  %1577 = vmatprep.subr.bf16.mxu0 0
  %1578 = vmatpush2.bf16.xpose.msra.mxu0 0
  %1579 = vmatprep.subr.bf16.mxu0 0
  %1580 = vmatpush2.bf16.xpose.msra.mxu0 0
  %1581 = vmatprep.subr.bf16.mxu0 0
  %1582 = vmatpush2.bf16.xpose.msra.mxu0 0
  %1583 = vmatprep.mubr.bf16.mxu0 0
  %1584 = vmatmul.mubr.bf16.gmra.mxu0 %v1528
  %v1585 = vpop.f32.mrf.mxu0
  %v1586 = vadd.f32 0.0, %v1585
  %v1587 = vpop.f32.mrf.mxu0
  %v1588 = vpop.f32.mrf.mxu0
  %v1589 = vadd.f32 0.0, %v1588
  %v1590 = vpop.f32.mrf.mxu0
  %1591 = vmatprep.mubr.bf16.mxu0 0
  %1592 = vmatmul.mubr.bf16.gmra.mxu0 %v1531
  %v1593 = vpop.f32.mrf.mxu0
  %v1594 = vadd.f32 0.0, %v1593
  %v1595 = vpop.f32.mrf.mxu0
  %v1596 = vpop.f32.mrf.mxu0
  %v1597 = vadd.f32 0.0, %v1596
  %v1598 = vpop.f32.mrf.mxu0
  %1599 = vmatprep.mubr.bf16.mxu0 0
  %1600 = vmatmul.mubr.bf16.gmra.mxu0 %v1534
  %v1601 = vpop.f32.mrf.mxu0
  %v1602 = vadd.f32 0.0, %v1601
  %v1603 = vpop.f32.mrf.mxu0
  %v1604 = vpop.f32.mrf.mxu0
  %v1605 = vadd.f32 0.0, %v1604
  %v1606 = vpop.f32.mrf.mxu0
  %1607 = vmatprep.mubr.bf16.mxu0 0
  %1608 = vmatmul.mubr.bf16.gmra.mxu0 %v1537
  %v1609 = vpop.f32.mrf.mxu0
  %v1610 = vadd.f32 0.0, %v1609
  %v1611 = vpop.f32.mrf.mxu0
  %v1612 = vpop.f32.mrf.mxu0
  %v1613 = vadd.f32 0.0, %v1612
  %v1614 = vpop.f32.mrf.mxu0
  %1615 = vdwg.mxu0
  %s1616 = scalar_lea.vmem %s8, 2
  %v1617 = vld [vmem:[%s1616] sm:$0x1]
  %v1618 = vmul.f32 %v1586, 2.0
  %v1619 = vmul.f32 %v1589, 2.0
  %v1620 = vmul.f32 %v1594, 2.0
  %v1621 = vmul.f32 %v1597, 2.0
  %v1622 = vmul.f32 %v1602, 2.0
  %v1623 = vmul.f32 %v1605, 2.0
  %v1624 = vmul.f32 %v1610, 2.0
  %v1625 = vmul.f32 %v1613, 2.0
  %v1627 = vlaneseq
  %v1628 = vshrl.u32 %v1627, 7
  %v1629 = vsub.s32 0, %v1628
  %v1630 = vrot.slane %v1617, %v1629
  %v1632 = vsub.f32 %v1630, %v1618
  %v1633 = vsub.f32 %v1630, %v1619
  %v1634 = vsub.f32 %v1630, %v1620
  %v1635 = vsub.f32 %v1630, %v1621
  %v1636 = vsub.f32 %v1630, %v1622
  %v1637 = vsub.f32 %v1630, %v1623
  %v1638 = vsub.f32 %v1630, %v1624
  %v1639 = vsub.f32 %v1630, %v1625
  %v1640 = vsel %vm104, %v1632, inf
  %1641 = vmin.xlane.f32.xlu0 %v1640
  %v1642 = vpop.xlane.xlu0 %1641
  %v1643 = vsel %vm104, %v1633, inf
  %1644 = vmin.xlane.f32.xlu0 %v1643
  %v1645 = vpop.xlane.xlu0 %1644
  %v1646 = vsel %vm104, %v1634, inf
  %1647 = vmin.xlane.f32.xlu0 %v1646
  %v1648 = vpop.xlane.xlu0 %1647
  %v1649 = vsel %vm104, %v1635, inf
  %1650 = vmin.xlane.f32.xlu0 %v1649
  %v1651 = vpop.xlane.xlu0 %1650
  %v1652 = vsel %vm104, %v1636, inf
  %1653 = vmin.xlane.f32.xlu0 %v1652
  %v1654 = vpop.xlane.xlu0 %1653
  %v1655 = vsel %vm104, %v1637, inf
  %1656 = vmin.xlane.f32.xlu0 %v1655
  %v1657 = vpop.xlane.xlu0 %1656
  %v1658 = vsel %vm104, %v1638, inf
  %1659 = vmin.xlane.f32.xlu0 %v1658
  %v1660 = vpop.xlane.xlu0 %1659
  %v1661 = vsel %vm104, %v1639, inf
  %1662 = vmin.xlane.f32.xlu0 %v1661
  %v1663 = vpop.xlane.xlu0 %1662
  %vm1664 = vcmp.le.f32.partialorder %v1632, %v1642
  %vm1665 = vcmp.le.f32.partialorder %v1633, %v1645
  %vm1666 = vcmp.le.f32.partialorder %v1634, %v1648
  %vm1667 = vcmp.le.f32.partialorder %v1635, %v1651
  %vm1668 = vcmp.le.f32.partialorder %v1636, %v1654
  %vm1669 = vcmp.le.f32.partialorder %v1637, %v1657
  %vm1670 = vcmp.le.f32.partialorder %v1638, %v1660
  %vm1671 = vcmp.le.f32.partialorder %v1639, %v1663
  %v1672 = vsel %vm1664, %v513, 64
  %v1673 = vsel %vm1665, %v513, 64
  %v1674 = vsel %vm1666, %v513, 64
  %v1675 = vsel %vm1667, %v513, 64
  %v1676 = vsel %vm1668, %v513, 64
  %v1677 = vsel %vm1669, %v513, 64
  %v1678 = vsel %vm1670, %v513, 64
  %v1679 = vsel %vm1671, %v513, 64
  %v1680 = vsel %vm104, %v1672, 2147483647
  %v1681 = vand.u32 %v1680, 65535
  %v1682 = vshra.s32 %v1680, 16
  %v1683 = vcvt.s32.f32 %v1681
  %v1684 = vcvt.s32.f32 %v1682
  %1685 = vmin.xlane.f32.xlu0 %v1684
  %v1686 = vpop.xlane.xlu0 %1685
  %vm1687 = vcmp.eq.f32.partialorder %v1684, %v1686
  %v1688 = vsel %vm1687, %v1683, inf
  %1689 = vmin.xlane.f32.xlu0 %v1688
  %v1690 = vpop.xlane.xlu0 %1689
  %v1691 = vcvt.f32.s32 %v1690
  %v1692 = vcvt.f32.s32 %v1686
  %v1693 = vshll.u32 %v1692, 16
  %v1694 = vadd.s32 %v1693, %v1691
  %v1695 = vsel %vm104, %v1673, 2147483647
  %v1696 = vand.u32 %v1695, 65535
  %v1697 = vshra.s32 %v1695, 16
  %v1698 = vcvt.s32.f32 %v1696
  %v1699 = vcvt.s32.f32 %v1697
  %1700 = vmin.xlane.f32.xlu0 %v1699
  %v1701 = vpop.xlane.xlu0 %1700
  %vm1702 = vcmp.eq.f32.partialorder %v1699, %v1701
  %v1703 = vsel %vm1702, %v1698, inf
  %1704 = vmin.xlane.f32.xlu0 %v1703
  %v1705 = vpop.xlane.xlu0 %1704
  %v1706 = vcvt.f32.s32 %v1705
  %v1707 = vcvt.f32.s32 %v1701
  %v1708 = vshll.u32 %v1707, 16
  %v1709 = vadd.s32 %v1708, %v1706
  %v1710 = vsel %vm104, %v1674, 2147483647
  %v1711 = vand.u32 %v1710, 65535
  %v1712 = vshra.s32 %v1710, 16
  %v1713 = vcvt.s32.f32 %v1711
  %v1714 = vcvt.s32.f32 %v1712
  %1715 = vmin.xlane.f32.xlu0 %v1714
  %v1716 = vpop.xlane.xlu0 %1715
  %vm1717 = vcmp.eq.f32.partialorder %v1714, %v1716
  %v1718 = vsel %vm1717, %v1713, inf
  %1719 = vmin.xlane.f32.xlu0 %v1718
  %v1720 = vpop.xlane.xlu0 %1719
  %v1721 = vcvt.f32.s32 %v1720
  %v1722 = vcvt.f32.s32 %v1716
  %v1723 = vshll.u32 %v1722, 16
  %v1724 = vadd.s32 %v1723, %v1721
  %v1725 = vsel %vm104, %v1675, 2147483647
  %v1726 = vand.u32 %v1725, 65535
  %v1727 = vshra.s32 %v1725, 16
  %v1728 = vcvt.s32.f32 %v1726
  %v1729 = vcvt.s32.f32 %v1727
  %1730 = vmin.xlane.f32.xlu0 %v1729
  %v1731 = vpop.xlane.xlu0 %1730
  %vm1732 = vcmp.eq.f32.partialorder %v1729, %v1731
  %v1733 = vsel %vm1732, %v1728, inf
  %1734 = vmin.xlane.f32.xlu0 %v1733
  %v1735 = vpop.xlane.xlu0 %1734
  %v1736 = vcvt.f32.s32 %v1735
  %v1737 = vcvt.f32.s32 %v1731
  %v1738 = vshll.u32 %v1737, 16
  %v1739 = vadd.s32 %v1738, %v1736
  %v1740 = vsel %vm104, %v1676, 2147483647
  %v1741 = vand.u32 %v1740, 65535
  %v1742 = vshra.s32 %v1740, 16
  %v1743 = vcvt.s32.f32 %v1741
  %v1744 = vcvt.s32.f32 %v1742
  %1745 = vmin.xlane.f32.xlu0 %v1744
  %v1746 = vpop.xlane.xlu0 %1745
  %vm1747 = vcmp.eq.f32.partialorder %v1744, %v1746
  %v1748 = vsel %vm1747, %v1743, inf
  %1749 = vmin.xlane.f32.xlu0 %v1748
  %v1750 = vpop.xlane.xlu0 %1749
  %v1751 = vcvt.f32.s32 %v1750
  %v1752 = vcvt.f32.s32 %v1746
  %v1753 = vshll.u32 %v1752, 16
  %v1754 = vadd.s32 %v1753, %v1751
  %v1755 = vsel %vm104, %v1677, 2147483647
  %v1756 = vand.u32 %v1755, 65535
  %v1757 = vshra.s32 %v1755, 16
  %v1758 = vcvt.s32.f32 %v1756
  %v1759 = vcvt.s32.f32 %v1757
  %1760 = vmin.xlane.f32.xlu0 %v1759
  %v1761 = vpop.xlane.xlu0 %1760
  %vm1762 = vcmp.eq.f32.partialorder %v1759, %v1761
  %v1763 = vsel %vm1762, %v1758, inf
  %1764 = vmin.xlane.f32.xlu0 %v1763
  %v1765 = vpop.xlane.xlu0 %1764
  %v1766 = vcvt.f32.s32 %v1765
  %v1767 = vcvt.f32.s32 %v1761
  %v1768 = vshll.u32 %v1767, 16
  %v1769 = vadd.s32 %v1768, %v1766
  %v1770 = vsel %vm104, %v1678, 2147483647
  %v1771 = vand.u32 %v1770, 65535
  %v1772 = vshra.s32 %v1770, 16
  %v1773 = vcvt.s32.f32 %v1771
  %v1774 = vcvt.s32.f32 %v1772
  %1775 = vmin.xlane.f32.xlu0 %v1774
  %v1776 = vpop.xlane.xlu0 %1775
  %vm1777 = vcmp.eq.f32.partialorder %v1774, %v1776
  %v1778 = vsel %vm1777, %v1773, inf
  %1779 = vmin.xlane.f32.xlu0 %v1778
  %v1780 = vpop.xlane.xlu0 %1779
  %v1781 = vcvt.f32.s32 %v1780
  %v1782 = vcvt.f32.s32 %v1776
  %v1783 = vshll.u32 %v1782, 16
  %v1784 = vadd.s32 %v1783, %v1781
  %v1785 = vsel %vm104, %v1679, 2147483647
  %v1786 = vand.u32 %v1785, 65535
  %v1787 = vshra.s32 %v1785, 16
  %v1788 = vcvt.s32.f32 %v1786
  %v1789 = vcvt.s32.f32 %v1787
  %1790 = vmin.xlane.f32.xlu0 %v1789
  %v1791 = vpop.xlane.xlu0 %1790
  %vm1792 = vcmp.eq.f32.partialorder %v1789, %v1791
  %v1793 = vsel %vm1792, %v1788, inf
  %1794 = vmin.xlane.f32.xlu0 %v1793
  %v1795 = vpop.xlane.xlu0 %1794
  %v1796 = vcvt.f32.s32 %v1795
  %v1797 = vcvt.f32.s32 %v1791
  %v1798 = vshll.u32 %v1797, 16
  %v1799 = vadd.s32 %v1798, %v1796
  %vm1800 = vcmp.eq.s32.totalorder %v1694, %v513
  %vm1801 = vcmp.eq.s32.totalorder %v1709, %v513
  %vm1802 = vcmp.eq.s32.totalorder %v1724, %v513
  %vm1803 = vcmp.eq.s32.totalorder %v1739, %v513
  %vm1804 = vcmp.eq.s32.totalorder %v1754, %v513
  %vm1805 = vcmp.eq.s32.totalorder %v1769, %v513
  %vm1806 = vcmp.eq.s32.totalorder %v1784, %v513
  %vm1807 = vcmp.eq.s32.totalorder %v1799, %v513
  %v1808 = vsel %vm1800, 1, 0
  %v1809 = vsel %vm1801, 1, 0
  %v1810 = vsel %vm1802, 1, 0
  %v1811 = vsel %vm1803, 1, 0
  %v1812 = vsel %vm1804, 1, 0
  %v1813 = vsel %vm1805, 1, 0
  %v1814 = vsel %vm1806, 1, 0
  %v1815 = vsel %vm1807, 1, 0
  %v1816 = vcvt.s32.f32 %v1808
  %v1817 = vcvt.s32.f32 %v1809
  %v1818 = vcvt.s32.f32 %v1810
  %v1819 = vcvt.s32.f32 %v1811
  %v1820 = vcvt.s32.f32 %v1812
  %v1821 = vcvt.s32.f32 %v1813
  %v1822 = vcvt.s32.f32 %v1814
  %v1823 = vcvt.s32.f32 %v1815
  %v1825 = vsel %vm104, %v1816, 0
  %v1828 = vsel %vm104, %v1817, 0
  %v1831 = vsel %vm104, %v1818, 0
  %v1834 = vsel %vm104, %v1819, 0
  %v1837 = vsel %vm104, %v1820, 0
  %v1840 = vsel %vm104, %v1821, 0
  %v1843 = vsel %vm104, %v1822, 0
  %v1846 = vsel %vm104, %v1823, 0
  %1848 = vmatprep.subr.mxu0 0.0
  %1849 = vmatpush1.msra.mxu0 0.0
  %1850 = vmatprep.subr.mxu0 0.0
  %1851 = vmatpush1.msra.mxu0 0.0
  %1852 = vmatprep.subr.mxu0 0.0
  %1853 = vmatpush1.msra.mxu0 0.0
  %1854 = vmatprep.subr.mxu0 0.0
  %1855 = vmatpush1.msra.mxu0 0.0
  %1856 = vmatprep.subr.mxu0 0.0
  %1857 = vmatpush1.msra.mxu0 0.0
  %1858 = vmatprep.subr.mxu0 0.0
  %1859 = vmatpush1.msra.mxu0 0.0
  %1860 = vmatprep.subr.mxu0 0.0
  %1861 = vmatpush1.msra.mxu0 0.0
  %1862 = vmatprep.subr.mxu0 0.0
  %1863 = vmatpush1.msra.mxu0 0.0
  %1864 = vmatprep.subr.mxu0 0.0
  %1865 = vmatpush1.msra.mxu0 %v1518
  %1866 = vmatprep.subr.mxu0 0.0
  %1867 = vmatpush1.msra.mxu0 %v1517
  %1868 = vmatprep.subr.mxu0 0.0
  %1869 = vmatpush1.msra.mxu0 %v1516
  %1870 = vmatprep.subr.mxu0 0.0
  %1871 = vmatpush1.msra.mxu0 %v1515
  %1872 = vmatprep.subr.mxu0 0.0
  %1873 = vmatpush1.msra.mxu0 %v1514
  %1874 = vmatprep.subr.mxu0 0.0
  %1875 = vmatpush1.msra.mxu0 %v1513
  %1876 = vmatprep.subr.mxu0 0.0
  %1877 = vmatpush1.msra.mxu0 %v1512
  %1878 = vmatprep.subr.mxu0 0.0
  %1879 = vmatpush1.msra.mxu0 %v1511
  %1880 = vmatprep.subr.mxu0 0.0
  %1881 = vmatpush2.msra.mxu0 0.0
  %1882 = vmatprep.subr.mxu0 0.0
  %1883 = vmatpush2.msra.mxu0 0.0
  %1884 = vmatprep.subr.mxu0 0.0
  %1885 = vmatpush2.msra.mxu0 0.0
  %1886 = vmatprep.subr.mxu0 0.0
  %1887 = vmatpush2.msra.mxu0 0.0
  %1888 = vmatprep.subr.mxu0 0.0
  %1889 = vmatpush2.msra.mxu0 0.0
  %1890 = vmatprep.subr.mxu0 0.0
  %1891 = vmatpush2.msra.mxu0 0.0
  %1892 = vmatprep.subr.mxu0 0.0
  %1893 = vmatpush2.msra.mxu0 0.0
  %1894 = vmatprep.subr.mxu0 0.0
  %1895 = vmatpush2.msra.mxu0 0.0
  %1896 = vmatprep.subr.mxu0 0.0
  %1897 = vmatpush2.msra.mxu0 0.0
  %1898 = vmatprep.subr.mxu0 0.0
  %1899 = vmatpush2.msra.mxu0 0.0
  %1900 = vmatprep.subr.mxu0 0.0
  %1901 = vmatpush2.msra.mxu0 0.0
  %1902 = vmatprep.subr.mxu0 0.0
  %1903 = vmatpush2.msra.mxu0 0.0
  %1904 = vmatprep.subr.mxu0 0.0
  %1905 = vmatpush2.msra.mxu0 0.0
  %1906 = vmatprep.subr.mxu0 0.0
  %1907 = vmatpush2.msra.mxu0 0.0
  %1908 = vmatprep.subr.mxu0 0.0
  %1909 = vmatpush2.msra.mxu0 0.0
  %1910 = vmatprep.subr.mxu0 0.0
  %1911 = vmatpush2.msra.mxu0 0.0
  %1912 = vmatprep.mubr.f32.mxu0 0.0
  %1913 = vmatmul.mubr.f32.gmra.mxu0 %v1825
  %v1914 = vpop.f32.mrf.mxu0
  %v1915 = vadd.f32 0.0, %v1914
  %v1916 = vpop.f32.mrf.mxu0
  %1917 = vmatprep.mubr.f32.mxu0 0.0
  %1918 = vmatmul.mubr.f32.gmra.mxu0 %v1828
  %v1919 = vpop.f32.mrf.mxu0
  %v1920 = vadd.f32 0.0, %v1919
  %v1921 = vpop.f32.mrf.mxu0
  %1922 = vmatprep.mubr.f32.mxu0 0.0
  %1923 = vmatmul.mubr.f32.gmra.mxu0 %v1831
  %v1924 = vpop.f32.mrf.mxu0
  %v1925 = vadd.f32 0.0, %v1924
  %v1926 = vpop.f32.mrf.mxu0
  %1927 = vmatprep.mubr.f32.mxu0 0.0
  %1928 = vmatmul.mubr.f32.gmra.mxu0 %v1834
  %v1929 = vpop.f32.mrf.mxu0
  %v1930 = vadd.f32 0.0, %v1929
  %v1931 = vpop.f32.mrf.mxu0
  %1932 = vmatprep.mubr.f32.mxu0 0.0
  %1933 = vmatmul.mubr.f32.gmra.mxu0 %v1837
  %v1934 = vpop.f32.mrf.mxu0
  %v1935 = vadd.f32 0.0, %v1934
  %v1936 = vpop.f32.mrf.mxu0
  %1937 = vmatprep.mubr.f32.mxu0 0.0
  %1938 = vmatmul.mubr.f32.gmra.mxu0 %v1840
  %v1939 = vpop.f32.mrf.mxu0
  %v1940 = vadd.f32 0.0, %v1939
  %v1941 = vpop.f32.mrf.mxu0
  %1942 = vmatprep.mubr.f32.mxu0 0.0
  %1943 = vmatmul.mubr.f32.gmra.mxu0 %v1843
  %v1944 = vpop.f32.mrf.mxu0
  %v1945 = vadd.f32 0.0, %v1944
  %v1946 = vpop.f32.mrf.mxu0
  %1947 = vmatprep.mubr.f32.mxu0 0.0
  %1948 = vmatmul.mubr.f32.gmra.mxu0 %v1846
  %v1949 = vpop.f32.mrf.mxu0
  %v1950 = vadd.f32 0.0, %v1949
  %v1951 = vpop.f32.mrf.mxu0
  %1952 = vdwg.mxu0
  %v1953 = vsub.f32 %v1454, %v1915
  %v1954 = vsub.f32 %v1455, %v1920
  %v1955 = vsub.f32 %v1456, %v1925
  %v1956 = vsub.f32 %v1457, %v1930
  %v1957 = vsub.f32 %v1458, %v1935
  %v1958 = vsub.f32 %v1459, %v1940
  %v1959 = vsub.f32 %v1460, %v1945
  %v1960 = vsub.f32 %v1461, %v1950
  %v1961 = vmul.f32 %v1953, %v1953
  %v1962 = vmul.f32 %v1954, %v1954
  %v1963 = vmul.f32 %v1955, %v1955
  %v1964 = vmul.f32 %v1956, %v1956
  %v1965 = vmul.f32 %v1957, %v1957
  %v1966 = vmul.f32 %v1958, %v1958
  %v1967 = vmul.f32 %v1959, %v1959
  %v1968 = vmul.f32 %v1960, %v1960
  %v1969 = vsel %vm434, %v1961, 0.0
  %1970 = vadd.xlane.f32.xlu0 %v1969
  %v1971 = vpop.xlane.xlu0 %1970
  %v1972 = vsel %vm434, %v1962, 0.0
  %1973 = vadd.xlane.f32.xlu0 %v1972
  %v1974 = vpop.xlane.xlu0 %1973
  %v1975 = vsel %vm434, %v1963, 0.0
  %1976 = vadd.xlane.f32.xlu0 %v1975
  %v1977 = vpop.xlane.xlu0 %1976
  %v1978 = vsel %vm434, %v1964, 0.0
  %1979 = vadd.xlane.f32.xlu0 %v1978
  %v1980 = vpop.xlane.xlu0 %1979
  %v1981 = vsel %vm434, %v1965, 0.0
  %1982 = vadd.xlane.f32.xlu0 %v1981
  %v1983 = vpop.xlane.xlu0 %1982
  %v1984 = vsel %vm434, %v1966, 0.0
  %1985 = vadd.xlane.f32.xlu0 %v1984
  %v1986 = vpop.xlane.xlu0 %1985
  %v1987 = vsel %vm434, %v1967, 0.0
  %1988 = vadd.xlane.f32.xlu0 %v1987
  %v1989 = vpop.xlane.xlu0 %1988
  %v1990 = vsel %vm434, %v1968, 0.0
  %1991 = vadd.xlane.f32.xlu0 %v1990
  %v1992 = vpop.xlane.xlu0 %1991
  %v1993 = vadd.f32 %v1494, %v1971
  %v1994 = vadd.f32 %v1495, %v1974
  %v1995 = vadd.f32 %v1496, %v1977
  %v1996 = vadd.f32 %v1497, %v1980
  %v1997 = vadd.f32 %v1498, %v1983
  %v1998 = vadd.f32 %v1499, %v1986
  %v1999 = vadd.f32 %v1500, %v1989
  %v2000 = vadd.f32 %v1501, %v1992
  %v2001 = vadd.f32 %v1502, %v1915
  %v2002 = vadd.f32 %v1503, %v1920
  %v2003 = vadd.f32 %v1504, %v1925
  %v2004 = vadd.f32 %v1505, %v1930
  %v2005 = vadd.f32 %v1506, %v1935
  %v2006 = vadd.f32 %v1507, %v1940
  %v2007 = vadd.f32 %v1508, %v1945
  %v2008 = vadd.f32 %v1509, %v1950
  %vm2009 = vcmask 7168
  %v2010 = vsel %vm2009, %v696, %v1195
  %v2011 = vsel %vm2009, %v711, %v1210
  %v2012 = vsel %vm2009, %v726, %v1225
  %v2013 = vsel %vm2009, %v741, %v1240
  %v2014 = vsel %vm2009, %v756, %v1255
  %v2015 = vsel %vm2009, %v771, %v1270
  %v2016 = vsel %vm2009, %v786, %v1285
  %v2017 = vsel %vm2009, %v801, %v1300
  %vm2018 = vcmask 15360
  %v2019 = vsel %vm2018, %v2010, %v1694
  %v2020 = vsel %vm2018, %v2011, %v1709
  %v2021 = vsel %vm2018, %v2012, %v1724
  %v2022 = vsel %vm2018, %v2013, %v1739
  %v2023 = vsel %vm2018, %v2014, %v1754
  %v2024 = vsel %vm2018, %v2015, %v1769
  %v2025 = vsel %vm2018, %v2016, %v1784
  %v2026 = vsel %vm2018, %v2017, %v1799
  %vm2027 = vcmask 23552
  %2028 = vst.msk [vmem:[%s16] sm:$0xff] %vm2027, %v2019
  %2029 = vst.msk [vmem:[%s16 + $0x8] sm:$0xff] %vm2027, %v2020
  %2030 = vst.msk [vmem:[%s16 + $0x10] sm:$0xff] %vm2027, %v2021
  %2031 = vst.msk [vmem:[%s16 + $0x18] sm:$0xff] %vm2027, %v2022
  %2032 = vst.msk [vmem:[%s16 + $0x20] sm:$0xff] %vm2027, %v2023
  %2033 = vst.msk [vmem:[%s16 + $0x28] sm:$0xff] %vm2027, %v2024
  %2034 = vst.msk [vmem:[%s16 + $0x30] sm:$0xff] %vm2027, %v2025
  %2035 = vst.msk [vmem:[%s16 + $0x38] sm:$0xff] %vm2027, %v2026
  %v2036 = vpack.c.bf16 %v2002, %v2001
  %v2037 = vpack.c.bf16 %v2004, %v2003
  %v2038 = vpack.c.bf16 %v2006, %v2005
  %v2039 = vpack.c.bf16 %v2008, %v2007
  %v2040 = vld [vmem:[%s9] sm:$0xf]
  %v2041 = vld [vmem:[%s9 + $0x4] sm:$0xf]
  %v2042 = vld [vmem:[%s9 + $0x8] sm:$0xf]
  %v2043 = vld [vmem:[%s9 + $0xc] sm:$0xf]
  %v2044 = vld [vmem:[%s10] sm:$0x1]
  %v2046 = vlaneseq
  %v2047 = vshrl.u32 %v2046, 7
  %v2048 = vsub.s32 0, %v2047
  %v2049 = vrot.slane %v2044, %v2048
  %v2055 = vunpack.c.l.b16 %v2040
  %v2056 = vunpack.c.l.b16 %v2041
  %v2057 = vunpack.c.l.b16 %v2042
  %v2058 = vunpack.c.l.b16 %v2043
  %v2059 = vpack.c.b16 %v2056, %v2055
  %v2060 = vpack.c.b16 %v2058, %v2057
  %v2064 = vsel %vm434, %v2036, 0
  %v2067 = vsel %vm434, %v2037, 0
  %v2070 = vsel %vm434, %v2038, 0
  %v2073 = vsel %vm434, %v2039, 0
  %2075 = vmatprep.subr.bf16.mxu0 0
  %2076 = vmatpush1.bf16.msra.mxu0 0
  %2077 = vmatprep.subr.bf16.mxu0 0
  %2078 = vmatpush1.bf16.msra.mxu0 0
  %2079 = vmatprep.subr.bf16.mxu0 0
  %2080 = vmatpush1.bf16.msra.mxu0 0
  %2081 = vmatprep.subr.bf16.mxu0 0
  %2082 = vmatpush1.bf16.msra.mxu0 0
  %2083 = vmatprep.subr.bf16.mxu0 0
  %2084 = vmatpush1.bf16.msra.mxu0 0
  %2085 = vmatprep.subr.bf16.mxu0 0
  %2086 = vmatpush1.bf16.msra.mxu0 0
  %2087 = vmatprep.subr.bf16.mxu0 0
  %2088 = vmatpush1.bf16.msra.mxu0 %v2060
  %2089 = vmatprep.subr.bf16.mxu0 0
  %2090 = vmatpush1.bf16.msra.mxu0 %v2059
  %2091 = vmatprep.subr.bf16.mxu0 0
  %2092 = vmatpush2.bf16.msra.mxu0 0
  %2093 = vmatprep.subr.bf16.mxu0 0
  %2094 = vmatpush2.bf16.msra.mxu0 0
  %2095 = vmatprep.subr.bf16.mxu0 0
  %2096 = vmatpush2.bf16.msra.mxu0 0
  %2097 = vmatprep.subr.bf16.mxu0 0
  %2098 = vmatpush2.bf16.msra.mxu0 0
  %2099 = vmatprep.subr.bf16.mxu0 0
  %2100 = vmatpush2.bf16.msra.mxu0 0
  %2101 = vmatprep.subr.bf16.mxu0 0
  %2102 = vmatpush2.bf16.msra.mxu0 0
  %2103 = vmatprep.subr.bf16.mxu0 0
  %2104 = vmatpush2.bf16.msra.mxu0 0
  %2105 = vmatprep.subr.bf16.mxu0 0
  %2106 = vmatpush2.bf16.msra.mxu0 0
  %2107 = vmatprep.mubr.bf16.mxu0 0
  %2108 = vmatmul.mubr.bf16.gmra.mxu0 %v2064
  %v2109 = vpop.f32.mrf.mxu0
  %v2110 = vadd.f32 %v2049, %v2109
  %v2111 = vpop.f32.mrf.mxu0
  %v2112 = vpop.f32.mrf.mxu0
  %v2113 = vadd.f32 %v2049, %v2112
  %v2114 = vpop.f32.mrf.mxu0
  %2115 = vmatprep.mubr.bf16.mxu0 0
  %2116 = vmatmul.mubr.bf16.gmra.mxu0 %v2067
  %v2117 = vpop.f32.mrf.mxu0
  %v2118 = vadd.f32 %v2049, %v2117
  %v2119 = vpop.f32.mrf.mxu0
  %v2120 = vpop.f32.mrf.mxu0
  %v2121 = vadd.f32 %v2049, %v2120
  %v2122 = vpop.f32.mrf.mxu0
  %2123 = vmatprep.mubr.bf16.mxu0 0
  %2124 = vmatmul.mubr.bf16.gmra.mxu0 %v2070
  %v2125 = vpop.f32.mrf.mxu0
  %v2126 = vadd.f32 %v2049, %v2125
  %v2127 = vpop.f32.mrf.mxu0
  %v2128 = vpop.f32.mrf.mxu0
  %v2129 = vadd.f32 %v2049, %v2128
  %v2130 = vpop.f32.mrf.mxu0
  %2131 = vmatprep.mubr.bf16.mxu0 0
  %2132 = vmatmul.mubr.bf16.gmra.mxu0 %v2073
  %v2133 = vpop.f32.mrf.mxu0
  %v2134 = vadd.f32 %v2049, %v2133
  %v2135 = vpop.f32.mrf.mxu0
  %v2136 = vpop.f32.mrf.mxu0
  %v2137 = vadd.f32 %v2049, %v2136
  %v2138 = vpop.f32.mrf.mxu0
  %2139 = vdwg.mxu0
  %v2140 = vxor.u32 %v2110, 2147483648
  %v2141 = vxor.u32 %v2113, 2147483648
  %v2142 = vxor.u32 %v2118, 2147483648
  %v2143 = vxor.u32 %v2121, 2147483648
  %v2144 = vxor.u32 %v2126, 2147483648
  %v2145 = vxor.u32 %v2129, 2147483648
  %v2146 = vxor.u32 %v2134, 2147483648
  %v2147 = vxor.u32 %v2137, 2147483648
  %v2148 = vmul.f32 %v2140, 1.442695
  %v2149 = vpow.pop %v2148
  %v2150 = vmul.f32 %v2141, 1.442695
  %v2151 = vpow.pop %v2150
  %v2152 = vmul.f32 %v2142, 1.442695
  %v2153 = vpow.pop %v2152
  %v2154 = vmul.f32 %v2143, 1.442695
  %v2155 = vpow.pop %v2154
  %v2156 = vmul.f32 %v2144, 1.442695
  %v2157 = vpow.pop %v2156
  %v2158 = vmul.f32 %v2145, 1.442695
  %v2159 = vpow.pop %v2158
  %v2160 = vmul.f32 %v2146, 1.442695
  %v2161 = vpow.pop %v2160
  %v2162 = vmul.f32 %v2147, 1.442695
  %v2163 = vpow.pop %v2162
  %v2164 = vadd.f32 %v2149, 1.0
  %v2165 = vadd.f32 %v2151, 1.0
  %v2166 = vadd.f32 %v2153, 1.0
  %v2167 = vadd.f32 %v2155, 1.0
  %v2168 = vadd.f32 %v2157, 1.0
  %v2169 = vadd.f32 %v2159, 1.0
  %v2170 = vadd.f32 %v2161, 1.0
  %v2171 = vadd.f32 %v2163, 1.0
  %v2172 = vrcp.pop %v2164
  %v2173 = vmul.f32 1.0, %v2172
  %v2174 = vrcp.pop %v2165
  %v2175 = vmul.f32 1.0, %v2174
  %v2176 = vrcp.pop %v2166
  %v2177 = vmul.f32 1.0, %v2176
  %v2178 = vrcp.pop %v2167
  %v2179 = vmul.f32 1.0, %v2178
  %v2180 = vrcp.pop %v2168
  %v2181 = vmul.f32 1.0, %v2180
  %v2182 = vrcp.pop %v2169
  %v2183 = vmul.f32 1.0, %v2182
  %v2184 = vrcp.pop %v2170
  %v2185 = vmul.f32 1.0, %v2184
  %v2186 = vrcp.pop %v2171
  %v2187 = vmul.f32 1.0, %v2186
  %v2188 = vmul.f32 %v2110, %v2173
  %v2189 = vmul.f32 %v2113, %v2175
  %v2190 = vmul.f32 %v2118, %v2177
  %v2191 = vmul.f32 %v2121, %v2179
  %v2192 = vmul.f32 %v2126, %v2181
  %v2193 = vmul.f32 %v2129, %v2183
  %v2194 = vmul.f32 %v2134, %v2185
  %v2195 = vmul.f32 %v2137, %v2187
  %v2196 = vpack.c.bf16 %v2189, %v2188
  %v2197 = vpack.c.bf16 %v2191, %v2190
  %v2198 = vpack.c.bf16 %v2193, %v2192
  %v2199 = vpack.c.bf16 %v2195, %v2194
  %v2200 = vld [vmem:[%s11] sm:$0xf]
  %v2201 = vld [vmem:[%s11 + $0x4] sm:$0xf]
  %v2202 = vld [vmem:[%s11 + $0x8] sm:$0xf]
  %v2203 = vld [vmem:[%s11 + $0xc] sm:$0xf]
  %v2204 = vld [vmem:[%s11 + $0x10] sm:$0xf]
  %v2205 = vld [vmem:[%s11 + $0x14] sm:$0xf]
  %v2206 = vld [vmem:[%s12] sm:$0x1]
  %v2208 = vlaneseq
  %v2209 = vshrl.u32 %v2208, 7
  %v2210 = vsub.s32 0, %v2209
  %v2211 = vrot.slane %v2206, %v2210
  %v2219 = vunpack.c.l.b16 %v2200
  %v2220 = vunpack.c.l.b16 %v2201
  %v2221 = vunpack.c.l.b16 %v2202
  %v2222 = vunpack.c.l.b16 %v2203
  %v2223 = vunpack.c.l.b16 %v2204
  %v2224 = vunpack.c.l.b16 %v2205
  %v2225 = vpack.c.b16 %v2220, %v2219
  %v2226 = vpack.c.b16 %v2222, %v2221
  %v2227 = vpack.c.b16 %v2224, %v2223
  %v2232 = vsel %vm273, %v2196, 0
  %v2235 = vsel %vm273, %v2197, 0
  %v2238 = vsel %vm273, %v2198, 0
  %v2241 = vsel %vm273, %v2199, 0
  %2243 = vmatprep.subr.bf16.mxu0 0
  %2244 = vmatpush1.bf16.msra.mxu0 0
  %2245 = vmatprep.subr.bf16.mxu0 0
  %2246 = vmatpush1.bf16.msra.mxu0 0
  %2247 = vmatprep.subr.bf16.mxu0 0
  %2248 = vmatpush1.bf16.msra.mxu0 0
  %2249 = vmatprep.subr.bf16.mxu0 0
  %2250 = vmatpush1.bf16.msra.mxu0 0
  %2251 = vmatprep.subr.bf16.mxu0 0
  %2252 = vmatpush1.bf16.msra.mxu0 0
  %2253 = vmatprep.subr.bf16.mxu0 0
  %2254 = vmatpush1.bf16.msra.mxu0 %v2227
  %2255 = vmatprep.subr.bf16.mxu0 0
  %2256 = vmatpush1.bf16.msra.mxu0 %v2226
  %2257 = vmatprep.subr.bf16.mxu0 0
  %2258 = vmatpush1.bf16.msra.mxu0 %v2225
  %2259 = vmatprep.subr.bf16.mxu0 0
  %2260 = vmatpush2.bf16.msra.mxu0 0
  %2261 = vmatprep.subr.bf16.mxu0 0
  %2262 = vmatpush2.bf16.msra.mxu0 0
  %2263 = vmatprep.subr.bf16.mxu0 0
  %2264 = vmatpush2.bf16.msra.mxu0 0
  %2265 = vmatprep.subr.bf16.mxu0 0
  %2266 = vmatpush2.bf16.msra.mxu0 0
  %2267 = vmatprep.subr.bf16.mxu0 0
  %2268 = vmatpush2.bf16.msra.mxu0 0
  %2269 = vmatprep.subr.bf16.mxu0 0
  %2270 = vmatpush2.bf16.msra.mxu0 0
  %2271 = vmatprep.subr.bf16.mxu0 0
  %2272 = vmatpush2.bf16.msra.mxu0 0
  %2273 = vmatprep.subr.bf16.mxu0 0
  %2274 = vmatpush2.bf16.msra.mxu0 0
  %2275 = vmatprep.mubr.bf16.mxu0 0
  %2276 = vmatmul.mubr.bf16.gmra.mxu0 %v2232
  %v2277 = vpop.f32.mrf.mxu0
  %v2278 = vadd.f32 %v2211, %v2277
  %v2279 = vpop.f32.mrf.mxu0
  %v2280 = vpop.f32.mrf.mxu0
  %v2281 = vadd.f32 %v2211, %v2280
  %v2282 = vpop.f32.mrf.mxu0
  %2283 = vmatprep.mubr.bf16.mxu0 0
  %2284 = vmatmul.mubr.bf16.gmra.mxu0 %v2235
  %v2285 = vpop.f32.mrf.mxu0
  %v2286 = vadd.f32 %v2211, %v2285
  %v2287 = vpop.f32.mrf.mxu0
  %v2288 = vpop.f32.mrf.mxu0
  %v2289 = vadd.f32 %v2211, %v2288
  %v2290 = vpop.f32.mrf.mxu0
  %2291 = vmatprep.mubr.bf16.mxu0 0
  %2292 = vmatmul.mubr.bf16.gmra.mxu0 %v2238
  %v2293 = vpop.f32.mrf.mxu0
  %v2294 = vadd.f32 %v2211, %v2293
  %v2295 = vpop.f32.mrf.mxu0
  %v2296 = vpop.f32.mrf.mxu0
  %v2297 = vadd.f32 %v2211, %v2296
  %v2298 = vpop.f32.mrf.mxu0
  %2299 = vmatprep.mubr.bf16.mxu0 0
  %2300 = vmatmul.mubr.bf16.gmra.mxu0 %v2241
  %v2301 = vpop.f32.mrf.mxu0
  %v2302 = vadd.f32 %v2211, %v2301
  %v2303 = vpop.f32.mrf.mxu0
  %v2304 = vpop.f32.mrf.mxu0
  %v2305 = vadd.f32 %v2211, %v2304
  %v2306 = vpop.f32.mrf.mxu0
  %2307 = vdwg.mxu0
  %v2308 = vxor.u32 %v2278, 2147483648
  %v2309 = vxor.u32 %v2281, 2147483648
  %v2310 = vxor.u32 %v2286, 2147483648
  %v2311 = vxor.u32 %v2289, 2147483648
  %v2312 = vxor.u32 %v2294, 2147483648
  %v2313 = vxor.u32 %v2297, 2147483648
  %v2314 = vxor.u32 %v2302, 2147483648
  %v2315 = vxor.u32 %v2305, 2147483648
  %v2316 = vmul.f32 %v2308, 1.442695
  %v2317 = vpow.pop %v2316
  %v2318 = vmul.f32 %v2309, 1.442695
  %v2319 = vpow.pop %v2318
  %v2320 = vmul.f32 %v2310, 1.442695
  %v2321 = vpow.pop %v2320
  %v2322 = vmul.f32 %v2311, 1.442695
  %v2323 = vpow.pop %v2322
  %v2324 = vmul.f32 %v2312, 1.442695
  %v2325 = vpow.pop %v2324
  %v2326 = vmul.f32 %v2313, 1.442695
  %v2327 = vpow.pop %v2326
  %v2328 = vmul.f32 %v2314, 1.442695
  %v2329 = vpow.pop %v2328
  %v2330 = vmul.f32 %v2315, 1.442695
  %v2331 = vpow.pop %v2330
  %v2332 = vadd.f32 %v2317, 1.0
  %v2333 = vadd.f32 %v2319, 1.0
  %v2334 = vadd.f32 %v2321, 1.0
  %v2335 = vadd.f32 %v2323, 1.0
  %v2336 = vadd.f32 %v2325, 1.0
  %v2337 = vadd.f32 %v2327, 1.0
  %v2338 = vadd.f32 %v2329, 1.0
  %v2339 = vadd.f32 %v2331, 1.0
  %v2340 = vrcp.pop %v2332
  %v2341 = vmul.f32 1.0, %v2340
  %v2342 = vrcp.pop %v2333
  %v2343 = vmul.f32 1.0, %v2342
  %v2344 = vrcp.pop %v2334
  %v2345 = vmul.f32 1.0, %v2344
  %v2346 = vrcp.pop %v2335
  %v2347 = vmul.f32 1.0, %v2346
  %v2348 = vrcp.pop %v2336
  %v2349 = vmul.f32 1.0, %v2348
  %v2350 = vrcp.pop %v2337
  %v2351 = vmul.f32 1.0, %v2350
  %v2352 = vrcp.pop %v2338
  %v2353 = vmul.f32 1.0, %v2352
  %v2354 = vrcp.pop %v2339
  %v2355 = vmul.f32 1.0, %v2354
  %v2356 = vmul.f32 %v2278, %v2341
  %v2357 = vmul.f32 %v2281, %v2343
  %v2358 = vmul.f32 %v2286, %v2345
  %v2359 = vmul.f32 %v2289, %v2347
  %v2360 = vmul.f32 %v2294, %v2349
  %v2361 = vmul.f32 %v2297, %v2351
  %v2362 = vmul.f32 %v2302, %v2353
  %v2363 = vmul.f32 %v2305, %v2355
  %v2364 = vpack.c.bf16 %v2357, %v2356
  %v2365 = vpack.c.bf16 %v2359, %v2358
  %v2366 = vpack.c.bf16 %v2361, %v2360
  %v2367 = vpack.c.bf16 %v2363, %v2362
  %v2368 = vld [vmem:[%s13] sm:$0xf]
  %v2369 = vld [vmem:[%s13 + $0x4] sm:$0xf]
  %v2370 = vld [vmem:[%s13 + $0x8] sm:$0xf]
  %v2371 = vld [vmem:[%s13 + $0xc] sm:$0xf]
  %v2372 = vld [vmem:[%s14] sm:$0x1]
  %v2374 = vlaneseq
  %v2375 = vshrl.u32 %v2374, 7
  %v2376 = vsub.s32 0, %v2375
  %v2377 = vrot.slane %v2372, %v2376
  %v2383 = vunpack.c.l.b16 %v2368
  %v2384 = vunpack.c.l.b16 %v2369
  %v2385 = vunpack.c.l.b16 %v2370
  %v2386 = vunpack.c.l.b16 %v2371
  %v2387 = vpack.c.b16 %v2384, %v2383
  %v2388 = vpack.c.b16 %v2386, %v2385
  %v2392 = vsel %vm434, %v2364, 0
  %v2395 = vsel %vm434, %v2365, 0
  %v2398 = vsel %vm434, %v2366, 0
  %v2401 = vsel %vm434, %v2367, 0
  %2403 = vmatprep.subr.bf16.mxu0 0
  %2404 = vmatpush1.bf16.msra.mxu0 0
  %2405 = vmatprep.subr.bf16.mxu0 0
  %2406 = vmatpush1.bf16.msra.mxu0 0
  %2407 = vmatprep.subr.bf16.mxu0 0
  %2408 = vmatpush1.bf16.msra.mxu0 0
  %2409 = vmatprep.subr.bf16.mxu0 0
  %2410 = vmatpush1.bf16.msra.mxu0 0
  %2411 = vmatprep.subr.bf16.mxu0 0
  %2412 = vmatpush1.bf16.msra.mxu0 0
  %2413 = vmatprep.subr.bf16.mxu0 0
  %2414 = vmatpush1.bf16.msra.mxu0 0
  %2415 = vmatprep.subr.bf16.mxu0 0
  %2416 = vmatpush1.bf16.msra.mxu0 %v2388
  %2417 = vmatprep.subr.bf16.mxu0 0
  %2418 = vmatpush1.bf16.msra.mxu0 %v2387
  %2419 = vmatprep.subr.bf16.mxu0 0
  %2420 = vmatpush2.bf16.msra.mxu0 0
  %2421 = vmatprep.subr.bf16.mxu0 0
  %2422 = vmatpush2.bf16.msra.mxu0 0
  %2423 = vmatprep.subr.bf16.mxu0 0
  %2424 = vmatpush2.bf16.msra.mxu0 0
  %2425 = vmatprep.subr.bf16.mxu0 0
  %2426 = vmatpush2.bf16.msra.mxu0 0
  %2427 = vmatprep.subr.bf16.mxu0 0
  %2428 = vmatpush2.bf16.msra.mxu0 0
  %2429 = vmatprep.subr.bf16.mxu0 0
  %2430 = vmatpush2.bf16.msra.mxu0 0
  %2431 = vmatprep.subr.bf16.mxu0 0
  %2432 = vmatpush2.bf16.msra.mxu0 0
  %2433 = vmatprep.subr.bf16.mxu0 0
  %2434 = vmatpush2.bf16.msra.mxu0 0
  %2435 = vmatprep.mubr.bf16.mxu0 0
  %2436 = vmatmul.mubr.bf16.gmra.mxu0 %v2392
  %v2437 = vpop.f32.mrf.mxu0
  %v2438 = vadd.f32 %v2377, %v2437
  %v2439 = vpop.f32.mrf.mxu0
  %v2440 = vpop.f32.mrf.mxu0
  %v2441 = vadd.f32 %v2377, %v2440
  %v2442 = vpop.f32.mrf.mxu0
  %2443 = vmatprep.mubr.bf16.mxu0 0
  %2444 = vmatmul.mubr.bf16.gmra.mxu0 %v2395
  %v2445 = vpop.f32.mrf.mxu0
  %v2446 = vadd.f32 %v2377, %v2445
  %v2447 = vpop.f32.mrf.mxu0
  %v2448 = vpop.f32.mrf.mxu0
  %v2449 = vadd.f32 %v2377, %v2448
  %v2450 = vpop.f32.mrf.mxu0
  %2451 = vmatprep.mubr.bf16.mxu0 0
  %2452 = vmatmul.mubr.bf16.gmra.mxu0 %v2398
  %v2453 = vpop.f32.mrf.mxu0
  %v2454 = vadd.f32 %v2377, %v2453
  %v2455 = vpop.f32.mrf.mxu0
  %v2456 = vpop.f32.mrf.mxu0
  %v2457 = vadd.f32 %v2377, %v2456
  %v2458 = vpop.f32.mrf.mxu0
  %2459 = vmatprep.mubr.bf16.mxu0 0
  %2460 = vmatmul.mubr.bf16.gmra.mxu0 %v2401
  %v2461 = vpop.f32.mrf.mxu0
  %v2462 = vadd.f32 %v2377, %v2461
  %v2463 = vpop.f32.mrf.mxu0
  %v2464 = vpop.f32.mrf.mxu0
  %v2465 = vadd.f32 %v2377, %v2464
  %v2466 = vpop.f32.mrf.mxu0
  %2467 = vdwg.mxu0
  %v2468 = vsub.f32 %v2438, %v53
  %v2469 = vsub.f32 %v2441, %v54
  %v2470 = vsub.f32 %v2446, %v55
  %v2471 = vsub.f32 %v2449, %v56
  %v2472 = vsub.f32 %v2454, %v57
  %v2473 = vsub.f32 %v2457, %v58
  %v2474 = vsub.f32 %v2462, %v59
  %v2475 = vsub.f32 %v2465, %v60
  %v2476 = vmul.f32 %v2468, %v2468
  %v2477 = vmul.f32 %v2469, %v2469
  %v2478 = vmul.f32 %v2470, %v2470
  %v2479 = vmul.f32 %v2471, %v2471
  %v2480 = vmul.f32 %v2472, %v2472
  %v2481 = vmul.f32 %v2473, %v2473
  %v2482 = vmul.f32 %v2474, %v2474
  %v2483 = vmul.f32 %v2475, %v2475
  %v2484 = vsel %vm104, %v2476, 0.0
  %2485 = vadd.xlane.f32.xlu0 %v2484
  %v2486 = vpop.xlane.xlu0 %2485
  %v2487 = vsel %vm104, %v2477, 0.0
  %2488 = vadd.xlane.f32.xlu0 %v2487
  %v2489 = vpop.xlane.xlu0 %2488
  %v2490 = vsel %vm104, %v2478, 0.0
  %2491 = vadd.xlane.f32.xlu0 %v2490
  %v2492 = vpop.xlane.xlu0 %2491
  %v2493 = vsel %vm104, %v2479, 0.0
  %2494 = vadd.xlane.f32.xlu0 %v2493
  %v2495 = vpop.xlane.xlu0 %2494
  %v2496 = vsel %vm104, %v2480, 0.0
  %2497 = vadd.xlane.f32.xlu0 %v2496
  %v2498 = vpop.xlane.xlu0 %2497
  %v2499 = vsel %vm104, %v2481, 0.0
  %2500 = vadd.xlane.f32.xlu0 %v2499
  %v2501 = vpop.xlane.xlu0 %2500
  %v2502 = vsel %vm104, %v2482, 0.0
  %2503 = vadd.xlane.f32.xlu0 %v2502
  %v2504 = vpop.xlane.xlu0 %2503
  %v2505 = vsel %vm104, %v2483, 0.0
  %2506 = vadd.xlane.f32.xlu0 %v2505
  %v2507 = vpop.xlane.xlu0 %2506
  %v2508 = vmul.f32 %v1993, 1.25
  %v2509 = vmul.f32 %v1994, 1.25
  %v2510 = vmul.f32 %v1995, 1.25
  %v2511 = vmul.f32 %v1996, 1.25
  %v2512 = vmul.f32 %v1997, 1.25
  %v2513 = vmul.f32 %v1998, 1.25
  %v2514 = vmul.f32 %v1999, 1.25
  %v2515 = vmul.f32 %v2000, 1.25
  %v2516 = vadd.f32 %v2486, %v2508
  %v2517 = vadd.f32 %v2489, %v2509
  %v2518 = vadd.f32 %v2492, %v2510
  %v2519 = vadd.f32 %v2495, %v2511
  %v2520 = vadd.f32 %v2498, %v2512
  %v2521 = vadd.f32 %v2501, %v2513
  %v2522 = vadd.f32 %v2504, %v2514
  %v2523 = vadd.f32 %v2507, %v2515
  %2524 = vst.msk [vmem:[%s15] sm:$0xff] %vm2009, %v2516
  %2525 = vst.msk [vmem:[%s15 + $0x8] sm:$0xff] %vm2009, %v2517
  %2526 = vst.msk [vmem:[%s15 + $0x10] sm:$0xff] %vm2009, %v2518
  %2527 = vst.msk [vmem:[%s15 + $0x18] sm:$0xff] %vm2009, %v2519
  %2528 = vst.msk [vmem:[%s15 + $0x20] sm:$0xff] %vm2009, %v2520
  %2529 = vst.msk [vmem:[%s15 + $0x28] sm:$0xff] %vm2009, %v2521
  %2530 = vst.msk [vmem:[%s15 + $0x30] sm:$0xff] %vm2009, %v2522
  %2531 = vst.msk [vmem:[%s15 + $0x38] sm:$0xff] %vm2009, %v2523
  // Predicated region
  $region62: #{tpu_custom_call.1} parent=0 // pred_check
    _
  $region63: #{tpu_custom_call.1} parent=0 // pred_check_branch
    %2533 = sbr.rel (0) target = $region65
  $region64: #{tpu_custom_call.1} parent=0 // pred_region
    _
  $region65: #{tpu_custom_call.1} parent=0 // pred_fallthru
    _
  // Predicated region
  $region66: #{tpu_custom_call.1} parent=0 // pred_check
    _
  $region67: #{tpu_custom_call.1} parent=0 // pred_check_branch
    %2535 = sbr.rel (0) target = $region69
  $region68: #{tpu_custom_call.1} parent=0 // pred_region
    _
  $region69: #{tpu_custom_call.1} parent=0 // pred_fallthru
    _
  // Predicated region
  $region70: #{tpu_custom_call.1} parent=0 // pred_check
    _
  $region71: #{tpu_custom_call.1} parent=0 // pred_check_branch
    %2537 = sbr.rel (0) target = $region73
  $region72: #{tpu_custom_call.1} parent=0 // pred_region
    _
  $region73: #{tpu_custom_call.1} parent=0 // pred_fallthru
    _
  // Predicated region
  $region74: #{tpu_custom_call.1} parent=0 // pred_check
    _
  $region75: #{tpu_custom_call.1} parent=0 // pred_check_branch
    %2539 = sbr.rel (0) target = $region77
  $region76: #{tpu_custom_call.1} parent=0 // pred_region
    _
  $region77: #{tpu_custom_call.1} parent=0 // pred_fallthru
    _

// kernel: tpu_custom_call.1
$region0: #{tpu_custom_call.1}
  #allocation0 [shape = 'u32[]', space=smem, size = 0x4, offset = 0x4, fixed_abs, tag = 'smem constant byte address 0x4 - core index']
  #allocation1 [shape = 'u32[144,128]{1,0:T(1,128)}', space=vmem, size = 0x12000, scoped, tag = 'internal scratch']
  %s0 = inlined_call_operand.vmem [shape: f32[64,64], index: 0, kind: input, shape index: {}]
  %s1 = inlined_call_operand.vmem [shape: bf16[64,48], index: 1, kind: input, shape index: {}]
  %s2 = inlined_call_operand.vmem [shape: f32[1,48], index: 2, kind: input, shape index: {}]
  %s3 = inlined_call_operand.vmem [shape: bf16[48,32], index: 3, kind: input, shape index: {}]
  %s4 = inlined_call_operand.vmem [shape: f32[1,32], index: 4, kind: input, shape index: {}]
  %s5 = inlined_call_operand.vmem [shape: bf16[32,32], index: 5, kind: input, shape index: {}]
  %s6 = inlined_call_operand.vmem [shape: f32[1,32], index: 6, kind: input, shape index: {}]
  %s7 = inlined_call_operand.vmem [shape: f32[3,64,32], index: 7, kind: input, shape index: {}]
  %s8 = inlined_call_operand.vmem [shape: f32[3,1,64], index: 8, kind: input, shape index: {}]
  %s9 = inlined_call_operand.vmem [shape: bf16[32,48], index: 9, kind: input, shape index: {}]
  %s10 = inlined_call_operand.vmem [shape: f32[1,48], index: 10, kind: input, shape index: {}]
  %s11 = inlined_call_operand.vmem [shape: bf16[48,32], index: 11, kind: input, shape index: {}]
  %s12 = inlined_call_operand.vmem [shape: f32[1,32], index: 12, kind: input, shape index: {}]
  %s13 = inlined_call_operand.vmem [shape: bf16[32,64], index: 13, kind: input, shape index: {}]
  %s14 = inlined_call_operand.vmem [shape: f32[1,64], index: 14, kind: input, shape index: {}]
  %s15 = inlined_call_operand.vmem [shape: f32[64,1], index: 15, kind: output, shape index: {0}]
  %s16 = inlined_call_operand.vmem [shape: s32[64,3], index: 16, kind: output, shape index: {1}]
  %17 = xla_tuple %s15, %s16
  %s18 = sld [smem:[#allocation0]]
  $region78: #{tpu_custom_call.1} parent=0
    _
  %s20 = ssub.s32 1, %s18
  %s21 = scalar_select 0, %s20, %s18
  // Predicated region
  $region2: #{tpu_custom_call.1} parent=0 // pred_check
    _
  $region3: #{tpu_custom_call.1} parent=0 // pred_check_branch
    %23 = sbr.rel (0) target = $region5
  $region4: #{tpu_custom_call.1} parent=0 // pred_region
    _
  $region5: #{tpu_custom_call.1} parent=0 // pred_fallthru
    _
  // Predicated region
  $region6: #{tpu_custom_call.1} parent=0 // pred_check
    _
  $region7: #{tpu_custom_call.1} parent=0 // pred_check_branch
    %25 = sbr.rel (0) target = $region9
  $region8: #{tpu_custom_call.1} parent=0 // pred_region
    _
  $region9: #{tpu_custom_call.1} parent=0 // pred_fallthru
    _
  // Predicated region
  $region10: #{tpu_custom_call.1} parent=0 // pred_check
    _
  $region11: #{tpu_custom_call.1} parent=0 // pred_check_branch
    %27 = sbr.rel (0) target = $region13
  $region12: #{tpu_custom_call.1} parent=0 // pred_region
    _
  $region13: #{tpu_custom_call.1} parent=0 // pred_fallthru
    _
  // Predicated region
  $region14: #{tpu_custom_call.1} parent=0 // pred_check
    _
  $region15: #{tpu_custom_call.1} parent=0 // pred_check_branch
    %29 = sbr.rel (0) target = $region17
  $region16: #{tpu_custom_call.1} parent=0 // pred_region
    _
  $region17: #{tpu_custom_call.1} parent=0 // pred_fallthru
    _
  // Predicated region
  $region18: #{tpu_custom_call.1} parent=0 // pred_check
    _
  $region19: #{tpu_custom_call.1} parent=0 // pred_check_branch
    %31 = sbr.rel (0) target = $region21
  $region20: #{tpu_custom_call.1} parent=0 // pred_region
    _
  $region21: #{tpu_custom_call.1} parent=0 // pred_fallthru
    _
  // Predicated region
  $region22: #{tpu_custom_call.1} parent=0 // pred_check
    _
  $region23: #{tpu_custom_call.1} parent=0 // pred_check_branch
    %33 = sbr.rel (0) target = $region25
  $region24: #{tpu_custom_call.1} parent=0 // pred_region
    _
  $region25: #{tpu_custom_call.1} parent=0 // pred_fallthru
    _
  // Predicated region
  $region26: #{tpu_custom_call.1} parent=0 // pred_check
    _
  $region27: #{tpu_custom_call.1} parent=0 // pred_check_branch
    %35 = sbr.rel (0) target = $region29
  $region28: #{tpu_custom_call.1} parent=0 // pred_region
    _
  $region29: #{tpu_custom_call.1} parent=0 // pred_fallthru
    _
  // Predicated region
  $region30: #{tpu_custom_call.1} parent=0 // pred_check
    _
  $region31: #{tpu_custom_call.1} parent=0 // pred_check_branch
    %37 = sbr.rel (0) target = $region33
  $region32: #{tpu_custom_call.1} parent=0 // pred_region
    _
  $region33: #{tpu_custom_call.1} parent=0 // pred_fallthru
    _
  // Predicated region
  $region34: #{tpu_custom_call.1} parent=0 // pred_check
    _
  $region35: #{tpu_custom_call.1} parent=0 // pred_check_branch
    %39 = sbr.rel (0) target = $region37
  $region36: #{tpu_custom_call.1} parent=0 // pred_region
    _
  $region37: #{tpu_custom_call.1} parent=0 // pred_fallthru
    _
  // Predicated region
  $region38: #{tpu_custom_call.1} parent=0 // pred_check
    _
  $region39: #{tpu_custom_call.1} parent=0 // pred_check_branch
    %41 = sbr.rel (0) target = $region41
  $region40: #{tpu_custom_call.1} parent=0 // pred_region
    _
  $region41: #{tpu_custom_call.1} parent=0 // pred_fallthru
    _
  // Predicated region
  $region42: #{tpu_custom_call.1} parent=0 // pred_check
    _
  $region43: #{tpu_custom_call.1} parent=0 // pred_check_branch
    %43 = sbr.rel (0) target = $region45
  $region44: #{tpu_custom_call.1} parent=0 // pred_region
    _
  $region45: #{tpu_custom_call.1} parent=0 // pred_fallthru
    _
  // Predicated region
  $region46: #{tpu_custom_call.1} parent=0 // pred_check
    _
  $region47: #{tpu_custom_call.1} parent=0 // pred_check_branch
    %45 = sbr.rel (0) target = $region49
  $region48: #{tpu_custom_call.1} parent=0 // pred_region
    _
  $region49: #{tpu_custom_call.1} parent=0 // pred_fallthru
    _
  // Predicated region
  $region50: #{tpu_custom_call.1} parent=0 // pred_check
    _
  $region51: #{tpu_custom_call.1} parent=0 // pred_check_branch
    %47 = sbr.rel (0) target = $region53
  $region52: #{tpu_custom_call.1} parent=0 // pred_region
    _
  $region53: #{tpu_custom_call.1} parent=0 // pred_fallthru
    _
  // Predicated region
  $region54: #{tpu_custom_call.1} parent=0 // pred_check
    _
  $region55: #{tpu_custom_call.1} parent=0 // pred_check_branch
    %49 = sbr.rel (0) target = $region57
  $region56: #{tpu_custom_call.1} parent=0 // pred_region
    _
  $region57: #{tpu_custom_call.1} parent=0 // pred_fallthru
    _
  // Predicated region
  $region58: #{tpu_custom_call.1} parent=0 // pred_check
    _
  $region59: #{tpu_custom_call.1} parent=0 // pred_check_branch
    %51 = sbr.rel (0) target = $region61
  $region60: #{tpu_custom_call.1} parent=0 // pred_region
    _
  $region61: #{tpu_custom_call.1} parent=0 // pred_fallthru
    _
  %v53 = vld [vmem:[%s0] sm:$0xff]
  %v54 = vld [vmem:[%s0 + $0x8] sm:$0xff]
  %v55 = vld [vmem:[%s0 + $0x10] sm:$0xff]
  %v56 = vld [vmem:[%s0 + $0x18] sm:$0xff]
  %v57 = vld [vmem:[%s0 + $0x20] sm:$0xff]
  %v58 = vld [vmem:[%s0 + $0x28] sm:$0xff]
  %v59 = vld [vmem:[%s0 + $0x30] sm:$0xff]
  %v60 = vld [vmem:[%s0 + $0x38] sm:$0xff]
  %v61 = vpack.c.bf16 %v54, %v53
  %v62 = vpack.c.bf16 %v56, %v55
  %v63 = vpack.c.bf16 %v58, %v57
  %v64 = vpack.c.bf16 %v60, %v59
  %v65 = vld [vmem:[%s1] sm:$0xf]
  %v66 = vld [vmem:[%s1 + $0x4] sm:$0xf]
  %v67 = vld [vmem:[%s1 + $0x8] sm:$0xf]
  %v68 = vld [vmem:[%s1 + $0xc] sm:$0xf]
  %v69 = vld [vmem:[%s1 + $0x10] sm:$0xf]
  %v70 = vld [vmem:[%s1 + $0x14] sm:$0xf]
  %v71 = vld [vmem:[%s1 + $0x18] sm:$0xf]
  %v72 = vld [vmem:[%s1 + $0x1c] sm:$0xf]
  %v73 = vld [vmem:[%s2] sm:$0x1]
  %v75 = vlaneseq
  %v76 = vshrl.u32 %v75, 7
  %v77 = vsub.s32 0, %v76
  %v78 = vrot.slane %v73, %v77
  %v88 = vunpack.c.l.b16 %v65
  %v89 = vunpack.c.l.b16 %v66
  %v90 = vunpack.c.l.b16 %v67
  %v91 = vunpack.c.l.b16 %v68
  %v92 = vunpack.c.l.b16 %v69
  %v93 = vunpack.c.l.b16 %v70
  %v94 = vunpack.c.l.b16 %v71
  %v95 = vunpack.c.l.b16 %v72
  %v96 = vpack.c.b16 %v89, %v88
  %v97 = vpack.c.b16 %v91, %v90
  %v98 = vpack.c.b16 %v93, %v92
  %v99 = vpack.c.b16 %v95, %v94
  %vm104 = vcmask 523264
  %v106 = vsel %vm104, %v61, 0
  %v109 = vsel %vm104, %v62, 0
  %v112 = vsel %vm104, %v63, 0
  %v115 = vsel %vm104, %v64, 0
  %117 = vmatprep.subr.bf16.mxu0 0
  %118 = vmatpush1.bf16.msra.mxu0 0
  %119 = vmatprep.subr.bf16.mxu0 0
  %120 = vmatpush1.bf16.msra.mxu0 0
  %121 = vmatprep.subr.bf16.mxu0 0
  %122 = vmatpush1.bf16.msra.mxu0 0
  %123 = vmatprep.subr.bf16.mxu0 0
  %124 = vmatpush1.bf16.msra.mxu0 0
  %125 = vmatprep.subr.bf16.mxu0 0
  %126 = vmatpush1.bf16.msra.mxu0 %v99
  %127 = vmatprep.subr.bf16.mxu0 0
  %128 = vmatpush1.bf16.msra.mxu0 %v98
  %129 = vmatprep.subr.bf16.mxu0 0
  %130 = vmatpush1.bf16.msra.mxu0 %v97
  %131 = vmatprep.subr.bf16.mxu0 0
  %132 = vmatpush1.bf16.msra.mxu0 %v96
  %133 = vmatprep.subr.bf16.mxu0 0
  %134 = vmatpush2.bf16.msra.mxu0 0
  %135 = vmatprep.subr.bf16.mxu0 0
  %136 = vmatpush2.bf16.msra.mxu0 0
  %137 = vmatprep.subr.bf16.mxu0 0
  %138 = vmatpush2.bf16.msra.mxu0 0
  %139 = vmatprep.subr.bf16.mxu0 0
  %140 = vmatpush2.bf16.msra.mxu0 0
  %141 = vmatprep.subr.bf16.mxu0 0
  %142 = vmatpush2.bf16.msra.mxu0 0
  %143 = vmatprep.subr.bf16.mxu0 0
  %144 = vmatpush2.bf16.msra.mxu0 0
  %145 = vmatprep.subr.bf16.mxu0 0
  %146 = vmatpush2.bf16.msra.mxu0 0
  %147 = vmatprep.subr.bf16.mxu0 0
  %148 = vmatpush2.bf16.msra.mxu0 0
  %149 = vmatprep.mubr.bf16.mxu0 0
  %150 = vmatmul.mubr.bf16.gmra.mxu0 %v106
  %v151 = vpop.f32.mrf.mxu0
  %v152 = vadd.f32 %v78, %v151
  %v153 = vpop.f32.mrf.mxu0
  %v154 = vpop.f32.mrf.mxu0
  %v155 = vadd.f32 %v78, %v154
  %v156 = vpop.f32.mrf.mxu0
  %157 = vmatprep.mubr.bf16.mxu0 0
  %158 = vmatmul.mubr.bf16.gmra.mxu0 %v109
  %v159 = vpop.f32.mrf.mxu0
  %v160 = vadd.f32 %v78, %v159
  %v161 = vpop.f32.mrf.mxu0
  %v162 = vpop.f32.mrf.mxu0
  %v163 = vadd.f32 %v78, %v162
  %v164 = vpop.f32.mrf.mxu0
  %165 = vmatprep.mubr.bf16.mxu0 0
  %166 = vmatmul.mubr.bf16.gmra.mxu0 %v112
  %v167 = vpop.f32.mrf.mxu0
  %v168 = vadd.f32 %v78, %v167
  %v169 = vpop.f32.mrf.mxu0
  %v170 = vpop.f32.mrf.mxu0
  %v171 = vadd.f32 %v78, %v170
  %v172 = vpop.f32.mrf.mxu0
  %173 = vmatprep.mubr.bf16.mxu0 0
  %174 = vmatmul.mubr.bf16.gmra.mxu0 %v115
  %v175 = vpop.f32.mrf.mxu0
  %v176 = vadd.f32 %v78, %v175
  %v177 = vpop.f32.mrf.mxu0
  %v178 = vpop.f32.mrf.mxu0
  %v179 = vadd.f32 %v78, %v178
  %v180 = vpop.f32.mrf.mxu0
  %181 = vdwg.mxu0
  %v182 = vxor.u32 %v152, 2147483648
  %v183 = vxor.u32 %v155, 2147483648
  %v184 = vxor.u32 %v160, 2147483648
  %v185 = vxor.u32 %v163, 2147483648
  %v186 = vxor.u32 %v168, 2147483648
  %v187 = vxor.u32 %v171, 2147483648
  %v188 = vxor.u32 %v176, 2147483648
  %v189 = vxor.u32 %v179, 2147483648
  %v190 = vmul.f32 %v182, 1.442695
  %v191 = vpow.pop %v190
  %v192 = vmul.f32 %v183, 1.442695
  %v193 = vpow.pop %v192
  %v194 = vmul.f32 %v184, 1.442695
  %v195 = vpow.pop %v194
  %v196 = vmul.f32 %v185, 1.442695
  %v197 = vpow.pop %v196
  %v198 = vmul.f32 %v186, 1.442695
  %v199 = vpow.pop %v198
  %v200 = vmul.f32 %v187, 1.442695
  %v201 = vpow.pop %v200
  %v202 = vmul.f32 %v188, 1.442695
  %v203 = vpow.pop %v202
  %v204 = vmul.f32 %v189, 1.442695
  %v205 = vpow.pop %v204
  %v206 = vadd.f32 %v191, 1.0
  %v207 = vadd.f32 %v193, 1.0
  %v208 = vadd.f32 %v195, 1.0
  %v209 = vadd.f32 %v197, 1.0
  %v210 = vadd.f32 %v199, 1.0
  %v211 = vadd.f32 %v201, 1.0
  %v212 = vadd.f32 %v203, 1.0
  %v213 = vadd.f32 %v205, 1.0
  %v214 = vrcp.pop %v206
  %v215 = vmul.f32 1.0, %v214
  %v216 = vrcp.pop %v207
  %v217 = vmul.f32 1.0, %v216
  %v218 = vrcp.pop %v208
  %v219 = vmul.f32 1.0, %v218
  %v220 = vrcp.pop %v209
  %v221 = vmul.f32 1.0, %v220
  %v222 = vrcp.pop %v210
  %v223 = vmul.f32 1.0, %v222
  %v224 = vrcp.pop %v211
  %v225 = vmul.f32 1.0, %v224
  %v226 = vrcp.pop %v212
  %v227 = vmul.f32 1.0, %v226
  %v228 = vrcp.pop %v213
  %v229 = vmul.f32 1.0, %v228
  %v230 = vmul.f32 %v152, %v215
  %v231 = vmul.f32 %v155, %v217
  %v232 = vmul.f32 %v160, %v219
  %v233 = vmul.f32 %v163, %v221
  %v234 = vmul.f32 %v168, %v223
  %v235 = vmul.f32 %v171, %v225
  %v236 = vmul.f32 %v176, %v227
  %v237 = vmul.f32 %v179, %v229
  %v238 = vpack.c.bf16 %v231, %v230
  %v239 = vpack.c.bf16 %v233, %v232
  %v240 = vpack.c.bf16 %v235, %v234
  %v241 = vpack.c.bf16 %v237, %v236
  %v242 = vld [vmem:[%s3] sm:$0xf]
  %v243 = vld [vmem:[%s3 + $0x4] sm:$0xf]
  %v244 = vld [vmem:[%s3 + $0x8] sm:$0xf]
  %v245 = vld [vmem:[%s3 + $0xc] sm:$0xf]
  %v246 = vld [vmem:[%s3 + $0x10] sm:$0xf]
  %v247 = vld [vmem:[%s3 + $0x14] sm:$0xf]
  %v248 = vld [vmem:[%s4] sm:$0x1]
  %v250 = vlaneseq
  %v251 = vshrl.u32 %v250, 7
  %v252 = vsub.s32 0, %v251
  %v253 = vrot.slane %v248, %v252
  %v261 = vunpack.c.l.b16 %v242
  %v262 = vunpack.c.l.b16 %v243
  %v263 = vunpack.c.l.b16 %v244
  %v264 = vunpack.c.l.b16 %v245
  %v265 = vunpack.c.l.b16 %v246
  %v266 = vunpack.c.l.b16 %v247
  %v267 = vpack.c.b16 %v262, %v261
  %v268 = vpack.c.b16 %v264, %v263
  %v269 = vpack.c.b16 %v266, %v265
  %vm273 = vcmask 392192
  %v275 = vsel %vm273, %v238, 0
  %v278 = vsel %vm273, %v239, 0
  %v281 = vsel %vm273, %v240, 0
  %v284 = vsel %vm273, %v241, 0
  %286 = vmatprep.subr.bf16.mxu0 0
  %287 = vmatpush1.bf16.msra.mxu0 0
  %288 = vmatprep.subr.bf16.mxu0 0
  %289 = vmatpush1.bf16.msra.mxu0 0
  %290 = vmatprep.subr.bf16.mxu0 0
  %291 = vmatpush1.bf16.msra.mxu0 0
  %292 = vmatprep.subr.bf16.mxu0 0
  %293 = vmatpush1.bf16.msra.mxu0 0
  %294 = vmatprep.subr.bf16.mxu0 0
  %295 = vmatpush1.bf16.msra.mxu0 0
  %296 = vmatprep.subr.bf16.mxu0 0
  %297 = vmatpush1.bf16.msra.mxu0 %v269
  %298 = vmatprep.subr.bf16.mxu0 0
  %299 = vmatpush1.bf16.msra.mxu0 %v268
  %300 = vmatprep.subr.bf16.mxu0 0
  %301 = vmatpush1.bf16.msra.mxu0 %v267
  %302 = vmatprep.subr.bf16.mxu0 0
  %303 = vmatpush2.bf16.msra.mxu0 0
  %304 = vmatprep.subr.bf16.mxu0 0
  %305 = vmatpush2.bf16.msra.mxu0 0
  %306 = vmatprep.subr.bf16.mxu0 0
  %307 = vmatpush2.bf16.msra.mxu0 0
  %308 = vmatprep.subr.bf16.mxu0 0
  %309 = vmatpush2.bf16.msra.mxu0 0
  %310 = vmatprep.subr.bf16.mxu0 0
  %311 = vmatpush2.bf16.msra.mxu0 0
  %312 = vmatprep.subr.bf16.mxu0 0
  %313 = vmatpush2.bf16.msra.mxu0 0
  %314 = vmatprep.subr.bf16.mxu0 0
  %315 = vmatpush2.bf16.msra.mxu0 0
  %316 = vmatprep.subr.bf16.mxu0 0
  %317 = vmatpush2.bf16.msra.mxu0 0
  %318 = vmatprep.mubr.bf16.mxu0 0
  %319 = vmatmul.mubr.bf16.gmra.mxu0 %v275
  %v320 = vpop.f32.mrf.mxu0
  %v321 = vadd.f32 %v253, %v320
  %v322 = vpop.f32.mrf.mxu0
  %v323 = vpop.f32.mrf.mxu0
  %v324 = vadd.f32 %v253, %v323
  %v325 = vpop.f32.mrf.mxu0
  %326 = vmatprep.mubr.bf16.mxu0 0
  %327 = vmatmul.mubr.bf16.gmra.mxu0 %v278
  %v328 = vpop.f32.mrf.mxu0
  %v329 = vadd.f32 %v253, %v328
  %v330 = vpop.f32.mrf.mxu0
  %v331 = vpop.f32.mrf.mxu0
  %v332 = vadd.f32 %v253, %v331
  %v333 = vpop.f32.mrf.mxu0
  %334 = vmatprep.mubr.bf16.mxu0 0
  %335 = vmatmul.mubr.bf16.gmra.mxu0 %v281
  %v336 = vpop.f32.mrf.mxu0
  %v337 = vadd.f32 %v253, %v336
  %v338 = vpop.f32.mrf.mxu0
  %v339 = vpop.f32.mrf.mxu0
  %v340 = vadd.f32 %v253, %v339
  %v341 = vpop.f32.mrf.mxu0
  %342 = vmatprep.mubr.bf16.mxu0 0
  %343 = vmatmul.mubr.bf16.gmra.mxu0 %v284
  %v344 = vpop.f32.mrf.mxu0
  %v345 = vadd.f32 %v253, %v344
  %v346 = vpop.f32.mrf.mxu0
  %v347 = vpop.f32.mrf.mxu0
  %v348 = vadd.f32 %v253, %v347
  %v349 = vpop.f32.mrf.mxu0
  %350 = vdwg.mxu0
  %v351 = vxor.u32 %v321, 2147483648
  %v352 = vxor.u32 %v324, 2147483648
  %v353 = vxor.u32 %v329, 2147483648
  %v354 = vxor.u32 %v332, 2147483648
  %v355 = vxor.u32 %v337, 2147483648
  %v356 = vxor.u32 %v340, 2147483648
  %v357 = vxor.u32 %v345, 2147483648
  %v358 = vxor.u32 %v348, 2147483648
  %v359 = vmul.f32 %v351, 1.442695
  %v360 = vpow.pop %v359
  %v361 = vmul.f32 %v352, 1.442695
  %v362 = vpow.pop %v361
  %v363 = vmul.f32 %v353, 1.442695
  %v364 = vpow.pop %v363
  %v365 = vmul.f32 %v354, 1.442695
  %v366 = vpow.pop %v365
  %v367 = vmul.f32 %v355, 1.442695
  %v368 = vpow.pop %v367
  %v369 = vmul.f32 %v356, 1.442695
  %v370 = vpow.pop %v369
  %v371 = vmul.f32 %v357, 1.442695
  %v372 = vpow.pop %v371
  %v373 = vmul.f32 %v358, 1.442695
  %v374 = vpow.pop %v373
  %v375 = vadd.f32 %v360, 1.0
  %v376 = vadd.f32 %v362, 1.0
  %v377 = vadd.f32 %v364, 1.0
  %v378 = vadd.f32 %v366, 1.0
  %v379 = vadd.f32 %v368, 1.0
  %v380 = vadd.f32 %v370, 1.0
  %v381 = vadd.f32 %v372, 1.0
  %v382 = vadd.f32 %v374, 1.0
  %v383 = vrcp.pop %v375
  %v384 = vmul.f32 1.0, %v383
  %v385 = vrcp.pop %v376
  %v386 = vmul.f32 1.0, %v385
  %v387 = vrcp.pop %v377
  %v388 = vmul.f32 1.0, %v387
  %v389 = vrcp.pop %v378
  %v390 = vmul.f32 1.0, %v389
  %v391 = vrcp.pop %v379
  %v392 = vmul.f32 1.0, %v391
  %v393 = vrcp.pop %v380
  %v394 = vmul.f32 1.0, %v393
  %v395 = vrcp.pop %v381
  %v396 = vmul.f32 1.0, %v395
  %v397 = vrcp.pop %v382
  %v398 = vmul.f32 1.0, %v397
  %v399 = vmul.f32 %v321, %v384
  %v400 = vmul.f32 %v324, %v386
  %v401 = vmul.f32 %v329, %v388
  %v402 = vmul.f32 %v332, %v390
  %v403 = vmul.f32 %v337, %v392
  %v404 = vmul.f32 %v340, %v394
  %v405 = vmul.f32 %v345, %v396
  %v406 = vmul.f32 %v348, %v398
  %v407 = vpack.c.bf16 %v400, %v399
  %v408 = vpack.c.bf16 %v402, %v401
  %v409 = vpack.c.bf16 %v404, %v403
  %v410 = vpack.c.bf16 %v406, %v405
  %v411 = vld [vmem:[%s5] sm:$0xf]
  %v412 = vld [vmem:[%s5 + $0x4] sm:$0xf]
  %v413 = vld [vmem:[%s5 + $0x8] sm:$0xf]
  %v414 = vld [vmem:[%s5 + $0xc] sm:$0xf]
  %v415 = vld [vmem:[%s6] sm:$0x1]
  %v417 = vlaneseq
  %v418 = vshrl.u32 %v417, 7
  %v419 = vsub.s32 0, %v418
  %v420 = vrot.slane %v415, %v419
  %v426 = vunpack.c.l.b16 %v411
  %v427 = vunpack.c.l.b16 %v412
  %v428 = vunpack.c.l.b16 %v413
  %v429 = vunpack.c.l.b16 %v414
  %v430 = vpack.c.b16 %v427, %v426
  %v431 = vpack.c.b16 %v429, %v428
  %vm434 = vcmask 261120
  %v436 = vsel %vm434, %v407, 0
  %v439 = vsel %vm434, %v408, 0
  %v442 = vsel %vm434, %v409, 0
  %v445 = vsel %vm434, %v410, 0
  %447 = vmatprep.subr.bf16.mxu0 0
  %448 = vmatpush1.bf16.msra.mxu0 0
  %449 = vmatprep.subr.bf16.mxu0 0
  %450 = vmatpush1.bf16.msra.mxu0 0
  %451 = vmatprep.subr.bf16.mxu0 0
  %452 = vmatpush1.bf16.msra.mxu0 0
  %453 = vmatprep.subr.bf16.mxu0 0
  %454 = vmatpush1.bf16.msra.mxu0 0
  %455 = vmatprep.subr.bf16.mxu0 0
  %456 = vmatpush1.bf16.msra.mxu0 0
  %457 = vmatprep.subr.bf16.mxu0 0
  %458 = vmatpush1.bf16.msra.mxu0 0
  %459 = vmatprep.subr.bf16.mxu0 0
  %460 = vmatpush1.bf16.msra.mxu0 %v431
  %461 = vmatprep.subr.bf16.mxu0 0
  %462 = vmatpush1.bf16.msra.mxu0 %v430
  %463 = vmatprep.subr.bf16.mxu0 0
  %464 = vmatpush2.bf16.msra.mxu0 0
  %465 = vmatprep.subr.bf16.mxu0 0
  %466 = vmatpush2.bf16.msra.mxu0 0
  %467 = vmatprep.subr.bf16.mxu0 0
  %468 = vmatpush2.bf16.msra.mxu0 0
  %469 = vmatprep.subr.bf16.mxu0 0
  %470 = vmatpush2.bf16.msra.mxu0 0
  %471 = vmatprep.subr.bf16.mxu0 0
  %472 = vmatpush2.bf16.msra.mxu0 0
  %473 = vmatprep.subr.bf16.mxu0 0
  %474 = vmatpush2.bf16.msra.mxu0 0
  %475 = vmatprep.subr.bf16.mxu0 0
  %476 = vmatpush2.bf16.msra.mxu0 0
  %477 = vmatprep.subr.bf16.mxu0 0
  %478 = vmatpush2.bf16.msra.mxu0 0
  %479 = vmatprep.mubr.bf16.mxu0 0
  %480 = vmatmul.mubr.bf16.gmra.mxu0 %v436
  %v481 = vpop.f32.mrf.mxu0
  %v482 = vadd.f32 %v420, %v481
  %v483 = vpop.f32.mrf.mxu0
  %v484 = vpop.f32.mrf.mxu0
  %v485 = vadd.f32 %v420, %v484
  %v486 = vpop.f32.mrf.mxu0
  %487 = vmatprep.mubr.bf16.mxu0 0
  %488 = vmatmul.mubr.bf16.gmra.mxu0 %v439
  %v489 = vpop.f32.mrf.mxu0
  %v490 = vadd.f32 %v420, %v489
  %v491 = vpop.f32.mrf.mxu0
  %v492 = vpop.f32.mrf.mxu0
  %v493 = vadd.f32 %v420, %v492
  %v494 = vpop.f32.mrf.mxu0
  %495 = vmatprep.mubr.bf16.mxu0 0
  %496 = vmatmul.mubr.bf16.gmra.mxu0 %v442
  %v497 = vpop.f32.mrf.mxu0
  %v498 = vadd.f32 %v420, %v497
  %v499 = vpop.f32.mrf.mxu0
  %v500 = vpop.f32.mrf.mxu0
  %v501 = vadd.f32 %v420, %v500
  %v502 = vpop.f32.mrf.mxu0
  %503 = vmatprep.mubr.bf16.mxu0 0
  %504 = vmatmul.mubr.bf16.gmra.mxu0 %v445
  %v505 = vpop.f32.mrf.mxu0
  %v506 = vadd.f32 %v420, %v505
  %v507 = vpop.f32.mrf.mxu0
  %v508 = vpop.f32.mrf.mxu0
  %v509 = vadd.f32 %v420, %v508
  %v510 = vpop.f32.mrf.mxu0
  %511 = vdwg.mxu0
  %v512 = vlaneseq
  %v513 = vand.u32 %v512, 127
  %v514 = vld [vmem:[%s7] sm:$0xff]
  %v515 = vld [vmem:[%s7 + $0x8] sm:$0xff]
  %v516 = vld [vmem:[%s7 + $0x10] sm:$0xff]
  %v517 = vld [vmem:[%s7 + $0x18] sm:$0xff]
  %v518 = vld [vmem:[%s7 + $0x20] sm:$0xff]
  %v519 = vld [vmem:[%s7 + $0x28] sm:$0xff]
  %v520 = vld [vmem:[%s7 + $0x30] sm:$0xff]
  %v521 = vld [vmem:[%s7 + $0x38] sm:$0xff]
  %v522 = vpack.c.bf16 %v485, %v482
  %v523 = vpack.c.bf16 %v493, %v490
  %v524 = vpack.c.bf16 %v501, %v498
  %v525 = vpack.c.bf16 %v509, %v506
  %v526 = vpack.c.bf16 %v515, %v514
  %v527 = vpack.c.bf16 %v517, %v516
  %v528 = vpack.c.bf16 %v519, %v518
  %v529 = vpack.c.bf16 %v521, %v520
  %v531 = vsel %vm434, %v522, 0
  %v534 = vsel %vm434, %v523, 0
  %v537 = vsel %vm434, %v524, 0
  %v540 = vsel %vm434, %v525, 0
  %v543 = vsel %vm434, %v526, 0
  %v546 = vsel %vm434, %v527, 0
  %v549 = vsel %vm434, %v528, 0
  %v552 = vsel %vm434, %v529, 0
  %554 = vmatprep.subr.bf16.mxu0 0
  %555 = vmatpush1.bf16.xpose.msra.mxu0 0
  %556 = vmatprep.subr.bf16.mxu0 0
  %557 = vmatpush1.bf16.xpose.msra.mxu0 0
  %558 = vmatprep.subr.bf16.mxu0 0
  %559 = vmatpush1.bf16.xpose.msra.mxu0 0
  %560 = vmatprep.subr.bf16.mxu0 0
  %561 = vmatpush1.bf16.xpose.msra.mxu0 0
  %562 = vmatprep.subr.bf16.mxu0 0
  %563 = vmatpush1.bf16.xpose.msra.mxu0 %v552
  %564 = vmatprep.subr.bf16.mxu0 0
  %565 = vmatpush1.bf16.xpose.msra.mxu0 %v549
  %566 = vmatprep.subr.bf16.mxu0 0
  %567 = vmatpush1.bf16.xpose.msra.mxu0 %v546
  %568 = vmatprep.subr.bf16.mxu0 0
  %569 = vmatpush1.bf16.xpose.msra.mxu0 %v543
  %570 = vmatprep.subr.bf16.mxu0 0
  %571 = vmatpush2.bf16.xpose.msra.mxu0 0
  %572 = vmatprep.subr.bf16.mxu0 0
  %573 = vmatpush2.bf16.xpose.msra.mxu0 0
  %574 = vmatprep.subr.bf16.mxu0 0
  %575 = vmatpush2.bf16.xpose.msra.mxu0 0
  %576 = vmatprep.subr.bf16.mxu0 0
  %577 = vmatpush2.bf16.xpose.msra.mxu0 0
  %578 = vmatprep.subr.bf16.mxu0 0
  %579 = vmatpush2.bf16.xpose.msra.mxu0 0
  %580 = vmatprep.subr.bf16.mxu0 0
  %581 = vmatpush2.bf16.xpose.msra.mxu0 0
  %582 = vmatprep.subr.bf16.mxu0 0
  %583 = vmatpush2.bf16.xpose.msra.mxu0 0
  %584 = vmatprep.subr.bf16.mxu0 0
  %585 = vmatpush2.bf16.xpose.msra.mxu0 0
  %586 = vmatprep.mubr.bf16.mxu0 0
  %587 = vmatmul.mubr.bf16.gmra.mxu0 %v531
  %v588 = vpop.f32.mrf.mxu0
  %v589 = vadd.f32 0.0, %v588
  %v590 = vpop.f32.mrf.mxu0
  %v591 = vpop.f32.mrf.mxu0
  %v592 = vadd.f32 0.0, %v591
  %v593 = vpop.f32.mrf.mxu0
  %594 = vmatprep.mubr.bf16.mxu0 0
  %595 = vmatmul.mubr.bf16.gmra.mxu0 %v534
  %v596 = vpop.f32.mrf.mxu0
  %v597 = vadd.f32 0.0, %v596
  %v598 = vpop.f32.mrf.mxu0
  %v599 = vpop.f32.mrf.mxu0
  %v600 = vadd.f32 0.0, %v599
  %v601 = vpop.f32.mrf.mxu0
  %602 = vmatprep.mubr.bf16.mxu0 0
  %603 = vmatmul.mubr.bf16.gmra.mxu0 %v537
  %v604 = vpop.f32.mrf.mxu0
  %v605 = vadd.f32 0.0, %v604
  %v606 = vpop.f32.mrf.mxu0
  %v607 = vpop.f32.mrf.mxu0
  %v608 = vadd.f32 0.0, %v607
  %v609 = vpop.f32.mrf.mxu0
  %610 = vmatprep.mubr.bf16.mxu0 0
  %611 = vmatmul.mubr.bf16.gmra.mxu0 %v540
  %v612 = vpop.f32.mrf.mxu0
  %v613 = vadd.f32 0.0, %v612
  %v614 = vpop.f32.mrf.mxu0
  %v615 = vpop.f32.mrf.mxu0
  %v616 = vadd.f32 0.0, %v615
  %v617 = vpop.f32.mrf.mxu0
  %618 = vdwg.mxu0
  %v619 = vld [vmem:[%s8] sm:$0x1]
  %v620 = vmul.f32 %v589, 2.0
  %v621 = vmul.f32 %v592, 2.0
  %v622 = vmul.f32 %v597, 2.0
  %v623 = vmul.f32 %v600, 2.0
  %v624 = vmul.f32 %v605, 2.0
  %v625 = vmul.f32 %v608, 2.0
  %v626 = vmul.f32 %v613, 2.0
  %v627 = vmul.f32 %v616, 2.0
  %v629 = vlaneseq
  %v630 = vshrl.u32 %v629, 7
  %v631 = vsub.s32 0, %v630
  %v632 = vrot.slane %v619, %v631
  %v634 = vsub.f32 %v632, %v620
  %v635 = vsub.f32 %v632, %v621
  %v636 = vsub.f32 %v632, %v622
  %v637 = vsub.f32 %v632, %v623
  %v638 = vsub.f32 %v632, %v624
  %v639 = vsub.f32 %v632, %v625
  %v640 = vsub.f32 %v632, %v626
  %v641 = vsub.f32 %v632, %v627
  %v642 = vsel %vm104, %v634, inf
  %643 = vmin.xlane.f32.xlu0 %v642
  %v644 = vpop.xlane.xlu0 %643
  %v645 = vsel %vm104, %v635, inf
  %646 = vmin.xlane.f32.xlu0 %v645
  %v647 = vpop.xlane.xlu0 %646
  %v648 = vsel %vm104, %v636, inf
  %649 = vmin.xlane.f32.xlu0 %v648
  %v650 = vpop.xlane.xlu0 %649
  %v651 = vsel %vm104, %v637, inf
  %652 = vmin.xlane.f32.xlu0 %v651
  %v653 = vpop.xlane.xlu0 %652
  %v654 = vsel %vm104, %v638, inf
  %655 = vmin.xlane.f32.xlu0 %v654
  %v656 = vpop.xlane.xlu0 %655
  %v657 = vsel %vm104, %v639, inf
  %658 = vmin.xlane.f32.xlu0 %v657
  %v659 = vpop.xlane.xlu0 %658
  %v660 = vsel %vm104, %v640, inf
  %661 = vmin.xlane.f32.xlu0 %v660
  %v662 = vpop.xlane.xlu0 %661
  %v663 = vsel %vm104, %v641, inf
  %664 = vmin.xlane.f32.xlu0 %v663
  %v665 = vpop.xlane.xlu0 %664
  %vm666 = vcmp.le.f32.partialorder %v634, %v644
  %vm667 = vcmp.le.f32.partialorder %v635, %v647
  %vm668 = vcmp.le.f32.partialorder %v636, %v650
  %vm669 = vcmp.le.f32.partialorder %v637, %v653
  %vm670 = vcmp.le.f32.partialorder %v638, %v656
  %vm671 = vcmp.le.f32.partialorder %v639, %v659
  %vm672 = vcmp.le.f32.partialorder %v640, %v662
  %vm673 = vcmp.le.f32.partialorder %v641, %v665
  %v674 = vsel %vm666, %v513, 64
  %v675 = vsel %vm667, %v513, 64
  %v676 = vsel %vm668, %v513, 64
  %v677 = vsel %vm669, %v513, 64
  %v678 = vsel %vm670, %v513, 64
  %v679 = vsel %vm671, %v513, 64
  %v680 = vsel %vm672, %v513, 64
  %v681 = vsel %vm673, %v513, 64
  %v682 = vsel %vm104, %v674, 2147483647
  %v683 = vand.u32 %v682, 65535
  %v684 = vshra.s32 %v682, 16
  %v685 = vcvt.s32.f32 %v683
  %v686 = vcvt.s32.f32 %v684
  %687 = vmin.xlane.f32.xlu0 %v686
  %v688 = vpop.xlane.xlu0 %687
  %vm689 = vcmp.eq.f32.partialorder %v686, %v688
  %v690 = vsel %vm689, %v685, inf
  %691 = vmin.xlane.f32.xlu0 %v690
  %v692 = vpop.xlane.xlu0 %691
  %v693 = vcvt.f32.s32 %v692
  %v694 = vcvt.f32.s32 %v688
  %v695 = vshll.u32 %v694, 16
  %v696 = vadd.s32 %v695, %v693
  %v697 = vsel %vm104, %v675, 2147483647
  %v698 = vand.u32 %v697, 65535
  %v699 = vshra.s32 %v697, 16
  %v700 = vcvt.s32.f32 %v698
  %v701 = vcvt.s32.f32 %v699
  %702 = vmin.xlane.f32.xlu0 %v701
  %v703 = vpop.xlane.xlu0 %702
  %vm704 = vcmp.eq.f32.partialorder %v701, %v703
  %v705 = vsel %vm704, %v700, inf
  %706 = vmin.xlane.f32.xlu0 %v705
  %v707 = vpop.xlane.xlu0 %706
  %v708 = vcvt.f32.s32 %v707
  %v709 = vcvt.f32.s32 %v703
  %v710 = vshll.u32 %v709, 16
  %v711 = vadd.s32 %v710, %v708
  %v712 = vsel %vm104, %v676, 2147483647
  %v713 = vand.u32 %v712, 65535
  %v714 = vshra.s32 %v712, 16
  %v715 = vcvt.s32.f32 %v713
  %v716 = vcvt.s32.f32 %v714
  %717 = vmin.xlane.f32.xlu0 %v716
  %v718 = vpop.xlane.xlu0 %717
  %vm719 = vcmp.eq.f32.partialorder %v716, %v718
  %v720 = vsel %vm719, %v715, inf
  %721 = vmin.xlane.f32.xlu0 %v720
  %v722 = vpop.xlane.xlu0 %721
  %v723 = vcvt.f32.s32 %v722
  %v724 = vcvt.f32.s32 %v718
  %v725 = vshll.u32 %v724, 16
  %v726 = vadd.s32 %v725, %v723
  %v727 = vsel %vm104, %v677, 2147483647
  %v728 = vand.u32 %v727, 65535
  %v729 = vshra.s32 %v727, 16
  %v730 = vcvt.s32.f32 %v728
  %v731 = vcvt.s32.f32 %v729
  %732 = vmin.xlane.f32.xlu0 %v731
  %v733 = vpop.xlane.xlu0 %732
  %vm734 = vcmp.eq.f32.partialorder %v731, %v733
  %v735 = vsel %vm734, %v730, inf
  %736 = vmin.xlane.f32.xlu0 %v735
  %v737 = vpop.xlane.xlu0 %736
  %v738 = vcvt.f32.s32 %v737
  %v739 = vcvt.f32.s32 %v733
  %v740 = vshll.u32 %v739, 16
  %v741 = vadd.s32 %v740, %v738
  %v742 = vsel %vm104, %v678, 2147483647
  %v743 = vand.u32 %v742, 65535
  %v744 = vshra.s32 %v742, 16
  %v745 = vcvt.s32.f32 %v743
  %v746 = vcvt.s32.f32 %v744
  %747 = vmin.xlane.f32.xlu0 %v746
  %v748 = vpop.xlane.xlu0 %747
  %vm749 = vcmp.eq.f32.partialorder %v746, %v748
  %v750 = vsel %vm749, %v745, inf
  %751 = vmin.xlane.f32.xlu0 %v750
  %v752 = vpop.xlane.xlu0 %751
  %v753 = vcvt.f32.s32 %v752
  %v754 = vcvt.f32.s32 %v748
  %v755 = vshll.u32 %v754, 16
  %v756 = vadd.s32 %v755, %v753
  %v757 = vsel %vm104, %v679, 2147483647
  %v758 = vand.u32 %v757, 65535
  %v759 = vshra.s32 %v757, 16
  %v760 = vcvt.s32.f32 %v758
  %v761 = vcvt.s32.f32 %v759
  %762 = vmin.xlane.f32.xlu0 %v761
  %v763 = vpop.xlane.xlu0 %762
  %vm764 = vcmp.eq.f32.partialorder %v761, %v763
  %v765 = vsel %vm764, %v760, inf
  %766 = vmin.xlane.f32.xlu0 %v765
  %v767 = vpop.xlane.xlu0 %766
  %v768 = vcvt.f32.s32 %v767
  %v769 = vcvt.f32.s32 %v763
  %v770 = vshll.u32 %v769, 16
  %v771 = vadd.s32 %v770, %v768
  %v772 = vsel %vm104, %v680, 2147483647
  %v773 = vand.u32 %v772, 65535
  %v774 = vshra.s32 %v772, 16
  %v775 = vcvt.s32.f32 %v773
  %v776 = vcvt.s32.f32 %v774
  %777 = vmin.xlane.f32.xlu0 %v776
  %v778 = vpop.xlane.xlu0 %777
  %vm779 = vcmp.eq.f32.partialorder %v776, %v778
  %v780 = vsel %vm779, %v775, inf
  %781 = vmin.xlane.f32.xlu0 %v780
  %v782 = vpop.xlane.xlu0 %781
  %v783 = vcvt.f32.s32 %v782
  %v784 = vcvt.f32.s32 %v778
  %v785 = vshll.u32 %v784, 16
  %v786 = vadd.s32 %v785, %v783
  %v787 = vsel %vm104, %v681, 2147483647
  %v788 = vand.u32 %v787, 65535
  %v789 = vshra.s32 %v787, 16
  %v790 = vcvt.s32.f32 %v788
  %v791 = vcvt.s32.f32 %v789
  %792 = vmin.xlane.f32.xlu0 %v791
  %v793 = vpop.xlane.xlu0 %792
  %vm794 = vcmp.eq.f32.partialorder %v791, %v793
  %v795 = vsel %vm794, %v790, inf
  %796 = vmin.xlane.f32.xlu0 %v795
  %v797 = vpop.xlane.xlu0 %796
  %v798 = vcvt.f32.s32 %v797
  %v799 = vcvt.f32.s32 %v793
  %v800 = vshll.u32 %v799, 16
  %v801 = vadd.s32 %v800, %v798
  %vm802 = vcmp.eq.s32.totalorder %v696, %v513
  %vm803 = vcmp.eq.s32.totalorder %v711, %v513
  %vm804 = vcmp.eq.s32.totalorder %v726, %v513
  %vm805 = vcmp.eq.s32.totalorder %v741, %v513
  %vm806 = vcmp.eq.s32.totalorder %v756, %v513
  %vm807 = vcmp.eq.s32.totalorder %v771, %v513
  %vm808 = vcmp.eq.s32.totalorder %v786, %v513
  %vm809 = vcmp.eq.s32.totalorder %v801, %v513
  %v810 = vsel %vm802, 1, 0
  %v811 = vsel %vm803, 1, 0
  %v812 = vsel %vm804, 1, 0
  %v813 = vsel %vm805, 1, 0
  %v814 = vsel %vm806, 1, 0
  %v815 = vsel %vm807, 1, 0
  %v816 = vsel %vm808, 1, 0
  %v817 = vsel %vm809, 1, 0
  %v818 = vcvt.s32.f32 %v810
  %v819 = vcvt.s32.f32 %v811
  %v820 = vcvt.s32.f32 %v812
  %v821 = vcvt.s32.f32 %v813
  %v822 = vcvt.s32.f32 %v814
  %v823 = vcvt.s32.f32 %v815
  %v824 = vcvt.s32.f32 %v816
  %v825 = vcvt.s32.f32 %v817
  %v827 = vsel %vm104, %v818, 0
  %v830 = vsel %vm104, %v819, 0
  %v833 = vsel %vm104, %v820, 0
  %v836 = vsel %vm104, %v821, 0
  %v839 = vsel %vm104, %v822, 0
  %v842 = vsel %vm104, %v823, 0
  %v845 = vsel %vm104, %v824, 0
  %v848 = vsel %vm104, %v825, 0
  %850 = vmatprep.subr.mxu0 0.0
  %851 = vmatpush1.msra.mxu0 0.0
  %852 = vmatprep.subr.mxu0 0.0
  %853 = vmatpush1.msra.mxu0 0.0
  %854 = vmatprep.subr.mxu0 0.0
  %855 = vmatpush1.msra.mxu0 0.0
  %856 = vmatprep.subr.mxu0 0.0
  %857 = vmatpush1.msra.mxu0 0.0
  %858 = vmatprep.subr.mxu0 0.0
  %859 = vmatpush1.msra.mxu0 0.0
  %860 = vmatprep.subr.mxu0 0.0
  %861 = vmatpush1.msra.mxu0 0.0
  %862 = vmatprep.subr.mxu0 0.0
  %863 = vmatpush1.msra.mxu0 0.0
  %864 = vmatprep.subr.mxu0 0.0
  %865 = vmatpush1.msra.mxu0 0.0
  %866 = vmatprep.subr.mxu0 0.0
  %867 = vmatpush1.msra.mxu0 %v521
  %868 = vmatprep.subr.mxu0 0.0
  %869 = vmatpush1.msra.mxu0 %v520
  %870 = vmatprep.subr.mxu0 0.0
  %871 = vmatpush1.msra.mxu0 %v519
  %872 = vmatprep.subr.mxu0 0.0
  %873 = vmatpush1.msra.mxu0 %v518
  %874 = vmatprep.subr.mxu0 0.0
  %875 = vmatpush1.msra.mxu0 %v517
  %876 = vmatprep.subr.mxu0 0.0
  %877 = vmatpush1.msra.mxu0 %v516
  %878 = vmatprep.subr.mxu0 0.0
  %879 = vmatpush1.msra.mxu0 %v515
  %880 = vmatprep.subr.mxu0 0.0
  %881 = vmatpush1.msra.mxu0 %v514
  %882 = vmatprep.subr.mxu0 0.0
  %883 = vmatpush2.msra.mxu0 0.0
  %884 = vmatprep.subr.mxu0 0.0
  %885 = vmatpush2.msra.mxu0 0.0
  %886 = vmatprep.subr.mxu0 0.0
  %887 = vmatpush2.msra.mxu0 0.0
  %888 = vmatprep.subr.mxu0 0.0
  %889 = vmatpush2.msra.mxu0 0.0
  %890 = vmatprep.subr.mxu0 0.0
  %891 = vmatpush2.msra.mxu0 0.0
  %892 = vmatprep.subr.mxu0 0.0
  %893 = vmatpush2.msra.mxu0 0.0
  %894 = vmatprep.subr.mxu0 0.0
  %895 = vmatpush2.msra.mxu0 0.0
  %896 = vmatprep.subr.mxu0 0.0
  %897 = vmatpush2.msra.mxu0 0.0
  %898 = vmatprep.subr.mxu0 0.0
  %899 = vmatpush2.msra.mxu0 0.0
  %900 = vmatprep.subr.mxu0 0.0
  %901 = vmatpush2.msra.mxu0 0.0
  %902 = vmatprep.subr.mxu0 0.0
  %903 = vmatpush2.msra.mxu0 0.0
  %904 = vmatprep.subr.mxu0 0.0
  %905 = vmatpush2.msra.mxu0 0.0
  %906 = vmatprep.subr.mxu0 0.0
  %907 = vmatpush2.msra.mxu0 0.0
  %908 = vmatprep.subr.mxu0 0.0
  %909 = vmatpush2.msra.mxu0 0.0
  %910 = vmatprep.subr.mxu0 0.0
  %911 = vmatpush2.msra.mxu0 0.0
  %912 = vmatprep.subr.mxu0 0.0
  %913 = vmatpush2.msra.mxu0 0.0
  %914 = vmatprep.mubr.f32.mxu0 0.0
  %915 = vmatmul.mubr.f32.gmra.mxu0 %v827
  %v916 = vpop.f32.mrf.mxu0
  %v917 = vadd.f32 0.0, %v916
  %v918 = vpop.f32.mrf.mxu0
  %919 = vmatprep.mubr.f32.mxu0 0.0
  %920 = vmatmul.mubr.f32.gmra.mxu0 %v830
  %v921 = vpop.f32.mrf.mxu0
  %v922 = vadd.f32 0.0, %v921
  %v923 = vpop.f32.mrf.mxu0
  %924 = vmatprep.mubr.f32.mxu0 0.0
  %925 = vmatmul.mubr.f32.gmra.mxu0 %v833
  %v926 = vpop.f32.mrf.mxu0
  %v927 = vadd.f32 0.0, %v926
  %v928 = vpop.f32.mrf.mxu0
  %929 = vmatprep.mubr.f32.mxu0 0.0
  %930 = vmatmul.mubr.f32.gmra.mxu0 %v836
  %v931 = vpop.f32.mrf.mxu0
  %v932 = vadd.f32 0.0, %v931
  %v933 = vpop.f32.mrf.mxu0
  %934 = vmatprep.mubr.f32.mxu0 0.0
  %935 = vmatmul.mubr.f32.gmra.mxu0 %v839
  %v936 = vpop.f32.mrf.mxu0
  %v937 = vadd.f32 0.0, %v936
  %v938 = vpop.f32.mrf.mxu0
  %939 = vmatprep.mubr.f32.mxu0 0.0
  %940 = vmatmul.mubr.f32.gmra.mxu0 %v842
  %v941 = vpop.f32.mrf.mxu0
  %v942 = vadd.f32 0.0, %v941
  %v943 = vpop.f32.mrf.mxu0
  %944 = vmatprep.mubr.f32.mxu0 0.0
  %945 = vmatmul.mubr.f32.gmra.mxu0 %v845
  %v946 = vpop.f32.mrf.mxu0
  %v947 = vadd.f32 0.0, %v946
  %v948 = vpop.f32.mrf.mxu0
  %949 = vmatprep.mubr.f32.mxu0 0.0
  %950 = vmatmul.mubr.f32.gmra.mxu0 %v848
  %v951 = vpop.f32.mrf.mxu0
  %v952 = vadd.f32 0.0, %v951
  %v953 = vpop.f32.mrf.mxu0
  %954 = vdwg.mxu0
  %v955 = vsub.f32 %v482, %v917
  %v956 = vsub.f32 %v485, %v922
  %v957 = vsub.f32 %v490, %v927
  %v958 = vsub.f32 %v493, %v932
  %v959 = vsub.f32 %v498, %v937
  %v960 = vsub.f32 %v501, %v942
  %v961 = vsub.f32 %v506, %v947
  %v962 = vsub.f32 %v509, %v952
  %v963 = vmul.f32 %v955, %v955
  %v964 = vmul.f32 %v956, %v956
  %v965 = vmul.f32 %v957, %v957
  %v966 = vmul.f32 %v958, %v958
  %v967 = vmul.f32 %v959, %v959
  %v968 = vmul.f32 %v960, %v960
  %v969 = vmul.f32 %v961, %v961
  %v970 = vmul.f32 %v962, %v962
  %v971 = vsel %vm434, %v963, 0.0
  %972 = vadd.xlane.f32.xlu0 %v971
  %v973 = vpop.xlane.xlu0 %972
  %v974 = vsel %vm434, %v964, 0.0
  %975 = vadd.xlane.f32.xlu0 %v974
  %v976 = vpop.xlane.xlu0 %975
  %v977 = vsel %vm434, %v965, 0.0
  %978 = vadd.xlane.f32.xlu0 %v977
  %v979 = vpop.xlane.xlu0 %978
  %v980 = vsel %vm434, %v966, 0.0
  %981 = vadd.xlane.f32.xlu0 %v980
  %v982 = vpop.xlane.xlu0 %981
  %v983 = vsel %vm434, %v967, 0.0
  %984 = vadd.xlane.f32.xlu0 %v983
  %v985 = vpop.xlane.xlu0 %984
  %v986 = vsel %vm434, %v968, 0.0
  %987 = vadd.xlane.f32.xlu0 %v986
  %v988 = vpop.xlane.xlu0 %987
  %v989 = vsel %vm434, %v969, 0.0
  %990 = vadd.xlane.f32.xlu0 %v989
  %v991 = vpop.xlane.xlu0 %990
  %v992 = vsel %vm434, %v970, 0.0
  %993 = vadd.xlane.f32.xlu0 %v992
  %v994 = vpop.xlane.xlu0 %993
  %v995 = vadd.f32 %v973, 0.0
  %v996 = vadd.f32 %v976, 0.0
  %v997 = vadd.f32 %v979, 0.0
  %v998 = vadd.f32 %v982, 0.0
  %v999 = vadd.f32 %v985, 0.0
  %v1000 = vadd.f32 %v988, 0.0
  %v1001 = vadd.f32 %v991, 0.0
  %v1002 = vadd.f32 %v994, 0.0
  %v1003 = vadd.f32 %v917, 0.0
  %v1004 = vadd.f32 %v922, 0.0
  %v1005 = vadd.f32 %v927, 0.0
  %v1006 = vadd.f32 %v932, 0.0
  %v1007 = vadd.f32 %v937, 0.0
  %v1008 = vadd.f32 %v942, 0.0
  %v1009 = vadd.f32 %v947, 0.0
  %v1010 = vadd.f32 %v952, 0.0
  %s1011 = scalar_lea.vmem %s7, 64
  %v1012 = vld [vmem:[%s1011] sm:$0xff]
  %v1013 = vld [vmem:[%s1011 + $0x8] sm:$0xff]
  %v1014 = vld [vmem:[%s1011 + $0x10] sm:$0xff]
  %v1015 = vld [vmem:[%s1011 + $0x18] sm:$0xff]
  %v1016 = vld [vmem:[%s1011 + $0x20] sm:$0xff]
  %v1017 = vld [vmem:[%s1011 + $0x28] sm:$0xff]
  %v1018 = vld [vmem:[%s1011 + $0x30] sm:$0xff]
  %v1019 = vld [vmem:[%s1011 + $0x38] sm:$0xff]
  %v1020 = vpack.c.bf16 %v956, %v955
  %v1021 = vpack.c.bf16 %v958, %v957
  %v1022 = vpack.c.bf16 %v960, %v959
  %v1023 = vpack.c.bf16 %v962, %v961
  %v1024 = vpack.c.bf16 %v1013, %v1012
  %v1025 = vpack.c.bf16 %v1015, %v1014
  %v1026 = vpack.c.bf16 %v1017, %v1016
  %v1027 = vpack.c.bf16 %v1019, %v1018
  %v1029 = vsel %vm434, %v1020, 0
  %v1032 = vsel %vm434, %v1021, 0
  %v1035 = vsel %vm434, %v1022, 0
  %v1038 = vsel %vm434, %v1023, 0
  %v1041 = vsel %vm434, %v1024, 0
  %v1044 = vsel %vm434, %v1025, 0
  %v1047 = vsel %vm434, %v1026, 0
  %v1050 = vsel %vm434, %v1027, 0
  %1052 = vmatprep.subr.bf16.mxu0 0
  %1053 = vmatpush1.bf16.xpose.msra.mxu0 0
  %1054 = vmatprep.subr.bf16.mxu0 0
  %1055 = vmatpush1.bf16.xpose.msra.mxu0 0
  %1056 = vmatprep.subr.bf16.mxu0 0
  %1057 = vmatpush1.bf16.xpose.msra.mxu0 0
  %1058 = vmatprep.subr.bf16.mxu0 0
  %1059 = vmatpush1.bf16.xpose.msra.mxu0 0
  %1060 = vmatprep.subr.bf16.mxu0 0
  %1061 = vmatpush1.bf16.xpose.msra.mxu0 %v1050
  %1062 = vmatprep.subr.bf16.mxu0 0
  %1063 = vmatpush1.bf16.xpose.msra.mxu0 %v1047
  %1064 = vmatprep.subr.bf16.mxu0 0
  %1065 = vmatpush1.bf16.xpose.msra.mxu0 %v1044
  %1066 = vmatprep.subr.bf16.mxu0 0
  %1067 = vmatpush1.bf16.xpose.msra.mxu0 %v1041
  %1068 = vmatprep.subr.bf16.mxu0 0
  %1069 = vmatpush2.bf16.xpose.msra.mxu0 0
  %1070 = vmatprep.subr.bf16.mxu0 0
  %1071 = vmatpush2.bf16.xpose.msra.mxu0 0
  %1072 = vmatprep.subr.bf16.mxu0 0
  %1073 = vmatpush2.bf16.xpose.msra.mxu0 0
  %1074 = vmatprep.subr.bf16.mxu0 0
  %1075 = vmatpush2.bf16.xpose.msra.mxu0 0
  %1076 = vmatprep.subr.bf16.mxu0 0
  %1077 = vmatpush2.bf16.xpose.msra.mxu0 0
  %1078 = vmatprep.subr.bf16.mxu0 0
  %1079 = vmatpush2.bf16.xpose.msra.mxu0 0
  %1080 = vmatprep.subr.bf16.mxu0 0
  %1081 = vmatpush2.bf16.xpose.msra.mxu0 0
  %1082 = vmatprep.subr.bf16.mxu0 0
  %1083 = vmatpush2.bf16.xpose.msra.mxu0 0
  %1084 = vmatprep.mubr.bf16.mxu0 0
  %1085 = vmatmul.mubr.bf16.gmra.mxu0 %v1029
  %v1086 = vpop.f32.mrf.mxu0
  %v1087 = vadd.f32 0.0, %v1086
  %v1088 = vpop.f32.mrf.mxu0
  %v1089 = vpop.f32.mrf.mxu0
  %v1090 = vadd.f32 0.0, %v1089
  %v1091 = vpop.f32.mrf.mxu0
  %1092 = vmatprep.mubr.bf16.mxu0 0
  %1093 = vmatmul.mubr.bf16.gmra.mxu0 %v1032
  %v1094 = vpop.f32.mrf.mxu0
  %v1095 = vadd.f32 0.0, %v1094
  %v1096 = vpop.f32.mrf.mxu0
  %v1097 = vpop.f32.mrf.mxu0
  %v1098 = vadd.f32 0.0, %v1097
  %v1099 = vpop.f32.mrf.mxu0
  %1100 = vmatprep.mubr.bf16.mxu0 0
  %1101 = vmatmul.mubr.bf16.gmra.mxu0 %v1035
  %v1102 = vpop.f32.mrf.mxu0
  %v1103 = vadd.f32 0.0, %v1102
  %v1104 = vpop.f32.mrf.mxu0
  %v1105 = vpop.f32.mrf.mxu0
  %v1106 = vadd.f32 0.0, %v1105
  %v1107 = vpop.f32.mrf.mxu0
  %1108 = vmatprep.mubr.bf16.mxu0 0
  %1109 = vmatmul.mubr.bf16.gmra.mxu0 %v1038
  %v1110 = vpop.f32.mrf.mxu0
  %v1111 = vadd.f32 0.0, %v1110
  %v1112 = vpop.f32.mrf.mxu0
  %v1113 = vpop.f32.mrf.mxu0
  %v1114 = vadd.f32 0.0, %v1113
  %v1115 = vpop.f32.mrf.mxu0
  %1116 = vdwg.mxu0
  %s1117 = scalar_lea.vmem %s8, 1
  %v1118 = vld [vmem:[%s1117] sm:$0x1]
  %v1119 = vmul.f32 %v1087, 2.0
  %v1120 = vmul.f32 %v1090, 2.0
  %v1121 = vmul.f32 %v1095, 2.0
  %v1122 = vmul.f32 %v1098, 2.0
  %v1123 = vmul.f32 %v1103, 2.0
  %v1124 = vmul.f32 %v1106, 2.0
  %v1125 = vmul.f32 %v1111, 2.0
  %v1126 = vmul.f32 %v1114, 2.0
  %v1128 = vlaneseq
  %v1129 = vshrl.u32 %v1128, 7
  %v1130 = vsub.s32 0, %v1129
  %v1131 = vrot.slane %v1118, %v1130
  %v1133 = vsub.f32 %v1131, %v1119
  %v1134 = vsub.f32 %v1131, %v1120
  %v1135 = vsub.f32 %v1131, %v1121
  %v1136 = vsub.f32 %v1131, %v1122
  %v1137 = vsub.f32 %v1131, %v1123
  %v1138 = vsub.f32 %v1131, %v1124
  %v1139 = vsub.f32 %v1131, %v1125
  %v1140 = vsub.f32 %v1131, %v1126
  %v1141 = vsel %vm104, %v1133, inf
  %1142 = vmin.xlane.f32.xlu0 %v1141
  %v1143 = vpop.xlane.xlu0 %1142
  %v1144 = vsel %vm104, %v1134, inf
  %1145 = vmin.xlane.f32.xlu0 %v1144
  %v1146 = vpop.xlane.xlu0 %1145
  %v1147 = vsel %vm104, %v1135, inf
  %1148 = vmin.xlane.f32.xlu0 %v1147
  %v1149 = vpop.xlane.xlu0 %1148
  %v1150 = vsel %vm104, %v1136, inf
  %1151 = vmin.xlane.f32.xlu0 %v1150
  %v1152 = vpop.xlane.xlu0 %1151
  %v1153 = vsel %vm104, %v1137, inf
  %1154 = vmin.xlane.f32.xlu0 %v1153
  %v1155 = vpop.xlane.xlu0 %1154
  %v1156 = vsel %vm104, %v1138, inf
  %1157 = vmin.xlane.f32.xlu0 %v1156
  %v1158 = vpop.xlane.xlu0 %1157
  %v1159 = vsel %vm104, %v1139, inf
  %1160 = vmin.xlane.f32.xlu0 %v1159
  %v1161 = vpop.xlane.xlu0 %1160
  %v1162 = vsel %vm104, %v1140, inf
  %1163 = vmin.xlane.f32.xlu0 %v1162
  %v1164 = vpop.xlane.xlu0 %1163
  %vm1165 = vcmp.le.f32.partialorder %v1133, %v1143
  %vm1166 = vcmp.le.f32.partialorder %v1134, %v1146
  %vm1167 = vcmp.le.f32.partialorder %v1135, %v1149
  %vm1168 = vcmp.le.f32.partialorder %v1136, %v1152
  %vm1169 = vcmp.le.f32.partialorder %v1137, %v1155
  %vm1170 = vcmp.le.f32.partialorder %v1138, %v1158
  %vm1171 = vcmp.le.f32.partialorder %v1139, %v1161
  %vm1172 = vcmp.le.f32.partialorder %v1140, %v1164
  %v1173 = vsel %vm1165, %v513, 64
  %v1174 = vsel %vm1166, %v513, 64
  %v1175 = vsel %vm1167, %v513, 64
  %v1176 = vsel %vm1168, %v513, 64
  %v1177 = vsel %vm1169, %v513, 64
  %v1178 = vsel %vm1170, %v513, 64
  %v1179 = vsel %vm1171, %v513, 64
  %v1180 = vsel %vm1172, %v513, 64
  %v1181 = vsel %vm104, %v1173, 2147483647
  %v1182 = vand.u32 %v1181, 65535
  %v1183 = vshra.s32 %v1181, 16
  %v1184 = vcvt.s32.f32 %v1182
  %v1185 = vcvt.s32.f32 %v1183
  %1186 = vmin.xlane.f32.xlu0 %v1185
  %v1187 = vpop.xlane.xlu0 %1186
  %vm1188 = vcmp.eq.f32.partialorder %v1185, %v1187
  %v1189 = vsel %vm1188, %v1184, inf
  %1190 = vmin.xlane.f32.xlu0 %v1189
  %v1191 = vpop.xlane.xlu0 %1190
  %v1192 = vcvt.f32.s32 %v1191
  %v1193 = vcvt.f32.s32 %v1187
  %v1194 = vshll.u32 %v1193, 16
  %v1195 = vadd.s32 %v1194, %v1192
  %v1196 = vsel %vm104, %v1174, 2147483647
  %v1197 = vand.u32 %v1196, 65535
  %v1198 = vshra.s32 %v1196, 16
  %v1199 = vcvt.s32.f32 %v1197
  %v1200 = vcvt.s32.f32 %v1198
  %1201 = vmin.xlane.f32.xlu0 %v1200
  %v1202 = vpop.xlane.xlu0 %1201
  %vm1203 = vcmp.eq.f32.partialorder %v1200, %v1202
  %v1204 = vsel %vm1203, %v1199, inf
  %1205 = vmin.xlane.f32.xlu0 %v1204
  %v1206 = vpop.xlane.xlu0 %1205
  %v1207 = vcvt.f32.s32 %v1206
  %v1208 = vcvt.f32.s32 %v1202
  %v1209 = vshll.u32 %v1208, 16
  %v1210 = vadd.s32 %v1209, %v1207
  %v1211 = vsel %vm104, %v1175, 2147483647
  %v1212 = vand.u32 %v1211, 65535
  %v1213 = vshra.s32 %v1211, 16
  %v1214 = vcvt.s32.f32 %v1212
  %v1215 = vcvt.s32.f32 %v1213
  %1216 = vmin.xlane.f32.xlu0 %v1215
  %v1217 = vpop.xlane.xlu0 %1216
  %vm1218 = vcmp.eq.f32.partialorder %v1215, %v1217
  %v1219 = vsel %vm1218, %v1214, inf
  %1220 = vmin.xlane.f32.xlu0 %v1219
  %v1221 = vpop.xlane.xlu0 %1220
  %v1222 = vcvt.f32.s32 %v1221
  %v1223 = vcvt.f32.s32 %v1217
  %v1224 = vshll.u32 %v1223, 16
  %v1225 = vadd.s32 %v1224, %v1222
  %v1226 = vsel %vm104, %v1176, 2147483647
  %v1227 = vand.u32 %v1226, 65535
  %v1228 = vshra.s32 %v1226, 16
  %v1229 = vcvt.s32.f32 %v1227
  %v1230 = vcvt.s32.f32 %v1228
  %1231 = vmin.xlane.f32.xlu0 %v1230
  %v1232 = vpop.xlane.xlu0 %1231
  %vm1233 = vcmp.eq.f32.partialorder %v1230, %v1232
  %v1234 = vsel %vm1233, %v1229, inf
  %1235 = vmin.xlane.f32.xlu0 %v1234
  %v1236 = vpop.xlane.xlu0 %1235
  %v1237 = vcvt.f32.s32 %v1236
  %v1238 = vcvt.f32.s32 %v1232
  %v1239 = vshll.u32 %v1238, 16
  %v1240 = vadd.s32 %v1239, %v1237
  %v1241 = vsel %vm104, %v1177, 2147483647
  %v1242 = vand.u32 %v1241, 65535
  %v1243 = vshra.s32 %v1241, 16
  %v1244 = vcvt.s32.f32 %v1242
  %v1245 = vcvt.s32.f32 %v1243
  %1246 = vmin.xlane.f32.xlu0 %v1245
  %v1247 = vpop.xlane.xlu0 %1246
  %vm1248 = vcmp.eq.f32.partialorder %v1245, %v1247
  %v1249 = vsel %vm1248, %v1244, inf
  %1250 = vmin.xlane.f32.xlu0 %v1249
  %v1251 = vpop.xlane.xlu0 %1250
  %v1252 = vcvt.f32.s32 %v1251
  %v1253 = vcvt.f32.s32 %v1247
  %v1254 = vshll.u32 %v1253, 16
  %v1255 = vadd.s32 %v1254, %v1252
  %v1256 = vsel %vm104, %v1178, 2147483647
  %v1257 = vand.u32 %v1256, 65535
  %v1258 = vshra.s32 %v1256, 16
  %v1259 = vcvt.s32.f32 %v1257
  %v1260 = vcvt.s32.f32 %v1258
  %1261 = vmin.xlane.f32.xlu0 %v1260
  %v1262 = vpop.xlane.xlu0 %1261
  %vm1263 = vcmp.eq.f32.partialorder %v1260, %v1262
  %v1264 = vsel %vm1263, %v1259, inf
  %1265 = vmin.xlane.f32.xlu0 %v1264
  %v1266 = vpop.xlane.xlu0 %1265
  %v1267 = vcvt.f32.s32 %v1266
  %v1268 = vcvt.f32.s32 %v1262
  %v1269 = vshll.u32 %v1268, 16
  %v1270 = vadd.s32 %v1269, %v1267
  %v1271 = vsel %vm104, %v1179, 2147483647
  %v1272 = vand.u32 %v1271, 65535
  %v1273 = vshra.s32 %v1271, 16
  %v1274 = vcvt.s32.f32 %v1272
  %v1275 = vcvt.s32.f32 %v1273
  %1276 = vmin.xlane.f32.xlu0 %v1275
  %v1277 = vpop.xlane.xlu0 %1276
  %vm1278 = vcmp.eq.f32.partialorder %v1275, %v1277
  %v1279 = vsel %vm1278, %v1274, inf
  %1280 = vmin.xlane.f32.xlu0 %v1279
  %v1281 = vpop.xlane.xlu0 %1280
  %v1282 = vcvt.f32.s32 %v1281
  %v1283 = vcvt.f32.s32 %v1277
  %v1284 = vshll.u32 %v1283, 16
  %v1285 = vadd.s32 %v1284, %v1282
  %v1286 = vsel %vm104, %v1180, 2147483647
  %v1287 = vand.u32 %v1286, 65535
  %v1288 = vshra.s32 %v1286, 16
  %v1289 = vcvt.s32.f32 %v1287
  %v1290 = vcvt.s32.f32 %v1288
  %1291 = vmin.xlane.f32.xlu0 %v1290
  %v1292 = vpop.xlane.xlu0 %1291
  %vm1293 = vcmp.eq.f32.partialorder %v1290, %v1292
  %v1294 = vsel %vm1293, %v1289, inf
  %1295 = vmin.xlane.f32.xlu0 %v1294
  %v1296 = vpop.xlane.xlu0 %1295
  %v1297 = vcvt.f32.s32 %v1296
  %v1298 = vcvt.f32.s32 %v1292
  %v1299 = vshll.u32 %v1298, 16
  %v1300 = vadd.s32 %v1299, %v1297
  %vm1301 = vcmp.eq.s32.totalorder %v1195, %v513
  %vm1302 = vcmp.eq.s32.totalorder %v1210, %v513
  %vm1303 = vcmp.eq.s32.totalorder %v1225, %v513
  %vm1304 = vcmp.eq.s32.totalorder %v1240, %v513
  %vm1305 = vcmp.eq.s32.totalorder %v1255, %v513
  %vm1306 = vcmp.eq.s32.totalorder %v1270, %v513
  %vm1307 = vcmp.eq.s32.totalorder %v1285, %v513
  %vm1308 = vcmp.eq.s32.totalorder %v1300, %v513
  %v1309 = vsel %vm1301, 1, 0
  %v1310 = vsel %vm1302, 1, 0
  %v1311 = vsel %vm1303, 1, 0
  %v1312 = vsel %vm1304, 1, 0
  %v1313 = vsel %vm1305, 1, 0
  %v1314 = vsel %vm1306, 1, 0
  %v1315 = vsel %vm1307, 1, 0
  %v1316 = vsel %vm1308, 1, 0
  %v1317 = vcvt.s32.f32 %v1309
  %v1318 = vcvt.s32.f32 %v1310
  %v1319 = vcvt.s32.f32 %v1311
  %v1320 = vcvt.s32.f32 %v1312
  %v1321 = vcvt.s32.f32 %v1313
  %v1322 = vcvt.s32.f32 %v1314
  %v1323 = vcvt.s32.f32 %v1315
  %v1324 = vcvt.s32.f32 %v1316
  %v1326 = vsel %vm104, %v1317, 0
  %v1329 = vsel %vm104, %v1318, 0
  %v1332 = vsel %vm104, %v1319, 0
  %v1335 = vsel %vm104, %v1320, 0
  %v1338 = vsel %vm104, %v1321, 0
  %v1341 = vsel %vm104, %v1322, 0
  %v1344 = vsel %vm104, %v1323, 0
  %v1347 = vsel %vm104, %v1324, 0
  %1349 = vmatprep.subr.mxu0 0.0
  %1350 = vmatpush1.msra.mxu0 0.0
  %1351 = vmatprep.subr.mxu0 0.0
  %1352 = vmatpush1.msra.mxu0 0.0
  %1353 = vmatprep.subr.mxu0 0.0
  %1354 = vmatpush1.msra.mxu0 0.0
  %1355 = vmatprep.subr.mxu0 0.0
  %1356 = vmatpush1.msra.mxu0 0.0
  %1357 = vmatprep.subr.mxu0 0.0
  %1358 = vmatpush1.msra.mxu0 0.0
  %1359 = vmatprep.subr.mxu0 0.0
  %1360 = vmatpush1.msra.mxu0 0.0
  %1361 = vmatprep.subr.mxu0 0.0
  %1362 = vmatpush1.msra.mxu0 0.0
  %1363 = vmatprep.subr.mxu0 0.0
  %1364 = vmatpush1.msra.mxu0 0.0
  %1365 = vmatprep.subr.mxu0 0.0
  %1366 = vmatpush1.msra.mxu0 %v1019
  %1367 = vmatprep.subr.mxu0 0.0
  %1368 = vmatpush1.msra.mxu0 %v1018
  %1369 = vmatprep.subr.mxu0 0.0
  %1370 = vmatpush1.msra.mxu0 %v1017
  %1371 = vmatprep.subr.mxu0 0.0
  %1372 = vmatpush1.msra.mxu0 %v1016
  %1373 = vmatprep.subr.mxu0 0.0
  %1374 = vmatpush1.msra.mxu0 %v1015
  %1375 = vmatprep.subr.mxu0 0.0
  %1376 = vmatpush1.msra.mxu0 %v1014
  %1377 = vmatprep.subr.mxu0 0.0
  %1378 = vmatpush1.msra.mxu0 %v1013
  %1379 = vmatprep.subr.mxu0 0.0
  %1380 = vmatpush1.msra.mxu0 %v1012
  %1381 = vmatprep.subr.mxu0 0.0
  %1382 = vmatpush2.msra.mxu0 0.0
  %1383 = vmatprep.subr.mxu0 0.0
  %1384 = vmatpush2.msra.mxu0 0.0
  %1385 = vmatprep.subr.mxu0 0.0
  %1386 = vmatpush2.msra.mxu0 0.0
  %1387 = vmatprep.subr.mxu0 0.0
  %1388 = vmatpush2.msra.mxu0 0.0
  %1389 = vmatprep.subr.mxu0 0.0
  %1390 = vmatpush2.msra.mxu0 0.0
  %1391 = vmatprep.subr.mxu0 0.0
  %1392 = vmatpush2.msra.mxu0 0.0
  %1393 = vmatprep.subr.mxu0 0.0
  %1394 = vmatpush2.msra.mxu0 0.0
  %1395 = vmatprep.subr.mxu0 0.0
  %1396 = vmatpush2.msra.mxu0 0.0
  %1397 = vmatprep.subr.mxu0 0.0
  %1398 = vmatpush2.msra.mxu0 0.0
  %1399 = vmatprep.subr.mxu0 0.0
  %1400 = vmatpush2.msra.mxu0 0.0
  %1401 = vmatprep.subr.mxu0 0.0
  %1402 = vmatpush2.msra.mxu0 0.0
  %1403 = vmatprep.subr.mxu0 0.0
  %1404 = vmatpush2.msra.mxu0 0.0
  %1405 = vmatprep.subr.mxu0 0.0
  %1406 = vmatpush2.msra.mxu0 0.0
  %1407 = vmatprep.subr.mxu0 0.0
  %1408 = vmatpush2.msra.mxu0 0.0
  %1409 = vmatprep.subr.mxu0 0.0
  %1410 = vmatpush2.msra.mxu0 0.0
  %1411 = vmatprep.subr.mxu0 0.0
  %1412 = vmatpush2.msra.mxu0 0.0
  %1413 = vmatprep.mubr.f32.mxu0 0.0
  %1414 = vmatmul.mubr.f32.gmra.mxu0 %v1326
  %v1415 = vpop.f32.mrf.mxu0
  %v1416 = vadd.f32 0.0, %v1415
  %v1417 = vpop.f32.mrf.mxu0
  %1418 = vmatprep.mubr.f32.mxu0 0.0
  %1419 = vmatmul.mubr.f32.gmra.mxu0 %v1329
  %v1420 = vpop.f32.mrf.mxu0
  %v1421 = vadd.f32 0.0, %v1420
  %v1422 = vpop.f32.mrf.mxu0
  %1423 = vmatprep.mubr.f32.mxu0 0.0
  %1424 = vmatmul.mubr.f32.gmra.mxu0 %v1332
  %v1425 = vpop.f32.mrf.mxu0
  %v1426 = vadd.f32 0.0, %v1425
  %v1427 = vpop.f32.mrf.mxu0
  %1428 = vmatprep.mubr.f32.mxu0 0.0
  %1429 = vmatmul.mubr.f32.gmra.mxu0 %v1335
  %v1430 = vpop.f32.mrf.mxu0
  %v1431 = vadd.f32 0.0, %v1430
  %v1432 = vpop.f32.mrf.mxu0
  %1433 = vmatprep.mubr.f32.mxu0 0.0
  %1434 = vmatmul.mubr.f32.gmra.mxu0 %v1338
  %v1435 = vpop.f32.mrf.mxu0
  %v1436 = vadd.f32 0.0, %v1435
  %v1437 = vpop.f32.mrf.mxu0
  %1438 = vmatprep.mubr.f32.mxu0 0.0
  %1439 = vmatmul.mubr.f32.gmra.mxu0 %v1341
  %v1440 = vpop.f32.mrf.mxu0
  %v1441 = vadd.f32 0.0, %v1440
  %v1442 = vpop.f32.mrf.mxu0
  %1443 = vmatprep.mubr.f32.mxu0 0.0
  %1444 = vmatmul.mubr.f32.gmra.mxu0 %v1344
  %v1445 = vpop.f32.mrf.mxu0
  %v1446 = vadd.f32 0.0, %v1445
  %v1447 = vpop.f32.mrf.mxu0
  %1448 = vmatprep.mubr.f32.mxu0 0.0
  %1449 = vmatmul.mubr.f32.gmra.mxu0 %v1347
  %v1450 = vpop.f32.mrf.mxu0
  %v1451 = vadd.f32 0.0, %v1450
  %v1452 = vpop.f32.mrf.mxu0
  %1453 = vdwg.mxu0
  %v1454 = vsub.f32 %v955, %v1416
  %v1455 = vsub.f32 %v956, %v1421
  %v1456 = vsub.f32 %v957, %v1426
  %v1457 = vsub.f32 %v958, %v1431
  %v1458 = vsub.f32 %v959, %v1436
  %v1459 = vsub.f32 %v960, %v1441
  %v1460 = vsub.f32 %v961, %v1446
  %v1461 = vsub.f32 %v962, %v1451
  %v1462 = vmul.f32 %v1454, %v1454
  %v1463 = vmul.f32 %v1455, %v1455
  %v1464 = vmul.f32 %v1456, %v1456
  %v1465 = vmul.f32 %v1457, %v1457
  %v1466 = vmul.f32 %v1458, %v1458
  %v1467 = vmul.f32 %v1459, %v1459
  %v1468 = vmul.f32 %v1460, %v1460
  %v1469 = vmul.f32 %v1461, %v1461
  %v1470 = vsel %vm434, %v1462, 0.0
  %1471 = vadd.xlane.f32.xlu0 %v1470
  %v1472 = vpop.xlane.xlu0 %1471
  %v1473 = vsel %vm434, %v1463, 0.0
  %1474 = vadd.xlane.f32.xlu0 %v1473
  %v1475 = vpop.xlane.xlu0 %1474
  %v1476 = vsel %vm434, %v1464, 0.0
  %1477 = vadd.xlane.f32.xlu0 %v1476
  %v1478 = vpop.xlane.xlu0 %1477
  %v1479 = vsel %vm434, %v1465, 0.0
  %1480 = vadd.xlane.f32.xlu0 %v1479
  %v1481 = vpop.xlane.xlu0 %1480
  %v1482 = vsel %vm434, %v1466, 0.0
  %1483 = vadd.xlane.f32.xlu0 %v1482
  %v1484 = vpop.xlane.xlu0 %1483
  %v1485 = vsel %vm434, %v1467, 0.0
  %1486 = vadd.xlane.f32.xlu0 %v1485
  %v1487 = vpop.xlane.xlu0 %1486
  %v1488 = vsel %vm434, %v1468, 0.0
  %1489 = vadd.xlane.f32.xlu0 %v1488
  %v1490 = vpop.xlane.xlu0 %1489
  %v1491 = vsel %vm434, %v1469, 0.0
  %1492 = vadd.xlane.f32.xlu0 %v1491
  %v1493 = vpop.xlane.xlu0 %1492
  %v1494 = vadd.f32 %v995, %v1472
  %v1495 = vadd.f32 %v996, %v1475
  %v1496 = vadd.f32 %v997, %v1478
  %v1497 = vadd.f32 %v998, %v1481
  %v1498 = vadd.f32 %v999, %v1484
  %v1499 = vadd.f32 %v1000, %v1487
  %v1500 = vadd.f32 %v1001, %v1490
  %v1501 = vadd.f32 %v1002, %v1493
  %v1502 = vadd.f32 %v1003, %v1416
  %v1503 = vadd.f32 %v1004, %v1421
  %v1504 = vadd.f32 %v1005, %v1426
  %v1505 = vadd.f32 %v1006, %v1431
  %v1506 = vadd.f32 %v1007, %v1436
  %v1507 = vadd.f32 %v1008, %v1441
  %v1508 = vadd.f32 %v1009, %v1446
  %v1509 = vadd.f32 %v1010, %v1451
  %s1510 = scalar_lea.vmem %s7, 128
  %v1511 = vld [vmem:[%s1510] sm:$0xff]
  %v1512 = vld [vmem:[%s1510 + $0x8] sm:$0xff]
  %v1513 = vld [vmem:[%s1510 + $0x10] sm:$0xff]
  %v1514 = vld [vmem:[%s1510 + $0x18] sm:$0xff]
  %v1515 = vld [vmem:[%s1510 + $0x20] sm:$0xff]
  %v1516 = vld [vmem:[%s1510 + $0x28] sm:$0xff]
  %v1517 = vld [vmem:[%s1510 + $0x30] sm:$0xff]
  %v1518 = vld [vmem:[%s1510 + $0x38] sm:$0xff]
  %v1519 = vpack.c.bf16 %v1455, %v1454
  %v1520 = vpack.c.bf16 %v1457, %v1456
  %v1521 = vpack.c.bf16 %v1459, %v1458
  %v1522 = vpack.c.bf16 %v1461, %v1460
  %v1523 = vpack.c.bf16 %v1512, %v1511
  %v1524 = vpack.c.bf16 %v1514, %v1513
  %v1525 = vpack.c.bf16 %v1516, %v1515
  %v1526 = vpack.c.bf16 %v1518, %v1517
  %v1528 = vsel %vm434, %v1519, 0
  %v1531 = vsel %vm434, %v1520, 0
  %v1534 = vsel %vm434, %v1521, 0
  %v1537 = vsel %vm434, %v1522, 0
  %v1540 = vsel %vm434, %v1523, 0
  %v1543 = vsel %vm434, %v1524, 0
  %v1546 = vsel %vm434, %v1525, 0
  %v1549 = vsel %vm434, %v1526, 0
  %1551 = vmatprep.subr.bf16.mxu0 0
  %1552 = vmatpush1.bf16.xpose.msra.mxu0 0
  %1553 = vmatprep.subr.bf16.mxu0 0
  %1554 = vmatpush1.bf16.xpose.msra.mxu0 0
  %1555 = vmatprep.subr.bf16.mxu0 0
  %1556 = vmatpush1.bf16.xpose.msra.mxu0 0
  %1557 = vmatprep.subr.bf16.mxu0 0
  %1558 = vmatpush1.bf16.xpose.msra.mxu0 0
  %1559 = vmatprep.subr.bf16.mxu0 0
  %1560 = vmatpush1.bf16.xpose.msra.mxu0 %v1549
  %1561 = vmatprep.subr.bf16.mxu0 0
  %1562 = vmatpush1.bf16.xpose.msra.mxu0 %v1546
  %1563 = vmatprep.subr.bf16.mxu0 0
  %1564 = vmatpush1.bf16.xpose.msra.mxu0 %v1543
  %1565 = vmatprep.subr.bf16.mxu0 0
  %1566 = vmatpush1.bf16.xpose.msra.mxu0 %v1540
  %1567 = vmatprep.subr.bf16.mxu0 0
  %1568 = vmatpush2.bf16.xpose.msra.mxu0 0
  %1569 = vmatprep.subr.bf16.mxu0 0
  %1570 = vmatpush2.bf16.xpose.msra.mxu0 0
  %1571 = vmatprep.subr.bf16.mxu0 0
  %1572 = vmatpush2.bf16.xpose.msra.mxu0 0
  %1573 = vmatprep.subr.bf16.mxu0 0
  %1574 = vmatpush2.bf16.xpose.msra.mxu0 0
  %1575 = vmatprep.subr.bf16.mxu0 0
  %1576 = vmatpush2.bf16.xpose.msra.mxu0 0
  %1577 = vmatprep.subr.bf16.mxu0 0
  %1578 = vmatpush2.bf16.xpose.msra.mxu0 0
  %1579 = vmatprep.subr.bf16.mxu0 0
  %1580 = vmatpush2.bf16.xpose.msra.mxu0 0
  %1581 = vmatprep.subr.bf16.mxu0 0
  %1582 = vmatpush2.bf16.xpose.msra.mxu0 0
  %1583 = vmatprep.mubr.bf16.mxu0 0
  %1584 = vmatmul.mubr.bf16.gmra.mxu0 %v1528
  %v1585 = vpop.f32.mrf.mxu0
  %v1586 = vadd.f32 0.0, %v1585
  %v1587 = vpop.f32.mrf.mxu0
  %v1588 = vpop.f32.mrf.mxu0
  %v1589 = vadd.f32 0.0, %v1588
  %v1590 = vpop.f32.mrf.mxu0
  %1591 = vmatprep.mubr.bf16.mxu0 0
  %1592 = vmatmul.mubr.bf16.gmra.mxu0 %v1531
  %v1593 = vpop.f32.mrf.mxu0
  %v1594 = vadd.f32 0.0, %v1593
  %v1595 = vpop.f32.mrf.mxu0
  %v1596 = vpop.f32.mrf.mxu0
  %v1597 = vadd.f32 0.0, %v1596
  %v1598 = vpop.f32.mrf.mxu0
  %1599 = vmatprep.mubr.bf16.mxu0 0
  %1600 = vmatmul.mubr.bf16.gmra.mxu0 %v1534
  %v1601 = vpop.f32.mrf.mxu0
  %v1602 = vadd.f32 0.0, %v1601
  %v1603 = vpop.f32.mrf.mxu0
  %v1604 = vpop.f32.mrf.mxu0
  %v1605 = vadd.f32 0.0, %v1604
  %v1606 = vpop.f32.mrf.mxu0
  %1607 = vmatprep.mubr.bf16.mxu0 0
  %1608 = vmatmul.mubr.bf16.gmra.mxu0 %v1537
  %v1609 = vpop.f32.mrf.mxu0
  %v1610 = vadd.f32 0.0, %v1609
  %v1611 = vpop.f32.mrf.mxu0
  %v1612 = vpop.f32.mrf.mxu0
  %v1613 = vadd.f32 0.0, %v1612
  %v1614 = vpop.f32.mrf.mxu0
  %1615 = vdwg.mxu0
  %s1616 = scalar_lea.vmem %s8, 2
  %v1617 = vld [vmem:[%s1616] sm:$0x1]
  %v1618 = vmul.f32 %v1586, 2.0
  %v1619 = vmul.f32 %v1589, 2.0
  %v1620 = vmul.f32 %v1594, 2.0
  %v1621 = vmul.f32 %v1597, 2.0
  %v1622 = vmul.f32 %v1602, 2.0
  %v1623 = vmul.f32 %v1605, 2.0
  %v1624 = vmul.f32 %v1610, 2.0
  %v1625 = vmul.f32 %v1613, 2.0
  %v1627 = vlaneseq
  %v1628 = vshrl.u32 %v1627, 7
  %v1629 = vsub.s32 0, %v1628
  %v1630 = vrot.slane %v1617, %v1629
  %v1632 = vsub.f32 %v1630, %v1618
  %v1633 = vsub.f32 %v1630, %v1619
  %v1634 = vsub.f32 %v1630, %v1620
  %v1635 = vsub.f32 %v1630, %v1621
  %v1636 = vsub.f32 %v1630, %v1622
  %v1637 = vsub.f32 %v1630, %v1623
  %v1638 = vsub.f32 %v1630, %v1624
  %v1639 = vsub.f32 %v1630, %v1625
  %v1640 = vsel %vm104, %v1632, inf
  %1641 = vmin.xlane.f32.xlu0 %v1640
  %v1642 = vpop.xlane.xlu0 %1641
  %v1643 = vsel %vm104, %v1633, inf
  %1644 = vmin.xlane.f32.xlu0 %v1643
  %v1645 = vpop.xlane.xlu0 %1644
  %v1646 = vsel %vm104, %v1634, inf
  %1647 = vmin.xlane.f32.xlu0 %v1646
  %v1648 = vpop.xlane.xlu0 %1647
  %v1649 = vsel %vm104, %v1635, inf
  %1650 = vmin.xlane.f32.xlu0 %v1649
  %v1651 = vpop.xlane.xlu0 %1650
  %v1652 = vsel %vm104, %v1636, inf
  %1653 = vmin.xlane.f32.xlu0 %v1652
  %v1654 = vpop.xlane.xlu0 %1653
  %v1655 = vsel %vm104, %v1637, inf
  %1656 = vmin.xlane.f32.xlu0 %v1655
  %v1657 = vpop.xlane.xlu0 %1656
  %v1658 = vsel %vm104, %v1638, inf
  %1659 = vmin.xlane.f32.xlu0 %v1658
  %v1660 = vpop.xlane.xlu0 %1659
  %v1661 = vsel %vm104, %v1639, inf
  %1662 = vmin.xlane.f32.xlu0 %v1661
  %v1663 = vpop.xlane.xlu0 %1662
  %vm1664 = vcmp.le.f32.partialorder %v1632, %v1642
  %vm1665 = vcmp.le.f32.partialorder %v1633, %v1645
  %vm1666 = vcmp.le.f32.partialorder %v1634, %v1648
  %vm1667 = vcmp.le.f32.partialorder %v1635, %v1651
  %vm1668 = vcmp.le.f32.partialorder %v1636, %v1654
  %vm1669 = vcmp.le.f32.partialorder %v1637, %v1657
  %vm1670 = vcmp.le.f32.partialorder %v1638, %v1660
  %vm1671 = vcmp.le.f32.partialorder %v1639, %v1663
  %v1672 = vsel %vm1664, %v513, 64
  %v1673 = vsel %vm1665, %v513, 64
  %v1674 = vsel %vm1666, %v513, 64
  %v1675 = vsel %vm1667, %v513, 64
  %v1676 = vsel %vm1668, %v513, 64
  %v1677 = vsel %vm1669, %v513, 64
  %v1678 = vsel %vm1670, %v513, 64
  %v1679 = vsel %vm1671, %v513, 64
  %v1680 = vsel %vm104, %v1672, 2147483647
  %v1681 = vand.u32 %v1680, 65535
  %v1682 = vshra.s32 %v1680, 16
  %v1683 = vcvt.s32.f32 %v1681
  %v1684 = vcvt.s32.f32 %v1682
  %1685 = vmin.xlane.f32.xlu0 %v1684
  %v1686 = vpop.xlane.xlu0 %1685
  %vm1687 = vcmp.eq.f32.partialorder %v1684, %v1686
  %v1688 = vsel %vm1687, %v1683, inf
  %1689 = vmin.xlane.f32.xlu0 %v1688
  %v1690 = vpop.xlane.xlu0 %1689
  %v1691 = vcvt.f32.s32 %v1690
  %v1692 = vcvt.f32.s32 %v1686
  %v1693 = vshll.u32 %v1692, 16
  %v1694 = vadd.s32 %v1693, %v1691
  %v1695 = vsel %vm104, %v1673, 2147483647
  %v1696 = vand.u32 %v1695, 65535
  %v1697 = vshra.s32 %v1695, 16
  %v1698 = vcvt.s32.f32 %v1696
  %v1699 = vcvt.s32.f32 %v1697
  %1700 = vmin.xlane.f32.xlu0 %v1699
  %v1701 = vpop.xlane.xlu0 %1700
  %vm1702 = vcmp.eq.f32.partialorder %v1699, %v1701
  %v1703 = vsel %vm1702, %v1698, inf
  %1704 = vmin.xlane.f32.xlu0 %v1703
  %v1705 = vpop.xlane.xlu0 %1704
  %v1706 = vcvt.f32.s32 %v1705
  %v1707 = vcvt.f32.s32 %v1701
  %v1708 = vshll.u32 %v1707, 16
  %v1709 = vadd.s32 %v1708, %v1706
  %v1710 = vsel %vm104, %v1674, 2147483647
  %v1711 = vand.u32 %v1710, 65535
  %v1712 = vshra.s32 %v1710, 16
  %v1713 = vcvt.s32.f32 %v1711
  %v1714 = vcvt.s32.f32 %v1712
  %1715 = vmin.xlane.f32.xlu0 %v1714
  %v1716 = vpop.xlane.xlu0 %1715
  %vm1717 = vcmp.eq.f32.partialorder %v1714, %v1716
  %v1718 = vsel %vm1717, %v1713, inf
  %1719 = vmin.xlane.f32.xlu0 %v1718
  %v1720 = vpop.xlane.xlu0 %1719
  %v1721 = vcvt.f32.s32 %v1720
  %v1722 = vcvt.f32.s32 %v1716
  %v1723 = vshll.u32 %v1722, 16
  %v1724 = vadd.s32 %v1723, %v1721
  %v1725 = vsel %vm104, %v1675, 2147483647
  %v1726 = vand.u32 %v1725, 65535
  %v1727 = vshra.s32 %v1725, 16
  %v1728 = vcvt.s32.f32 %v1726
  %v1729 = vcvt.s32.f32 %v1727
  %1730 = vmin.xlane.f32.xlu0 %v1729
  %v1731 = vpop.xlane.xlu0 %1730
  %vm1732 = vcmp.eq.f32.partialorder %v1729, %v1731
  %v1733 = vsel %vm1732, %v1728, inf
  %1734 = vmin.xlane.f32.xlu0 %v1733
  %v1735 = vpop.xlane.xlu0 %1734
  %v1736 = vcvt.f32.s32 %v1735
  %v1737 = vcvt.f32.s32 %v1731
  %v1738 = vshll.u32 %v1737, 16
  %v1739 = vadd.s32 %v1738, %v1736
  %v1740 = vsel %vm104, %v1676, 2147483647
  %v1741 = vand.u32 %v1740, 65535
  %v1742 = vshra.s32 %v1740, 16
  %v1743 = vcvt.s32.f32 %v1741
  %v1744 = vcvt.s32.f32 %v1742
  %1745 = vmin.xlane.f32.xlu0 %v1744
  %v1746 = vpop.xlane.xlu0 %1745
  %vm1747 = vcmp.eq.f32.partialorder %v1744, %v1746
  %v1748 = vsel %vm1747, %v1743, inf
  %1749 = vmin.xlane.f32.xlu0 %v1748
  %v1750 = vpop.xlane.xlu0 %1749
  %v1751 = vcvt.f32.s32 %v1750
  %v1752 = vcvt.f32.s32 %v1746
  %v1753 = vshll.u32 %v1752, 16
  %v1754 = vadd.s32 %v1753, %v1751
  %v1755 = vsel %vm104, %v1677, 2147483647
  %v1756 = vand.u32 %v1755, 65535
  %v1757 = vshra.s32 %v1755, 16
  %v1758 = vcvt.s32.f32 %v1756
  %v1759 = vcvt.s32.f32 %v1757
  %1760 = vmin.xlane.f32.xlu0 %v1759
  %v1761 = vpop.xlane.xlu0 %1760
  %vm1762 = vcmp.eq.f32.partialorder %v1759, %v1761
  %v1763 = vsel %vm1762, %v1758, inf
  %1764 = vmin.xlane.f32.xlu0 %v1763
  %v1765 = vpop.xlane.xlu0 %1764
  %v1766 = vcvt.f32.s32 %v1765
  %v1767 = vcvt.f32.s32 %v1761
  %v1768 = vshll.u32 %v1767, 16
  %v1769 = vadd.s32 %v1768, %v1766
  %v1770 = vsel %vm104, %v1678, 2147483647
  %v1771 = vand.u32 %v1770, 65535
  %v1772 = vshra.s32 %v1770, 16
  %v1773 = vcvt.s32.f32 %v1771
  %v1774 = vcvt.s32.f32 %v1772
  %1775 = vmin.xlane.f32.xlu0 %v1774
  %v1776 = vpop.xlane.xlu0 %1775
  %vm1777 = vcmp.eq.f32.partialorder %v1774, %v1776
  %v1778 = vsel %vm1777, %v1773, inf
  %1779 = vmin.xlane.f32.xlu0 %v1778
  %v1780 = vpop.xlane.xlu0 %1779
  %v1781 = vcvt.f32.s32 %v1780
  %v1782 = vcvt.f32.s32 %v1776
  %v1783 = vshll.u32 %v1782, 16
  %v1784 = vadd.s32 %v1783, %v1781
  %v1785 = vsel %vm104, %v1679, 2147483647
  %v1786 = vand.u32 %v1785, 65535
  %v1787 = vshra.s32 %v1785, 16
  %v1788 = vcvt.s32.f32 %v1786
  %v1789 = vcvt.s32.f32 %v1787
  %1790 = vmin.xlane.f32.xlu0 %v1789
  %v1791 = vpop.xlane.xlu0 %1790
  %vm1792 = vcmp.eq.f32.partialorder %v1789, %v1791
  %v1793 = vsel %vm1792, %v1788, inf
  %1794 = vmin.xlane.f32.xlu0 %v1793
  %v1795 = vpop.xlane.xlu0 %1794
  %v1796 = vcvt.f32.s32 %v1795
  %v1797 = vcvt.f32.s32 %v1791
  %v1798 = vshll.u32 %v1797, 16
  %v1799 = vadd.s32 %v1798, %v1796
  %vm1800 = vcmp.eq.s32.totalorder %v1694, %v513
  %vm1801 = vcmp.eq.s32.totalorder %v1709, %v513
  %vm1802 = vcmp.eq.s32.totalorder %v1724, %v513
  %vm1803 = vcmp.eq.s32.totalorder %v1739, %v513
  %vm1804 = vcmp.eq.s32.totalorder %v1754, %v513
  %vm1805 = vcmp.eq.s32.totalorder %v1769, %v513
  %vm1806 = vcmp.eq.s32.totalorder %v1784, %v513
  %vm1807 = vcmp.eq.s32.totalorder %v1799, %v513
  %v1808 = vsel %vm1800, 1, 0
  %v1809 = vsel %vm1801, 1, 0
  %v1810 = vsel %vm1802, 1, 0
  %v1811 = vsel %vm1803, 1, 0
  %v1812 = vsel %vm1804, 1, 0
  %v1813 = vsel %vm1805, 1, 0
  %v1814 = vsel %vm1806, 1, 0
  %v1815 = vsel %vm1807, 1, 0
  %v1816 = vcvt.s32.f32 %v1808
  %v1817 = vcvt.s32.f32 %v1809
  %v1818 = vcvt.s32.f32 %v1810
  %v1819 = vcvt.s32.f32 %v1811
  %v1820 = vcvt.s32.f32 %v1812
  %v1821 = vcvt.s32.f32 %v1813
  %v1822 = vcvt.s32.f32 %v1814
  %v1823 = vcvt.s32.f32 %v1815
  %v1825 = vsel %vm104, %v1816, 0
  %v1828 = vsel %vm104, %v1817, 0
  %v1831 = vsel %vm104, %v1818, 0
  %v1834 = vsel %vm104, %v1819, 0
  %v1837 = vsel %vm104, %v1820, 0
  %v1840 = vsel %vm104, %v1821, 0
  %v1843 = vsel %vm104, %v1822, 0
  %v1846 = vsel %vm104, %v1823, 0
  %1848 = vmatprep.subr.mxu0 0.0
  %1849 = vmatpush1.msra.mxu0 0.0
  %1850 = vmatprep.subr.mxu0 0.0
  %1851 = vmatpush1.msra.mxu0 0.0
  %1852 = vmatprep.subr.mxu0 0.0
  %1853 = vmatpush1.msra.mxu0 0.0
  %1854 = vmatprep.subr.mxu0 0.0
  %1855 = vmatpush1.msra.mxu0 0.0
  %1856 = vmatprep.subr.mxu0 0.0
  %1857 = vmatpush1.msra.mxu0 0.0
  %1858 = vmatprep.subr.mxu0 0.0
  %1859 = vmatpush1.msra.mxu0 0.0
  %1860 = vmatprep.subr.mxu0 0.0
  %1861 = vmatpush1.msra.mxu0 0.0
  %1862 = vmatprep.subr.mxu0 0.0
  %1863 = vmatpush1.msra.mxu0 0.0
  %1864 = vmatprep.subr.mxu0 0.0
  %1865 = vmatpush1.msra.mxu0 %v1518
  %1866 = vmatprep.subr.mxu0 0.0
  %1867 = vmatpush1.msra.mxu0 %v1517
  %1868 = vmatprep.subr.mxu0 0.0
  %1869 = vmatpush1.msra.mxu0 %v1516
  %1870 = vmatprep.subr.mxu0 0.0
  %1871 = vmatpush1.msra.mxu0 %v1515
  %1872 = vmatprep.subr.mxu0 0.0
  %1873 = vmatpush1.msra.mxu0 %v1514
  %1874 = vmatprep.subr.mxu0 0.0
  %1875 = vmatpush1.msra.mxu0 %v1513
  %1876 = vmatprep.subr.mxu0 0.0
  %1877 = vmatpush1.msra.mxu0 %v1512
  %1878 = vmatprep.subr.mxu0 0.0
  %1879 = vmatpush1.msra.mxu0 %v1511
  %1880 = vmatprep.subr.mxu0 0.0
  %1881 = vmatpush2.msra.mxu0 0.0
  %1882 = vmatprep.subr.mxu0 0.0
  %1883 = vmatpush2.msra.mxu0 0.0
  %1884 = vmatprep.subr.mxu0 0.0
  %1885 = vmatpush2.msra.mxu0 0.0
  %1886 = vmatprep.subr.mxu0 0.0
  %1887 = vmatpush2.msra.mxu0 0.0
  %1888 = vmatprep.subr.mxu0 0.0
  %1889 = vmatpush2.msra.mxu0 0.0
  %1890 = vmatprep.subr.mxu0 0.0
  %1891 = vmatpush2.msra.mxu0 0.0
  %1892 = vmatprep.subr.mxu0 0.0
  %1893 = vmatpush2.msra.mxu0 0.0
  %1894 = vmatprep.subr.mxu0 0.0
  %1895 = vmatpush2.msra.mxu0 0.0
  %1896 = vmatprep.subr.mxu0 0.0
  %1897 = vmatpush2.msra.mxu0 0.0
  %1898 = vmatprep.subr.mxu0 0.0
  %1899 = vmatpush2.msra.mxu0 0.0
  %1900 = vmatprep.subr.mxu0 0.0
  %1901 = vmatpush2.msra.mxu0 0.0
  %1902 = vmatprep.subr.mxu0 0.0
  %1903 = vmatpush2.msra.mxu0 0.0
  %1904 = vmatprep.subr.mxu0 0.0
  %1905 = vmatpush2.msra.mxu0 0.0
  %1906 = vmatprep.subr.mxu0 0.0
  %1907 = vmatpush2.msra.mxu0 0.0
  %1908 = vmatprep.subr.mxu0 0.0
  %1909 = vmatpush2.msra.mxu0 0.0
  %1910 = vmatprep.subr.mxu0 0.0
  %1911 = vmatpush2.msra.mxu0 0.0
  %1912 = vmatprep.mubr.f32.mxu0 0.0
  %1913 = vmatmul.mubr.f32.gmra.mxu0 %v1825
  %v1914 = vpop.f32.mrf.mxu0
  %v1915 = vadd.f32 0.0, %v1914
  %v1916 = vpop.f32.mrf.mxu0
  %1917 = vmatprep.mubr.f32.mxu0 0.0
  %1918 = vmatmul.mubr.f32.gmra.mxu0 %v1828
  %v1919 = vpop.f32.mrf.mxu0
  %v1920 = vadd.f32 0.0, %v1919
  %v1921 = vpop.f32.mrf.mxu0
  %1922 = vmatprep.mubr.f32.mxu0 0.0
  %1923 = vmatmul.mubr.f32.gmra.mxu0 %v1831
  %v1924 = vpop.f32.mrf.mxu0
  %v1925 = vadd.f32 0.0, %v1924
  %v1926 = vpop.f32.mrf.mxu0
  %1927 = vmatprep.mubr.f32.mxu0 0.0
  %1928 = vmatmul.mubr.f32.gmra.mxu0 %v1834
  %v1929 = vpop.f32.mrf.mxu0
  %v1930 = vadd.f32 0.0, %v1929
  %v1931 = vpop.f32.mrf.mxu0
  %1932 = vmatprep.mubr.f32.mxu0 0.0
  %1933 = vmatmul.mubr.f32.gmra.mxu0 %v1837
  %v1934 = vpop.f32.mrf.mxu0
  %v1935 = vadd.f32 0.0, %v1934
  %v1936 = vpop.f32.mrf.mxu0
  %1937 = vmatprep.mubr.f32.mxu0 0.0
  %1938 = vmatmul.mubr.f32.gmra.mxu0 %v1840
  %v1939 = vpop.f32.mrf.mxu0
  %v1940 = vadd.f32 0.0, %v1939
  %v1941 = vpop.f32.mrf.mxu0
  %1942 = vmatprep.mubr.f32.mxu0 0.0
  %1943 = vmatmul.mubr.f32.gmra.mxu0 %v1843
  %v1944 = vpop.f32.mrf.mxu0
  %v1945 = vadd.f32 0.0, %v1944
  %v1946 = vpop.f32.mrf.mxu0
  %1947 = vmatprep.mubr.f32.mxu0 0.0
  %1948 = vmatmul.mubr.f32.gmra.mxu0 %v1846
  %v1949 = vpop.f32.mrf.mxu0
  %v1950 = vadd.f32 0.0, %v1949
  %v1951 = vpop.f32.mrf.mxu0
  %1952 = vdwg.mxu0
  %v1953 = vsub.f32 %v1454, %v1915
  %v1954 = vsub.f32 %v1455, %v1920
  %v1955 = vsub.f32 %v1456, %v1925
  %v1956 = vsub.f32 %v1457, %v1930
  %v1957 = vsub.f32 %v1458, %v1935
  %v1958 = vsub.f32 %v1459, %v1940
  %v1959 = vsub.f32 %v1460, %v1945
  %v1960 = vsub.f32 %v1461, %v1950
  %v1961 = vmul.f32 %v1953, %v1953
  %v1962 = vmul.f32 %v1954, %v1954
  %v1963 = vmul.f32 %v1955, %v1955
  %v1964 = vmul.f32 %v1956, %v1956
  %v1965 = vmul.f32 %v1957, %v1957
  %v1966 = vmul.f32 %v1958, %v1958
  %v1967 = vmul.f32 %v1959, %v1959
  %v1968 = vmul.f32 %v1960, %v1960
  %v1969 = vsel %vm434, %v1961, 0.0
  %1970 = vadd.xlane.f32.xlu0 %v1969
  %v1971 = vpop.xlane.xlu0 %1970
  %v1972 = vsel %vm434, %v1962, 0.0
  %1973 = vadd.xlane.f32.xlu0 %v1972
  %v1974 = vpop.xlane.xlu0 %1973
  %v1975 = vsel %vm434, %v1963, 0.0
  %1976 = vadd.xlane.f32.xlu0 %v1975
  %v1977 = vpop.xlane.xlu0 %1976
  %v1978 = vsel %vm434, %v1964, 0.0
  %1979 = vadd.xlane.f32.xlu0 %v1978
  %v1980 = vpop.xlane.xlu0 %1979
  %v1981 = vsel %vm434, %v1965, 0.0
  %1982 = vadd.xlane.f32.xlu0 %v1981
  %v1983 = vpop.xlane.xlu0 %1982
  %v1984 = vsel %vm434, %v1966, 0.0
  %1985 = vadd.xlane.f32.xlu0 %v1984
  %v1986 = vpop.xlane.xlu0 %1985
  %v1987 = vsel %vm434, %v1967, 0.0
  %1988 = vadd.xlane.f32.xlu0 %v1987
  %v1989 = vpop.xlane.xlu0 %1988
  %v1990 = vsel %vm434, %v1968, 0.0
  %1991 = vadd.xlane.f32.xlu0 %v1990
  %v1992 = vpop.xlane.xlu0 %1991
  %v1993 = vadd.f32 %v1494, %v1971
  %v1994 = vadd.f32 %v1495, %v1974
  %v1995 = vadd.f32 %v1496, %v1977
  %v1996 = vadd.f32 %v1497, %v1980
  %v1997 = vadd.f32 %v1498, %v1983
  %v1998 = vadd.f32 %v1499, %v1986
  %v1999 = vadd.f32 %v1500, %v1989
  %v2000 = vadd.f32 %v1501, %v1992
  %v2001 = vadd.f32 %v1502, %v1915
  %v2002 = vadd.f32 %v1503, %v1920
  %v2003 = vadd.f32 %v1504, %v1925
  %v2004 = vadd.f32 %v1505, %v1930
  %v2005 = vadd.f32 %v1506, %v1935
  %v2006 = vadd.f32 %v1507, %v1940
  %v2007 = vadd.f32 %v1508, %v1945
  %v2008 = vadd.f32 %v1509, %v1950
  %vm2009 = vcmask 7168
  %v2010 = vsel %vm2009, %v696, %v1195
  %v2011 = vsel %vm2009, %v711, %v1210
  %v2012 = vsel %vm2009, %v726, %v1225
  %v2013 = vsel %vm2009, %v741, %v1240
  %v2014 = vsel %vm2009, %v756, %v1255
  %v2015 = vsel %vm2009, %v771, %v1270
  %v2016 = vsel %vm2009, %v786, %v1285
  %v2017 = vsel %vm2009, %v801, %v1300
  %vm2018 = vcmask 15360
  %v2019 = vsel %vm2018, %v2010, %v1694
  %v2020 = vsel %vm2018, %v2011, %v1709
  %v2021 = vsel %vm2018, %v2012, %v1724
  %v2022 = vsel %vm2018, %v2013, %v1739
  %v2023 = vsel %vm2018, %v2014, %v1754
  %v2024 = vsel %vm2018, %v2015, %v1769
  %v2025 = vsel %vm2018, %v2016, %v1784
  %v2026 = vsel %vm2018, %v2017, %v1799
  %vm2027 = vcmask 23552
  %2028 = vst.msk [vmem:[%s16] sm:$0xff] %vm2027, %v2019
  %2029 = vst.msk [vmem:[%s16 + $0x8] sm:$0xff] %vm2027, %v2020
  %2030 = vst.msk [vmem:[%s16 + $0x10] sm:$0xff] %vm2027, %v2021
  %2031 = vst.msk [vmem:[%s16 + $0x18] sm:$0xff] %vm2027, %v2022
  %2032 = vst.msk [vmem:[%s16 + $0x20] sm:$0xff] %vm2027, %v2023
  %2033 = vst.msk [vmem:[%s16 + $0x28] sm:$0xff] %vm2027, %v2024
  %2034 = vst.msk [vmem:[%s16 + $0x30] sm:$0xff] %vm2027, %v2025
  %2035 = vst.msk [vmem:[%s16 + $0x38] sm:$0xff] %vm2027, %v2026
  %v2036 = vpack.c.bf16 %v2002, %v2001
  %v2037 = vpack.c.bf16 %v2004, %v2003
  %v2038 = vpack.c.bf16 %v2006, %v2005
  %v2039 = vpack.c.bf16 %v2008, %v2007
  %v2040 = vld [vmem:[%s9] sm:$0xf]
  %v2041 = vld [vmem:[%s9 + $0x4] sm:$0xf]
  %v2042 = vld [vmem:[%s9 + $0x8] sm:$0xf]
  %v2043 = vld [vmem:[%s9 + $0xc] sm:$0xf]
  %v2044 = vld [vmem:[%s10] sm:$0x1]
  %v2046 = vlaneseq
  %v2047 = vshrl.u32 %v2046, 7
  %v2048 = vsub.s32 0, %v2047
  %v2049 = vrot.slane %v2044, %v2048
  %v2055 = vunpack.c.l.b16 %v2040
  %v2056 = vunpack.c.l.b16 %v2041
  %v2057 = vunpack.c.l.b16 %v2042
  %v2058 = vunpack.c.l.b16 %v2043
  %v2059 = vpack.c.b16 %v2056, %v2055
  %v2060 = vpack.c.b16 %v2058, %v2057
  %v2064 = vsel %vm434, %v2036, 0
  %v2067 = vsel %vm434, %v2037, 0
  %v2070 = vsel %vm434, %v2038, 0
  %v2073 = vsel %vm434, %v2039, 0
  %2075 = vmatprep.subr.bf16.mxu0 0
  %2076 = vmatpush1.bf16.msra.mxu0 0
  %2077 = vmatprep.subr.bf16.mxu0 0
  %2078 = vmatpush1.bf16.msra.mxu0 0
  %2079 = vmatprep.subr.bf16.mxu0 0
  %2080 = vmatpush1.bf16.msra.mxu0 0
  %2081 = vmatprep.subr.bf16.mxu0 0
  %2082 = vmatpush1.bf16.msra.mxu0 0
  %2083 = vmatprep.subr.bf16.mxu0 0
  %2084 = vmatpush1.bf16.msra.mxu0 0
  %2085 = vmatprep.subr.bf16.mxu0 0
  %2086 = vmatpush1.bf16.msra.mxu0 0
  %2087 = vmatprep.subr.bf16.mxu0 0
  %2088 = vmatpush1.bf16.msra.mxu0 %v2060
  %2089 = vmatprep.subr.bf16.mxu0 0
  %2090 = vmatpush1.bf16.msra.mxu0 %v2059
  %2091 = vmatprep.subr.bf16.mxu0 0
  %2092 = vmatpush2.bf16.msra.mxu0 0
  %2093 = vmatprep.subr.bf16.mxu0 0
  %2094 = vmatpush2.bf16.msra.mxu0 0
  %2095 = vmatprep.subr.bf16.mxu0 0
  %2096 = vmatpush2.bf16.msra.mxu0 0
  %2097 = vmatprep.subr.bf16.mxu0 0
  %2098 = vmatpush2.bf16.msra.mxu0 0
  %2099 = vmatprep.subr.bf16.mxu0 0
  %2100 = vmatpush2.bf16.msra.mxu0 0
  %2101 = vmatprep.subr.bf16.mxu0 0
  %2102 = vmatpush2.bf16.msra.mxu0 0
  %2103 = vmatprep.subr.bf16.mxu0 0
  %2104 = vmatpush2.bf16.msra.mxu0 0
  %2105 = vmatprep.subr.bf16.mxu0 0
  %2106 = vmatpush2.bf16.msra.mxu0 0
  %2107 = vmatprep.mubr.bf16.mxu0 0
  %2108 = vmatmul.mubr.bf16.gmra.mxu0 %v2064
  %v2109 = vpop.f32.mrf.mxu0
  %v2110 = vadd.f32 %v2049, %v2109
  %v2111 = vpop.f32.mrf.mxu0
  %v2112 = vpop.f32.mrf.mxu0
  %v2113 = vadd.f32 %v2049, %v2112
  %v2114 = vpop.f32.mrf.mxu0
  %2115 = vmatprep.mubr.bf16.mxu0 0
  %2116 = vmatmul.mubr.bf16.gmra.mxu0 %v2067
  %v2117 = vpop.f32.mrf.mxu0
  %v2118 = vadd.f32 %v2049, %v2117
  %v2119 = vpop.f32.mrf.mxu0
  %v2120 = vpop.f32.mrf.mxu0
  %v2121 = vadd.f32 %v2049, %v2120
  %v2122 = vpop.f32.mrf.mxu0
  %2123 = vmatprep.mubr.bf16.mxu0 0
  %2124 = vmatmul.mubr.bf16.gmra.mxu0 %v2070
  %v2125 = vpop.f32.mrf.mxu0
  %v2126 = vadd.f32 %v2049, %v2125
  %v2127 = vpop.f32.mrf.mxu0
  %v2128 = vpop.f32.mrf.mxu0
  %v2129 = vadd.f32 %v2049, %v2128
  %v2130 = vpop.f32.mrf.mxu0
  %2131 = vmatprep.mubr.bf16.mxu0 0
  %2132 = vmatmul.mubr.bf16.gmra.mxu0 %v2073
  %v2133 = vpop.f32.mrf.mxu0
  %v2134 = vadd.f32 %v2049, %v2133
  %v2135 = vpop.f32.mrf.mxu0
  %v2136 = vpop.f32.mrf.mxu0
  %v2137 = vadd.f32 %v2049, %v2136
  %v2138 = vpop.f32.mrf.mxu0
  %2139 = vdwg.mxu0
  %v2140 = vxor.u32 %v2110, 2147483648
  %v2141 = vxor.u32 %v2113, 2147483648
  %v2142 = vxor.u32 %v2118, 2147483648
  %v2143 = vxor.u32 %v2121, 2147483648
  %v2144 = vxor.u32 %v2126, 2147483648
  %v2145 = vxor.u32 %v2129, 2147483648
  %v2146 = vxor.u32 %v2134, 2147483648
  %v2147 = vxor.u32 %v2137, 2147483648
  %v2148 = vmul.f32 %v2140, 1.442695
  %v2149 = vpow.pop %v2148
  %v2150 = vmul.f32 %v2141, 1.442695
  %v2151 = vpow.pop %v2150
  %v2152 = vmul.f32 %v2142, 1.442695
  %v2153 = vpow.pop %v2152
  %v2154 = vmul.f32 %v2143, 1.442695
  %v2155 = vpow.pop %v2154
  %v2156 = vmul.f32 %v2144, 1.442695
  %v2157 = vpow.pop %v2156
  %v2158 = vmul.f32 %v2145, 1.442695
  %v2159 = vpow.pop %v2158
  %v2160 = vmul.f32 %v2146, 1.442695
  %v2161 = vpow.pop %v2160
  %v2162 = vmul.f32 %v2147, 1.442695
  %v2163 = vpow.pop %v2162
  %v2164 = vadd.f32 %v2149, 1.0
  %v2165 = vadd.f32 %v2151, 1.0
  %v2166 = vadd.f32 %v2153, 1.0
  %v2167 = vadd.f32 %v2155, 1.0
  %v2168 = vadd.f32 %v2157, 1.0
  %v2169 = vadd.f32 %v2159, 1.0
  %v2170 = vadd.f32 %v2161, 1.0
  %v2171 = vadd.f32 %v2163, 1.0
  %v2172 = vrcp.pop %v2164
  %v2173 = vmul.f32 1.0, %v2172
  %v2174 = vrcp.pop %v2165
  %v2175 = vmul.f32 1.0, %v2174
  %v2176 = vrcp.pop %v2166
  %v2177 = vmul.f32 1.0, %v2176
  %v2178 = vrcp.pop %v2167
  %v2179 = vmul.f32 1.0, %v2178
  %v2180 = vrcp.pop %v2168
  %v2181 = vmul.f32 1.0, %v2180
  %v2182 = vrcp.pop %v2169
  %v2183 = vmul.f32 1.0, %v2182
  %v2184 = vrcp.pop %v2170
  %v2185 = vmul.f32 1.0, %v2184
  %v2186 = vrcp.pop %v2171
  %v2187 = vmul.f32 1.0, %v2186
  %v2188 = vmul.f32 %v2110, %v2173
  %v2189 = vmul.f32 %v2113, %v2175
  %v2190 = vmul.f32 %v2118, %v2177
  %v2191 = vmul.f32 %v2121, %v2179
  %v2192 = vmul.f32 %v2126, %v2181
  %v2193 = vmul.f32 %v2129, %v2183
  %v2194 = vmul.f32 %v2134, %v2185
  %v2195 = vmul.f32 %v2137, %v2187
  %v2196 = vpack.c.bf16 %v2189, %v2188
  %v2197 = vpack.c.bf16 %v2191, %v2190
  %v2198 = vpack.c.bf16 %v2193, %v2192
  %v2199 = vpack.c.bf16 %v2195, %v2194
  %v2200 = vld [vmem:[%s11] sm:$0xf]
  %v2201 = vld [vmem:[%s11 + $0x4] sm:$0xf]
  %v2202 = vld [vmem:[%s11 + $0x8] sm:$0xf]
  %v2203 = vld [vmem:[%s11 + $0xc] sm:$0xf]
  %v2204 = vld [vmem:[%s11 + $0x10] sm:$0xf]
  %v2205 = vld [vmem:[%s11 + $0x14] sm:$0xf]
  %v2206 = vld [vmem:[%s12] sm:$0x1]
  %v2208 = vlaneseq
  %v2209 = vshrl.u32 %v2208, 7
  %v2210 = vsub.s32 0, %v2209
  %v2211 = vrot.slane %v2206, %v2210
  %v2219 = vunpack.c.l.b16 %v2200
  %v2220 = vunpack.c.l.b16 %v2201
  %v2221 = vunpack.c.l.b16 %v2202
  %v2222 = vunpack.c.l.b16 %v2203
  %v2223 = vunpack.c.l.b16 %v2204
  %v2224 = vunpack.c.l.b16 %v2205
  %v2225 = vpack.c.b16 %v2220, %v2219
  %v2226 = vpack.c.b16 %v2222, %v2221
  %v2227 = vpack.c.b16 %v2224, %v2223
  %v2232 = vsel %vm273, %v2196, 0
  %v2235 = vsel %vm273, %v2197, 0
  %v2238 = vsel %vm273, %v2198, 0
  %v2241 = vsel %vm273, %v2199, 0
  %2243 = vmatprep.subr.bf16.mxu0 0
  %2244 = vmatpush1.bf16.msra.mxu0 0
  %2245 = vmatprep.subr.bf16.mxu0 0
  %2246 = vmatpush1.bf16.msra.mxu0 0
  %2247 = vmatprep.subr.bf16.mxu0 0
  %2248 = vmatpush1.bf16.msra.mxu0 0
  %2249 = vmatprep.subr.bf16.mxu0 0
  %2250 = vmatpush1.bf16.msra.mxu0 0
  %2251 = vmatprep.subr.bf16.mxu0 0
  %2252 = vmatpush1.bf16.msra.mxu0 0
  %2253 = vmatprep.subr.bf16.mxu0 0
  %2254 = vmatpush1.bf16.msra.mxu0 %v2227
  %2255 = vmatprep.subr.bf16.mxu0 0
  %2256 = vmatpush1.bf16.msra.mxu0 %v2226
  %2257 = vmatprep.subr.bf16.mxu0 0
  %2258 = vmatpush1.bf16.msra.mxu0 %v2225
  %2259 = vmatprep.subr.bf16.mxu0 0
  %2260 = vmatpush2.bf16.msra.mxu0 0
  %2261 = vmatprep.subr.bf16.mxu0 0
  %2262 = vmatpush2.bf16.msra.mxu0 0
  %2263 = vmatprep.subr.bf16.mxu0 0
  %2264 = vmatpush2.bf16.msra.mxu0 0
  %2265 = vmatprep.subr.bf16.mxu0 0
  %2266 = vmatpush2.bf16.msra.mxu0 0
  %2267 = vmatprep.subr.bf16.mxu0 0
  %2268 = vmatpush2.bf16.msra.mxu0 0
  %2269 = vmatprep.subr.bf16.mxu0 0
  %2270 = vmatpush2.bf16.msra.mxu0 0
  %2271 = vmatprep.subr.bf16.mxu0 0
  %2272 = vmatpush2.bf16.msra.mxu0 0
  %2273 = vmatprep.subr.bf16.mxu0 0
  %2274 = vmatpush2.bf16.msra.mxu0 0
  %2275 = vmatprep.mubr.bf16.mxu0 0
  %2276 = vmatmul.mubr.bf16.gmra.mxu0 %v2232
  %v2277 = vpop.f32.mrf.mxu0
  %v2278 = vadd.f32 %v2211, %v2277
  %v2279 = vpop.f32.mrf.mxu0
  %v2280 = vpop.f32.mrf.mxu0
  %v2281 = vadd.f32 %v2211, %v2280
  %v2282 = vpop.f32.mrf.mxu0
  %2283 = vmatprep.mubr.bf16.mxu0 0
  %2284 = vmatmul.mubr.bf16.gmra.mxu0 %v2235
  %v2285 = vpop.f32.mrf.mxu0
  %v2286 = vadd.f32 %v2211, %v2285
  %v2287 = vpop.f32.mrf.mxu0
  %v2288 = vpop.f32.mrf.mxu0
  %v2289 = vadd.f32 %v2211, %v2288
  %v2290 = vpop.f32.mrf.mxu0
  %2291 = vmatprep.mubr.bf16.mxu0 0
  %2292 = vmatmul.mubr.bf16.gmra.mxu0 %v2238
  %v2293 = vpop.f32.mrf.mxu0
  %v2294 = vadd.f32 %v2211, %v2293
  %v2295 = vpop.f32.mrf.mxu0
  %v2296 = vpop.f32.mrf.mxu0
  %v2297 = vadd.f32 %v2211, %v2296
  %v2298 = vpop.f32.mrf.mxu0
  %2299 = vmatprep.mubr.bf16.mxu0 0
  %2300 = vmatmul.mubr.bf16.gmra.mxu0 %v2241
  %v2301 = vpop.f32.mrf.mxu0
  %v2302 = vadd.f32 %v2211, %v2301
  %v2303 = vpop.f32.mrf.mxu0
  %v2304 = vpop.f32.mrf.mxu0
  %v2305 = vadd.f32 %v2211, %v2304
  %v2306 = vpop.f32.mrf.mxu0
  %2307 = vdwg.mxu0
  %v2308 = vxor.u32 %v2278, 2147483648
  %v2309 = vxor.u32 %v2281, 2147483648
  %v2310 = vxor.u32 %v2286, 2147483648
  %v2311 = vxor.u32 %v2289, 2147483648
  %v2312 = vxor.u32 %v2294, 2147483648
  %v2313 = vxor.u32 %v2297, 2147483648
  %v2314 = vxor.u32 %v2302, 2147483648
  %v2315 = vxor.u32 %v2305, 2147483648
  %v2316 = vmul.f32 %v2308, 1.442695
  %v2317 = vpow.pop %v2316
  %v2318 = vmul.f32 %v2309, 1.442695
  %v2319 = vpow.pop %v2318
  %v2320 = vmul.f32 %v2310, 1.442695
  %v2321 = vpow.pop %v2320
  %v2322 = vmul.f32 %v2311, 1.442695
  %v2323 = vpow.pop %v2322
  %v2324 = vmul.f32 %v2312, 1.442695
  %v2325 = vpow.pop %v2324
  %v2326 = vmul.f32 %v2313, 1.442695
  %v2327 = vpow.pop %v2326
  %v2328 = vmul.f32 %v2314, 1.442695
  %v2329 = vpow.pop %v2328
  %v2330 = vmul.f32 %v2315, 1.442695
  %v2331 = vpow.pop %v2330
  %v2332 = vadd.f32 %v2317, 1.0
  %v2333 = vadd.f32 %v2319, 1.0
  %v2334 = vadd.f32 %v2321, 1.0
  %v2335 = vadd.f32 %v2323, 1.0
  %v2336 = vadd.f32 %v2325, 1.0
  %v2337 = vadd.f32 %v2327, 1.0
  %v2338 = vadd.f32 %v2329, 1.0
  %v2339 = vadd.f32 %v2331, 1.0
  %v2340 = vrcp.pop %v2332
  %v2341 = vmul.f32 1.0, %v2340
  %v2342 = vrcp.pop %v2333
  %v2343 = vmul.f32 1.0, %v2342
  %v2344 = vrcp.pop %v2334
  %v2345 = vmul.f32 1.0, %v2344
  %v2346 = vrcp.pop %v2335
  %v2347 = vmul.f32 1.0, %v2346
  %v2348 = vrcp.pop %v2336
  %v2349 = vmul.f32 1.0, %v2348
  %v2350 = vrcp.pop %v2337
  %v2351 = vmul.f32 1.0, %v2350
  %v2352 = vrcp.pop %v2338
  %v2353 = vmul.f32 1.0, %v2352
  %v2354 = vrcp.pop %v2339
  %v2355 = vmul.f32 1.0, %v2354
  %v2356 = vmul.f32 %v2278, %v2341
  %v2357 = vmul.f32 %v2281, %v2343
  %v2358 = vmul.f32 %v2286, %v2345
  %v2359 = vmul.f32 %v2289, %v2347
  %v2360 = vmul.f32 %v2294, %v2349
  %v2361 = vmul.f32 %v2297, %v2351
  %v2362 = vmul.f32 %v2302, %v2353
  %v2363 = vmul.f32 %v2305, %v2355
  %v2364 = vpack.c.bf16 %v2357, %v2356
  %v2365 = vpack.c.bf16 %v2359, %v2358
  %v2366 = vpack.c.bf16 %v2361, %v2360
  %v2367 = vpack.c.bf16 %v2363, %v2362
  %v2368 = vld [vmem:[%s13] sm:$0xf]
  %v2369 = vld [vmem:[%s13 + $0x4] sm:$0xf]
  %v2370 = vld [vmem:[%s13 + $0x8] sm:$0xf]
  %v2371 = vld [vmem:[%s13 + $0xc] sm:$0xf]
  %v2372 = vld [vmem:[%s14] sm:$0x1]
  %v2374 = vlaneseq
  %v2375 = vshrl.u32 %v2374, 7
  %v2376 = vsub.s32 0, %v2375
  %v2377 = vrot.slane %v2372, %v2376
  %v2383 = vunpack.c.l.b16 %v2368
  %v2384 = vunpack.c.l.b16 %v2369
  %v2385 = vunpack.c.l.b16 %v2370
  %v2386 = vunpack.c.l.b16 %v2371
  %v2387 = vpack.c.b16 %v2384, %v2383
  %v2388 = vpack.c.b16 %v2386, %v2385
  %v2392 = vsel %vm434, %v2364, 0
  %v2395 = vsel %vm434, %v2365, 0
  %v2398 = vsel %vm434, %v2366, 0
  %v2401 = vsel %vm434, %v2367, 0
  %2403 = vmatprep.subr.bf16.mxu0 0
  %2404 = vmatpush1.bf16.msra.mxu0 0
  %2405 = vmatprep.subr.bf16.mxu0 0
  %2406 = vmatpush1.bf16.msra.mxu0 0
  %2407 = vmatprep.subr.bf16.mxu0 0
  %2408 = vmatpush1.bf16.msra.mxu0 0
  %2409 = vmatprep.subr.bf16.mxu0 0
  %2410 = vmatpush1.bf16.msra.mxu0 0
  %2411 = vmatprep.subr.bf16.mxu0 0
  %2412 = vmatpush1.bf16.msra.mxu0 0
  %2413 = vmatprep.subr.bf16.mxu0 0
  %2414 = vmatpush1.bf16.msra.mxu0 0
  %2415 = vmatprep.subr.bf16.mxu0 0
  %2416 = vmatpush1.bf16.msra.mxu0 %v2388
  %2417 = vmatprep.subr.bf16.mxu0 0
  %2418 = vmatpush1.bf16.msra.mxu0 %v2387
  %2419 = vmatprep.subr.bf16.mxu0 0
  %2420 = vmatpush2.bf16.msra.mxu0 0
  %2421 = vmatprep.subr.bf16.mxu0 0
  %2422 = vmatpush2.bf16.msra.mxu0 0
  %2423 = vmatprep.subr.bf16.mxu0 0
  %2424 = vmatpush2.bf16.msra.mxu0 0
  %2425 = vmatprep.subr.bf16.mxu0 0
  %2426 = vmatpush2.bf16.msra.mxu0 0
  %2427 = vmatprep.subr.bf16.mxu0 0
  %2428 = vmatpush2.bf16.msra.mxu0 0
  %2429 = vmatprep.subr.bf16.mxu0 0
  %2430 = vmatpush2.bf16.msra.mxu0 0
  %2431 = vmatprep.subr.bf16.mxu0 0
  %2432 = vmatpush2.bf16.msra.mxu0 0
  %2433 = vmatprep.subr.bf16.mxu0 0
  %2434 = vmatpush2.bf16.msra.mxu0 0
  %2435 = vmatprep.mubr.bf16.mxu0 0
  %2436 = vmatmul.mubr.bf16.gmra.mxu0 %v2392
  %v2437 = vpop.f32.mrf.mxu0
  %v2438 = vadd.f32 %v2377, %v2437
  %v2439 = vpop.f32.mrf.mxu0
  %v2440 = vpop.f32.mrf.mxu0
  %v2441 = vadd.f32 %v2377, %v2440
  %v2442 = vpop.f32.mrf.mxu0
  %2443 = vmatprep.mubr.bf16.mxu0 0
  %2444 = vmatmul.mubr.bf16.gmra.mxu0 %v2395
  %v2445 = vpop.f32.mrf.mxu0
  %v2446 = vadd.f32 %v2377, %v2445
  %v2447 = vpop.f32.mrf.mxu0
  %v2448 = vpop.f32.mrf.mxu0
  %v2449 = vadd.f32 %v2377, %v2448
  %v2450 = vpop.f32.mrf.mxu0
  %2451 = vmatprep.mubr.bf16.mxu0 0
  %2452 = vmatmul.mubr.bf16.gmra.mxu0 %v2398
  %v2453 = vpop.f32.mrf.mxu0
  %v2454 = vadd.f32 %v2377, %v2453
  %v2455 = vpop.f32.mrf.mxu0
  %v2456 = vpop.f32.mrf.mxu0
  %v2457 = vadd.f32 %v2377, %v2456
  %v2458 = vpop.f32.mrf.mxu0
  %2459 = vmatprep.mubr.bf16.mxu0 0
  %2460 = vmatmul.mubr.bf16.gmra.mxu0 %v2401
  %v2461 = vpop.f32.mrf.mxu0
  %v2462 = vadd.f32 %v2377, %v2461
  %v2463 = vpop.f32.mrf.mxu0
  %v2464 = vpop.f32.mrf.mxu0
  %v2465 = vadd.f32 %v2377, %v2464
  %v2466 = vpop.f32.mrf.mxu0
  %2467 = vdwg.mxu0
  %v2468 = vsub.f32 %v2438, %v53
  %v2469 = vsub.f32 %v2441, %v54
  %v2470 = vsub.f32 %v2446, %v55
  %v2471 = vsub.f32 %v2449, %v56
  %v2472 = vsub.f32 %v2454, %v57
  %v2473 = vsub.f32 %v2457, %v58
  %v2474 = vsub.f32 %v2462, %v59
  %v2475 = vsub.f32 %v2465, %v60
  %v2476 = vmul.f32 %v2468, %v2468
  %v2477 = vmul.f32 %v2469, %v2469
  %v2478 = vmul.f32 %v2470, %v2470
  %v2479 = vmul.f32 %v2471, %v2471
  %v2480 = vmul.f32 %v2472, %v2472
  %v2481 = vmul.f32 %v2473, %v2473
  %v2482 = vmul.f32 %v2474, %v2474
  %v2483 = vmul.f32 %v2475, %v2475
  %v2484 = vsel %vm104, %v2476, 0.0
  %2485 = vadd.xlane.f32.xlu0 %v2484
  %v2486 = vpop.xlane.xlu0 %2485
  %v2487 = vsel %vm104, %v2477, 0.0
  %2488 = vadd.xlane.f32.xlu0 %v2487
  %v2489 = vpop.xlane.xlu0 %2488
  %v2490 = vsel %vm104, %v2478, 0.0
  %2491 = vadd.xlane.f32.xlu0 %v2490
  %v2492 = vpop.xlane.xlu0 %2491
  %v2493 = vsel %vm104, %v2479, 0.0
  %2494 = vadd.xlane.f32.xlu0 %v2493
  %v2495 = vpop.xlane.xlu0 %2494
  %v2496 = vsel %vm104, %v2480, 0.0
  %2497 = vadd.xlane.f32.xlu0 %v2496
  %v2498 = vpop.xlane.xlu0 %2497
  %v2499 = vsel %vm104, %v2481, 0.0
  %2500 = vadd.xlane.f32.xlu0 %v2499
  %v2501 = vpop.xlane.xlu0 %2500
  %v2502 = vsel %vm104, %v2482, 0.0
  %2503 = vadd.xlane.f32.xlu0 %v2502
  %v2504 = vpop.xlane.xlu0 %2503
  %v2505 = vsel %vm104, %v2483, 0.0
  %2506 = vadd.xlane.f32.xlu0 %v2505
  %v2507 = vpop.xlane.xlu0 %2506
  %v2508 = vmul.f32 %v1993, 1.25
  %v2509 = vmul.f32 %v1994, 1.25
  %v2510 = vmul.f32 %v1995, 1.25
  %v2511 = vmul.f32 %v1996, 1.25
  %v2512 = vmul.f32 %v1997, 1.25
  %v2513 = vmul.f32 %v1998, 1.25
  %v2514 = vmul.f32 %v1999, 1.25
  %v2515 = vmul.f32 %v2000, 1.25
  %v2516 = vadd.f32 %v2486, %v2508
  %v2517 = vadd.f32 %v2489, %v2509
  %v2518 = vadd.f32 %v2492, %v2510
  %v2519 = vadd.f32 %v2495, %v2511
  %v2520 = vadd.f32 %v2498, %v2512
  %v2521 = vadd.f32 %v2501, %v2513
  %v2522 = vadd.f32 %v2504, %v2514
  %v2523 = vadd.f32 %v2507, %v2515
  %2524 = vst.msk [vmem:[%s15] sm:$0xff] %vm2009, %v2516
  %2525 = vst.msk [vmem:[%s15 + $0x8] sm:$0xff] %vm2009, %v2517
  %2526 = vst.msk [vmem:[%s15 + $0x10] sm:$0xff] %vm2009, %v2518
  %2527 = vst.msk [vmem:[%s15 + $0x18] sm:$0xff] %vm2009, %v2519
  %2528 = vst.msk [vmem:[%s15 + $0x20] sm:$0xff] %vm2009, %v2520
  %2529 = vst.msk [vmem:[%s15 + $0x28] sm:$0xff] %vm2009, %v2521
  %2530 = vst.msk [vmem:[%s15 + $0x30] sm:$0xff] %vm2009, %v2522
  %2531 = vst.msk [vmem:[%s15 + $0x38] sm:$0xff] %vm2009, %v2523
  // Predicated region
  $region62: #{tpu_custom_call.1} parent=0 // pred_check
    _
  $region63: #{tpu_custom_call.1} parent=0 // pred_check_branch
    %2533 = sbr.rel (0) target = $region65
  $region64: #{tpu_custom_call.1} parent=0 // pred_region
    _
  $region65: #{tpu_custom_call.1} parent=0 // pred_fallthru
    _
  // Predicated region
  $region66: #{tpu_custom_call.1} parent=0 // pred_check
    _
  $region67: #{tpu_custom_call.1} parent=0 // pred_check_branch
    %2535 = sbr.rel (0) target = $region69
  $region68: #{tpu_custom_call.1} parent=0 // pred_region
    _
  $region69: #{tpu_custom_call.1} parent=0 // pred_fallthru
    _
  // Predicated region
  $region70: #{tpu_custom_call.1} parent=0 // pred_check
    _
  $region71: #{tpu_custom_call.1} parent=0 // pred_check_branch
    %2537 = sbr.rel (0) target = $region73
  $region72: #{tpu_custom_call.1} parent=0 // pred_region
    _
  $region73: #{tpu_custom_call.1} parent=0 // pred_fallthru
    _
  // Predicated region
  $region74: #{tpu_custom_call.1} parent=0 // pred_check
    _
  $region75: #{tpu_custom_call.1} parent=0 // pred_check_branch
    %2539 = sbr.rel (0) target = $region77
  $region76: #{tpu_custom_call.1} parent=0 // pred_region
    _
  $region77: #{tpu_custom_call.1} parent=0 // pred_fallthru
    _

</llo_original>
